<compile_context>
chip_gen: v7x
topology: tpu7x:2x2x1
jax: 0.10.0
libtpu: 0.0.40
codegen_flags: <defaults>
</compile_context>

<pallas_src>
import numpy as np
import jax
import jax.numpy as jnp
from jax.experimental import pallas as pl
from jax.experimental.pallas import tpu as pltpu

LANE = 128  # TPU lane width; all matmul output dims padded to a multiple of this.


def _round_up(n, m):
    return ((n + m - 1) // m) * m


def _pad_axis_to(a, axis, size):
    pad = size - a.shape[axis]
    if pad <= 0:
        return a
    widths = [(0, 0)] * a.ndim
    widths[axis] = (0, pad)
    return jnp.pad(a, widths)


# ----------------------------------------------------------------------------
# Pallas kernels
# ----------------------------------------------------------------------------
def _conv_relu_pool_kernel(col_ref, w_ref, b_ref, p_ref, o_ref):
    """One image per grid step: (im2col rows)@W + b -> ReLU -> (pool matrix)@act."""
    col = col_ref[0].astype(jnp.bfloat16)                         # (OH*OW, K)
    acc = jnp.dot(col, w_ref[...], preferred_element_type=jnp.float32)
    acc = jnp.maximum(acc + b_ref[...], 0.0)                      # (OH*OW, 128)
    pooled = jnp.dot(p_ref[...], acc, preferred_element_type=jnp.float32)
    o_ref[0] = pooled.astype(o_ref.dtype)                         # (PH*PW, 128)


def _fc_head_kernel(x_ref, w1_ref, b1_ref, w2_ref, b2_ref, w3_ref, b3_ref, o_ref):
    """Fused 3-layer MLP: relu(x@w1+b1) -> relu(.@w2+b2) -> .@w3+b3."""
    h = jnp.dot(x_ref[...].astype(jnp.bfloat16), w1_ref[...],
                preferred_element_type=jnp.float32) + b1_ref[...]
    h = jnp.maximum(h, 0.0)
    h = jnp.dot(h.astype(jnp.bfloat16), w2_ref[...],
                preferred_element_type=jnp.float32) + b2_ref[...]
    h = jnp.maximum(h, 0.0)
    o = jnp.dot(h.astype(jnp.bfloat16), w3_ref[...],
                preferred_element_type=jnp.float32) + b3_ref[...]
    o_ref[...] = o.astype(o_ref.dtype)


# ----------------------------------------------------------------------------
# Wrappers
# ----------------------------------------------------------------------------
def _pool_matrix(oh, ow):
    """(PH*PW, OH*OW) matrix implementing AvgPool2d(2,2) as a matmul."""
    ph, pw = oh // 2, ow // 2
    m = np.zeros((ph * pw, oh * ow), np.float32)
    for y in range(ph):
        for x in range(pw):
            r = y * pw + x
            for dy in range(2):
                for dx in range(2):
                    m[r, (2 * y + dy) * ow + (2 * x + dx)] = 0.25
    return jnp.asarray(m)


def _im2col_nhwc(x, kh, kw):
    """x: (B, H, W, C) -> (B, OH*OW, KH*KW*C); column order = (i, j, c).

    Cheap XLA glue at these sizes (activations are a few hundred KB).
    # TODO(synk): for very large batch, move im2col into the kernel (DMA the raw
    # NHWC tile and build taps in VMEM) to avoid the KH*KW-fold HBM expansion.
    """
    B, H, W, C = x.shape
    oh, ow = H - kh + 1, W - kw + 1
    taps = [x[:, i:i + oh, j:j + ow, :] for i in range(kh) for j in range(kw)]
    col = jnp.concatenate(taps, axis=-1)                 # (B, OH, OW, KH*KW*C)
    return col.reshape(B, oh * ow, kh * kw * C), oh, ow


def conv_relu_pool(col, w, b, pmat, ph, pw):
    """col:(B,OHW,K), w:(K,128) bf16, b:(1,128) f32, pmat:(PHW,OHW) f32 -> (B,PHW,128)."""
    B, ohw, K = col.shape
    Np = w.shape[1]
    phw = ph * pw
    return pl.pallas_call(
        _conv_relu_pool_kernel,
        out_shape=jax.ShapeDtypeStruct((B, phw, Np), jnp.float32),
        grid_spec=pltpu.PrefetchScalarGridSpec(
            num_scalar_prefetch=0,
            grid=(B,),
            in_specs=[
                pl.BlockSpec((1, ohw, K), lambda bi: (bi, 0, 0)),
                pl.BlockSpec((K, Np), lambda bi: (0, 0)),
                pl.BlockSpec((1, Np), lambda bi: (0, 0)),
                pl.BlockSpec((phw, ohw), lambda bi: (0, 0)),
            ],
            out_specs=pl.BlockSpec((1, phw, Np), lambda bi: (bi, 0, 0)),
        ),
        compiler_params=pltpu.CompilerParams(dimension_semantics=("parallel",)),
    )(col, w, b, pmat)


def fc_head(x, w1, b1, w2, b2, w3, b3, *, block_m=256):
    """x:(M,K) -> (M, N3), all weights padded to 128 lanes and resident in VMEM."""
    M, K = x.shape
    tm = M if M <= block_m else block_m
    N1, N2, N3 = w1.shape[1], w2.shape[1], w3.shape[1]
    return pl.pallas_call(
        _fc_head_kernel,
        out_shape=jax.ShapeDtypeStruct((M, N3), jnp.float32),
        grid_spec=pltpu.PrefetchScalarGridSpec(
            num_scalar_prefetch=0,
            grid=(pl.cdiv(M, tm),),
            in_specs=[
                pl.BlockSpec((tm, K), lambda i: (i, 0)),
                pl.BlockSpec((K, N1), lambda i: (0, 0)),
                pl.BlockSpec((1, N1), lambda i: (0, 0)),
                pl.BlockSpec((N1, N2), lambda i: (0, 0)),
                pl.BlockSpec((1, N2), lambda i: (0, 0)),
                pl.BlockSpec((N2, N3), lambda i: (0, 0)),
                pl.BlockSpec((1, N3), lambda i: (0, 0)),
            ],
            out_specs=pl.BlockSpec((tm, N3), lambda i: (i, 0)),
        ),
        compiler_params=pltpu.CompilerParams(dimension_semantics=("parallel",)),
    )(x, w1, b1, w2, b2, w3, b3)


# ----------------------------------------------------------------------------
# Parameter prep (lane padding + bf16 pre-cast, done once outside the kernels)
# ----------------------------------------------------------------------------
def _prep_conv(w, b):
    """(OC,C,KH,KW) torch conv weight -> (KH*KW*C, 128) bf16, col order (i, j, c)."""
    oc, c, kh, kw = w.shape
    wt = jnp.transpose(w, (2, 3, 1, 0)).reshape(kh * kw * c, oc)  # row=(i*kw+j)*c + ch
    wt = _pad_axis_to(wt, 1, LANE).astype(jnp.bfloat16)
    bp = _pad_axis_to(b.reshape(1, oc), 1, LANE).astype(jnp.float32)
    return wt, bp


def _prep_fc(params, num_classes):
    ncp = _round_up(num_classes, LANE)
    # PyTorch flattens (c, h, w); our activation flatten is (h, w, c_padded_to_128).
    w1 = params["fc1_w"].reshape(16, 5, 5, 120)            # [c, h, w, n]
    w1 = jnp.transpose(w1, (1, 2, 0, 3))                   # [h, w, c, n]
    w1 = _pad_axis_to(w1, 2, LANE)                         # pad channels 16 -> 128
    w1 = w1.reshape(5 * 5 * LANE, 120)                     # row = h*640 + w*128 + c
    w1 = _pad_axis_to(w1, 1, LANE).astype(jnp.bfloat16)    # (3200, 128)
    b1 = _pad_axis_to(params["fc1_b"].reshape(1, -1), 1, LANE).astype(jnp.float32)
    w2 = _pad_axis_to(_pad_axis_to(params["fc2_w"], 0, LANE), 1, LANE).astype(jnp.bfloat16)
    b2 = _pad_axis_to(params["fc2_b"].reshape(1, -1), 1, LANE).astype(jnp.float32)
    w3 = _pad_axis_to(_pad_axis_to(params["fc3_w"], 0, LANE), 1, ncp).astype(jnp.bfloat16)
    b3 = _pad_axis_to(params["fc3_b"].reshape(1, -1), 1, ncp).astype(jnp.float32)
    return w1, b1, w2, b2, w3, b3


# ----------------------------------------------------------------------------
# LeNet5 parameters (deterministic, synthetic) and forward
# ----------------------------------------------------------------------------
def init_params(num_classes=62, key=jax.random.PRNGKey(42)):
    ks = jax.random.split(key, 10)
    s = 0.05
    return {
        "conv1_w": s * jax.random.normal(ks[0], (6, 3, 5, 5), jnp.float32),
        "conv1_b": s * jax.random.normal(ks[1], (6,), jnp.float32),
        "conv2_w": s * jax.random.normal(ks[2], (16, 6, 5, 5), jnp.float32),
        "conv2_b": s * jax.random.normal(ks[3], (16,), jnp.float32),
        # LazyLinear(120): in_features = 16 * 5 * 5 = 400 for 32x32 inputs
        "fc1_w": s * jax.random.normal(ks[4], (400, 120), jnp.float32),
        "fc1_b": s * jax.random.normal(ks[5], (120,), jnp.float32),
        "fc2_w": s * jax.random.normal(ks[6], (120, 84), jnp.float32),
        "fc2_b": s * jax.random.normal(ks[7], (84,), jnp.float32),
        "fc3_w": s * jax.random.normal(ks[8], (84, num_classes), jnp.float32),
        "fc3_b": s * jax.random.normal(ks[9], (num_classes,), jnp.float32),
    }


def lenet5_forward(params, x):
    """x: (B, 3, 32, 32) float32 (NCHW, as in PyTorch) -> (B, num_classes)."""
    num_classes = params["fc3_w"].shape[1]
    B = x.shape[0]
    x = jnp.transpose(x, (0, 2, 3, 1))                      # one-time NCHW -> NHWC glue

    # conv1 block: Conv(3->6, k5) + ReLU + AvgPool(2,2)  -> one fused kernel
    w1c, b1c = _prep_conv(params["conv1_w"], params["conv1_b"])
    col1, oh1, ow1 = _im2col_nhwc(x, 5, 5)                  # (B, 784, 75)
    y = conv_relu_pool(col1, w1c, b1c, _pool_matrix(oh1, ow1), oh1 // 2, ow1 // 2)
    y = y.reshape(B, oh1 // 2, ow1 // 2, LANE)              # (B, 14, 14, 128) free reshape

    # conv2 block: Conv(6->16, k5) + ReLU + AvgPool(2,2)  -> one fused kernel
    w2c, b2c = _prep_conv(params["conv2_w"], params["conv2_b"])
    col2, oh2, ow2 = _im2col_nhwc(y[..., :6], 5, 5)         # (B, 100, 150)
    y = conv_relu_pool(col2, w2c, b2c, _pool_matrix(oh2, ow2), oh2 // 2, ow2 // 2)
    # y: (B, 25, 128): rows = (h, w) of the 5x5 map, lanes = 16 real + 112 zero channels

    # fused FC head on the lane-padded flatten (pad rows of fc1_w are zero)
    y = y.reshape(B, 25 * LANE)                             # (B, 3200) free reshape
    w1, b1, w2, b2, w3, b3 = _prep_fc(params, num_classes)
    logits = fc_head(y, w1, b1, w2, b2, w3, b3)             # (B, 128)
    return logits[:, :num_classes]                          # slice padding off once, at the end


if __name__ == "__main__":
    num_classes = 62
    params = init_params(num_classes=num_classes)

    x = jax.random.normal(jax.random.PRNGKey(0), (2, 3, 32, 32), jnp.float32)

    fwd = jax.jit(lenet5_forward)
    out = jax.block_until_ready(fwd(params, x))

    assert out.shape == (2, num_classes), out.shape
    assert bool(jnp.all(jnp.isfinite(out))), "non-finite output"
    print("KERNEL_OK")
</pallas_src>

<mosaic_0001>
module attributes {stable_mosaic.version = 11 : i64} {
  func.func @_conv_relu_pool_kernel(%arg0: i32, %arg1: memref<1x784x75xf32, #tpu.memory_space<vmem>>, %arg2: memref<75x128xbf16, #tpu.memory_space<vmem>>, %arg3: memref<1x128xf32, #tpu.memory_space<vmem>>, %arg4: memref<196x784xf32, #tpu.memory_space<vmem>>, %arg5: memref<1x196x128xf32, #tpu.memory_space<vmem>>) attributes {dimension_semantics = [#tpu.dimension_semantics<parallel>], iteration_bounds = array<i64: 2>, scalar_prefetch = 0 : i64, scratch_operands = 0 : i64, tpu.core_type = #tpu.core_type<tc>, window_params = [{transform_indices = @transform_0, window_bounds = array<i64: 1, 784, 75>}, {pipeline_mode = #tpu.pipeline_mode<synchronous>, transform_indices = @transform_1, window_bounds = array<i64: 75, 128>}, {pipeline_mode = #tpu.pipeline_mode<synchronous>, transform_indices = @transform_2, window_bounds = array<i64: 1, 128>}, {pipeline_mode = #tpu.pipeline_mode<synchronous>, transform_indices = @transform_3, window_bounds = array<i64: 196, 784>}, {transform_indices = @transform_4, window_bounds = array<i64: 1, 196, 128>}]} {
    %c0 = arith.constant 0 : index
    %c0_0 = arith.constant 0 : index
    %c0_1 = arith.constant 0 : index
    %0 = vector.load %arg1[%c0, %c0_0, %c0_1] : memref<1x784x75xf32, #tpu.memory_space<vmem>>, vector<1x784x75xf32>
    %1 = vector.shape_cast %0 : vector<1x784x75xf32> to vector<784x75xf32>
    %2 = arith.truncf %1 : vector<784x75xf32> to vector<784x75xbf16>
    %c0_2 = arith.constant 0 : index
    %c0_3 = arith.constant 0 : index
    %3 = vector.load %arg2[%c0_2, %c0_3] : memref<75x128xbf16, #tpu.memory_space<vmem>>, vector<75x128xbf16>
    %cst = arith.constant dense<0.000000e+00> : vector<784x128xf32>
    %4 = tpu.matmul %2, %3, %cst {dimension_numbers = #tpu.dot_dimension_numbers<[1], [0], [0], [1], [0, 0, 1, 1], [], []>} : vector<784x75xbf16>, vector<75x128xbf16>, vector<784x128xf32> -> vector<784x128xf32>
    %c0_4 = arith.constant 0 : index
    %c0_5 = arith.constant 0 : index
    %5 = vector.load %arg3[%c0_4, %c0_5] : memref<1x128xf32, #tpu.memory_space<vmem>>, vector<1x128xf32>
    %6 = vector.broadcast %5 : vector<1x128xf32> to vector<784x128xf32>
    %7 = arith.addf %4, %6 : vector<784x128xf32>
    %cst_6 = arith.constant 0.000000e+00 : f32
    %8 = vector.broadcast %cst_6 : f32 to vector<784x128xf32>
    %9 = arith.maximumf %7, %8 : vector<784x128xf32>
    %c0_7 = arith.constant 0 : index
    %c0_8 = arith.constant 0 : index
    %10 = vector.load %arg4[%c0_7, %c0_8] : memref<196x784xf32, #tpu.memory_space<vmem>>, vector<196x784xf32>
    %cst_9 = arith.constant dense<0.000000e+00> : vector<196x128xf32>
    %11 = tpu.matmul %10, %9, %cst_9 {dimension_numbers = #tpu.dot_dimension_numbers<[1], [0], [0], [1], [0, 0, 1, 1], [], []>} : vector<196x784xf32>, vector<784x128xf32>, vector<196x128xf32> -> vector<196x128xf32>
    %c0_10 = arith.constant 0 : index
    %c0_11 = arith.constant 0 : index
    %c0_12 = arith.constant 0 : index
    %12 = vector.load %arg5[%c0_10, %c0_11, %c0_12] : memref<1x196x128xf32, #tpu.memory_space<vmem>>, vector<1x196x128xf32>
    %13 = vector.shape_cast %12 : vector<1x196x128xf32> to vector<196x128xf32>
    %14 = vector.shape_cast %11 : vector<196x128xf32> to vector<1x196x128xf32>
    tpu.vector_store %arg5[%c0_10, %c0_11, %c0_12], %14 {strides = array<i32>} : memref<1x196x128xf32, #tpu.memory_space<vmem>>, vector<1x196x128xf32>,
    return
  }
  func.func @transform_0(%arg0: i32) -> (i32, i32, i32) {
    %c0_i32 = arith.constant 0 : i32
    %c0_i32_0 = arith.constant 0 : i32
    %c0_i32_1 = arith.constant 0 : i32
    return %arg0, %c0_i32, %c0_i32_0 : i32, i32, i32
  }
  func.func @transform_1(%arg0: i32) -> (i32, i32) {
    %c0_i32 = arith.constant 0 : i32
    %c0_i32_0 = arith.constant 0 : i32
    %c0_i32_1 = arith.constant 0 : i32
    return %c0_i32, %c0_i32_0 : i32, i32
  }
  func.func @transform_2(%arg0: i32) -> (i32, i32) {
    %c0_i32 = arith.constant 0 : i32
    %c0_i32_0 = arith.constant 0 : i32
    %c0_i32_1 = arith.constant 0 : i32
    return %c0_i32, %c0_i32_0 : i32, i32
  }
  func.func @transform_3(%arg0: i32) -> (i32, i32) {
    %c0_i32 = arith.constant 0 : i32
    %c0_i32_0 = arith.constant 0 : i32
    %c0_i32_1 = arith.constant 0 : i32
    return %c0_i32, %c0_i32_0 : i32, i32
  }
  func.func @transform_4(%arg0: i32) -> (i32, i32, i32) {
    %c0_i32 = arith.constant 0 : i32
    %c0_i32_0 = arith.constant 0 : i32
    %c0_i32_1 = arith.constant 0 : i32
    return %arg0, %c0_i32, %c0_i32_0 : i32, i32, i32
  }
}

module attributes {stable_mosaic.version = 11 : i64} {
  func.func @_conv_relu_pool_kernel(%arg0: i32, %arg1: memref<1x100x150xf32, #tpu.memory_space<vmem>>, %arg2: memref<150x128xbf16, #tpu.memory_space<vmem>>, %arg3: memref<1x128xf32, #tpu.memory_space<vmem>>, %arg4: memref<25x100xf32, #tpu.memory_space<vmem>>, %arg5: memref<1x25x128xf32, #tpu.memory_space<vmem>>) attributes {dimension_semantics = [#tpu.dimension_semantics<parallel>], iteration_bounds = array<i64: 2>, scalar_prefetch = 0 : i64, scratch_operands = 0 : i64, tpu.core_type = #tpu.core_type<tc>, window_params = [{transform_indices = @transform_0, window_bounds = array<i64: 1, 100, 150>}, {pipeline_mode = #tpu.pipeline_mode<synchronous>, transform_indices = @transform_1, window_bounds = array<i64: 150, 128>}, {pipeline_mode = #tpu.pipeline_mode<synchronous>, transform_indices = @transform_2, window_bounds = array<i64: 1, 128>}, {pipeline_mode = #tpu.pipeline_mode<synchronous>, transform_indices = @transform_3, window_bounds = array<i64: 25, 100>}, {transform_indices = @transform_4, window_bounds = array<i64: 1, 25, 128>}]} {
    %c0 = arith.constant 0 : index
    %c0_0 = arith.constant 0 : index
    %c0_1 = arith.constant 0 : index
    %0 = vector.load %arg1[%c0, %c0_0, %c0_1] : memref<1x100x150xf32, #tpu.memory_space<vmem>>, vector<1x100x150xf32>
    %1 = vector.shape_cast %0 : vector<1x100x150xf32> to vector<100x150xf32>
    %2 = arith.truncf %1 : vector<100x150xf32> to vector<100x150xbf16>
    %c0_2 = arith.constant 0 : index
    %c0_3 = arith.constant 0 : index
    %3 = vector.load %arg2[%c0_2, %c0_3] : memref<150x128xbf16, #tpu.memory_space<vmem>>, vector<150x128xbf16>
    %cst = arith.constant dense<0.000000e+00> : vector<100x128xf32>
    %4 = tpu.matmul %2, %3, %cst {dimension_numbers = #tpu.dot_dimension_numbers<[1], [0], [0], [1], [0, 0, 1, 1], [], []>} : vector<100x150xbf16>, vector<150x128xbf16>, vector<100x128xf32> -> vector<100x128xf32>
    %c0_4 = arith.constant 0 : index
    %c0_5 = arith.constant 0 : index
    %5 = vector.load %arg3[%c0_4, %c0_5] : memref<1x128xf32, #tpu.memory_space<vmem>>, vector<1x128xf32>
    %6 = vector.broadcast %5 : vector<1x128xf32> to vector<100x128xf32>
    %7 = arith.addf %4, %6 : vector<100x128xf32>
    %cst_6 = arith.constant 0.000000e+00 : f32
    %8 = vector.broadcast %cst_6 : f32 to vector<100x128xf32>
    %9 = arith.maximumf %7, %8 : vector<100x128xf32>
    %c0_7 = arith.constant 0 : index
    %c0_8 = arith.constant 0 : index
    %10 = vector.load %arg4[%c0_7, %c0_8] : memref<25x100xf32, #tpu.memory_space<vmem>>, vector<25x100xf32>
    %cst_9 = arith.constant dense<0.000000e+00> : vector<25x128xf32>
    %11 = tpu.matmul %10, %9, %cst_9 {dimension_numbers = #tpu.dot_dimension_numbers<[1], [0], [0], [1], [0, 0, 1, 1], [], []>} : vector<25x100xf32>, vector<100x128xf32>, vector<25x128xf32> -> vector<25x128xf32>
    %c0_10 = arith.constant 0 : index
    %c0_11 = arith.constant 0 : index
    %c0_12 = arith.constant 0 : index
    %12 = vector.load %arg5[%c0_10, %c0_11, %c0_12] : memref<1x25x128xf32, #tpu.memory_space<vmem>>, vector<1x25x128xf32>
    %13 = vector.shape_cast %12 : vector<1x25x128xf32> to vector<25x128xf32>
    %14 = vector.shape_cast %11 : vector<25x128xf32> to vector<1x25x128xf32>
    tpu.vector_store %arg5[%c0_10, %c0_11, %c0_12], %14 {strides = array<i32>} : memref<1x25x128xf32, #tpu.memory_space<vmem>>, vector<1x25x128xf32>,
    return
  }
  func.func @transform_0(%arg0: i32) -> (i32, i32, i32) {
    %c0_i32 = arith.constant 0 : i32
    %c0_i32_0 = arith.constant 0 : i32
    %c0_i32_1 = arith.constant 0 : i32
    return %arg0, %c0_i32, %c0_i32_0 : i32, i32, i32
  }
  func.func @transform_1(%arg0: i32) -> (i32, i32) {
    %c0_i32 = arith.constant 0 : i32
    %c0_i32_0 = arith.constant 0 : i32
    %c0_i32_1 = arith.constant 0 : i32
    return %c0_i32, %c0_i32_0 : i32, i32
  }
  func.func @transform_2(%arg0: i32) -> (i32, i32) {
    %c0_i32 = arith.constant 0 : i32
    %c0_i32_0 = arith.constant 0 : i32
    %c0_i32_1 = arith.constant 0 : i32
    return %c0_i32, %c0_i32_0 : i32, i32
  }
  func.func @transform_3(%arg0: i32) -> (i32, i32) {
    %c0_i32 = arith.constant 0 : i32
    %c0_i32_0 = arith.constant 0 : i32
    %c0_i32_1 = arith.constant 0 : i32
    return %c0_i32, %c0_i32_0 : i32, i32
  }
  func.func @transform_4(%arg0: i32) -> (i32, i32, i32) {
    %c0_i32 = arith.constant 0 : i32
    %c0_i32_0 = arith.constant 0 : i32
    %c0_i32_1 = arith.constant 0 : i32
    return %arg0, %c0_i32, %c0_i32_0 : i32, i32, i32
  }
}

module attributes {stable_mosaic.version = 11 : i64} {
  func.func @_fc_head_kernel(%arg0: i32, %arg1: memref<2x3200xf32, #tpu.memory_space<vmem>>, %arg2: memref<3200x128xbf16, #tpu.memory_space<vmem>>, %arg3: memref<1x128xf32, #tpu.memory_space<vmem>>, %arg4: memref<128x128xbf16, #tpu.memory_space<vmem>>, %arg5: memref<1x128xf32, #tpu.memory_space<vmem>>, %arg6: memref<128x128xbf16, #tpu.memory_space<vmem>>, %arg7: memref<1x128xf32, #tpu.memory_space<vmem>>, %arg8: memref<2x128xf32, #tpu.memory_space<vmem>>) attributes {dimension_semantics = [#tpu.dimension_semantics<parallel>], iteration_bounds = array<i64: 1>, scalar_prefetch = 0 : i64, scratch_operands = 0 : i64, tpu.core_type = #tpu.core_type<tc>, window_params = [{transform_indices = @transform_0, window_bounds = array<i64: 2, 3200>}, {pipeline_mode = #tpu.pipeline_mode<synchronous>, transform_indices = @transform_1, window_bounds = array<i64: 3200, 128>}, {pipeline_mode = #tpu.pipeline_mode<synchronous>, transform_indices = @transform_2, window_bounds = array<i64: 1, 128>}, {pipeline_mode = #tpu.pipeline_mode<synchronous>, transform_indices = @transform_3, window_bounds = array<i64: 128, 128>}, {pipeline_mode = #tpu.pipeline_mode<synchronous>, transform_indices = @transform_4, window_bounds = array<i64: 1, 128>}, {pipeline_mode = #tpu.pipeline_mode<synchronous>, transform_indices = @transform_5, window_bounds = array<i64: 128, 128>}, {pipeline_mode = #tpu.pipeline_mode<synchronous>, transform_indices = @transform_6, window_bounds = array<i64: 1, 128>}, {transform_indices = @transform_7, window_bounds = array<i64: 2, 128>}]} {
    %c0 = arith.constant 0 : index
    %c0_0 = arith.constant 0 : index
    %0 = vector.load %arg1[%c0, %c0_0] : memref<2x3200xf32, #tpu.memory_space<vmem>>, vector<2x3200xf32>
    %1 = arith.truncf %0 : vector<2x3200xf32> to vector<2x3200xbf16>
    %c0_1 = arith.constant 0 : index
    %c0_2 = arith.constant 0 : index
    %2 = vector.load %arg2[%c0_1, %c0_2] : memref<3200x128xbf16, #tpu.memory_space<vmem>>, vector<3200x128xbf16>
    %cst = arith.constant dense<0.000000e+00> : vector<2x128xf32>
    %3 = tpu.matmul %1, %2, %cst {dimension_numbers = #tpu.dot_dimension_numbers<[1], [0], [0], [1], [0, 0, 1, 1], [], []>} : vector<2x3200xbf16>, vector<3200x128xbf16>, vector<2x128xf32> -> vector<2x128xf32>
    %c0_3 = arith.constant 0 : index
    %c0_4 = arith.constant 0 : index
    %4 = vector.load %arg3[%c0_3, %c0_4] : memref<1x128xf32, #tpu.memory_space<vmem>>, vector<1x128xf32>
    %5 = vector.broadcast %4 : vector<1x128xf32> to vector<2x128xf32>
    %6 = arith.addf %3, %5 : vector<2x128xf32>
    %cst_5 = arith.constant 0.000000e+00 : f32
    %7 = vector.broadcast %cst_5 : f32 to vector<2x128xf32>
    %8 = arith.maximumf %6, %7 : vector<2x128xf32>
    %9 = arith.truncf %8 : vector<2x128xf32> to vector<2x128xbf16>
    %c0_6 = arith.constant 0 : index
    %c0_7 = arith.constant 0 : index
    %10 = vector.load %arg4[%c0_6, %c0_7] : memref<128x128xbf16, #tpu.memory_space<vmem>>, vector<128x128xbf16>
    %cst_8 = arith.constant dense<0.000000e+00> : vector<2x128xf32>
    %11 = tpu.matmul %9, %10, %cst_8 {dimension_numbers = #tpu.dot_dimension_numbers<[1], [0], [0], [1], [0, 0, 1, 1], [], []>} : vector<2x128xbf16>, vector<128x128xbf16>, vector<2x128xf32> -> vector<2x128xf32>
    %c0_9 = arith.constant 0 : index
    %c0_10 = arith.constant 0 : index
    %12 = vector.load %arg5[%c0_9, %c0_10] : memref<1x128xf32, #tpu.memory_space<vmem>>, vector<1x128xf32>
    %13 = vector.broadcast %12 : vector<1x128xf32> to vector<2x128xf32>
    %14 = arith.addf %11, %13 : vector<2x128xf32>
    %cst_11 = arith.constant 0.000000e+00 : f32
    %15 = vector.broadcast %cst_11 : f32 to vector<2x128xf32>
    %16 = arith.maximumf %14, %15 : vector<2x128xf32>
    %17 = arith.truncf %16 : vector<2x128xf32> to vector<2x128xbf16>
    %c0_12 = arith.constant 0 : index
    %c0_13 = arith.constant 0 : index
    %18 = vector.load %arg6[%c0_12, %c0_13] : memref<128x128xbf16, #tpu.memory_space<vmem>>, vector<128x128xbf16>
    %cst_14 = arith.constant dense<0.000000e+00> : vector<2x128xf32>
    %19 = tpu.matmul %17, %18, %cst_14 {dimension_numbers = #tpu.dot_dimension_numbers<[1], [0], [0], [1], [0, 0, 1, 1], [], []>} : vector<2x128xbf16>, vector<128x128xbf16>, vector<2x128xf32> -> vector<2x128xf32>
    %c0_15 = arith.constant 0 : index
    %c0_16 = arith.constant 0 : index
    %20 = vector.load %arg7[%c0_15, %c0_16] : memref<1x128xf32, #tpu.memory_space<vmem>>, vector<1x128xf32>
    %21 = vector.broadcast %20 : vector<1x128xf32> to vector<2x128xf32>
    %22 = arith.addf %19, %21 : vector<2x128xf32>
    %c0_17 = arith.constant 0 : index
    %c0_18 = arith.constant 0 : index
    %23 = vector.load %arg8[%c0_17, %c0_18] : memref<2x128xf32, #tpu.memory_space<vmem>>, vector<2x128xf32>
    tpu.vector_store %arg8[%c0_17, %c0_18], %22 {strides = array<i32>} : memref<2x128xf32, #tpu.memory_space<vmem>>, vector<2x128xf32>,
    return
  }
  func.func @transform_0(%arg0: i32) -> (i32, i32) {
    %c0_i32 = arith.constant 0 : i32
    %c0_i32_0 = arith.constant 0 : i32
    return %arg0, %c0_i32 : i32, i32
  }
  func.func @transform_1(%arg0: i32) -> (i32, i32) {
    %c0_i32 = arith.constant 0 : i32
    %c0_i32_0 = arith.constant 0 : i32
    %c0_i32_1 = arith.constant 0 : i32
    return %c0_i32, %c0_i32_0 : i32, i32
  }
  func.func @transform_2(%arg0: i32) -> (i32, i32) {
    %c0_i32 = arith.constant 0 : i32
    %c0_i32_0 = arith.constant 0 : i32
    %c0_i32_1 = arith.constant 0 : i32
    return %c0_i32, %c0_i32_0 : i32, i32
  }
  func.func @transform_3(%arg0: i32) -> (i32, i32) {
    %c0_i32 = arith.constant 0 : i32
    %c0_i32_0 = arith.constant 0 : i32
    %c0_i32_1 = arith.constant 0 : i32
    return %c0_i32, %c0_i32_0 : i32, i32
  }
  func.func @transform_4(%arg0: i32) -> (i32, i32) {
    %c0_i32 = arith.constant 0 : i32
    %c0_i32_0 = arith.constant 0 : i32
    %c0_i32_1 = arith.constant 0 : i32
    return %c0_i32, %c0_i32_0 : i32, i32
  }
  func.func @transform_5(%arg0: i32) -> (i32, i32) {
    %c0_i32 = arith.constant 0 : i32
    %c0_i32_0 = arith.constant 0 : i32
    %c0_i32_1 = arith.constant 0 : i32
    return %c0_i32, %c0_i32_0 : i32, i32
  }
  func.func @transform_6(%arg0: i32) -> (i32, i32) {
    %c0_i32 = arith.constant 0 : i32
    %c0_i32_0 = arith.constant 0 : i32
    %c0_i32_1 = arith.constant 0 : i32
    return %c0_i32, %c0_i32_0 : i32, i32
  }
  func.func @transform_7(%arg0: i32) -> (i32, i32) {
    %c0_i32 = arith.constant 0 : i32
    %c0_i32_0 = arith.constant 0 : i32
    return %arg0, %c0_i32 : i32, i32
  }
}

</mosaic_0001>

<llo_original>
// kernel: lenet5_forward.3
$region0: #{lenet5_forward.3}
  #allocation0 [shape = 'u32[]', space=smem, size = 0x4, offset = 0x4, fixed_abs, tag = 'smem constant byte address 0x4 - core index']
  #allocation1 [shape = 'u32[144,128]{1,0:T(1,128)}', space=vmem, size = 0x12000, scoped, tag = 'internal scratch']
  %s0 = inlined_call_operand.vmem [shape: f32[2,784,75], index: 0, kind: input, shape index: {}]
  %s1 = inlined_call_operand.vmem [shape: bf16[75,128], index: 1, kind: input, shape index: {}]
  %s2 = inlined_call_operand.vmem [shape: f32[1,128], index: 2, kind: input, shape index: {}]
  %s3 = inlined_call_operand.vmem [shape: f32[196,784], index: 3, kind: input, shape index: {}]
  %s4 = inlined_call_operand.vmem [shape: f32[2,196,128], index: 4, kind: output, shape index: {}]
  %s5 = sld [smem:[#allocation0]]
  $region49: #{lenet5_forward.3} parent=0
    _
  %s7 = ssub.s32 1, %s5
  %s8 = scalar_select 0, %s7, %s5
  loop: start=0, step=1, limit=4
  $region2: #{lenet5_forward.3} parent=0 // loop_pre_header
    _
  $region3: #{lenet5_forward.3} parent=0 // loop_header
    %s10 = sphi 0, %s14
    %p11 = scmp.ge.s32.totalorder %s10, 4
    %s20 = sphi 0, %s22
    %s23 = sphi 0, %s20
    %s24 = sphi 0, %s23
    %s40 = sphi 0, %s24
    %s44 = sphi 0, %s44
    %s46 = sphi 0, %s44
    %s47 = sphi 0, %s46
    %s61 = sphi 0, %s47
    %s65 = sphi 0, %s65
    %s67 = sphi 0, %s65
    %s68 = sphi 0, %s67
    %s82 = sphi 0, %s68
    %s86 = sphi 0, %s86
    %s88 = sphi 0, %s86
    %s89 = sphi 0, %s88
    %s103 = sphi 0, %s89
    %s109 = sphi 0, %s111
    %s112 = sphi 0, %s109
    %s113 = sphi 0, %s112
    %s129 = sphi 0, %s113
  $region4: #{lenet5_forward.3} parent=0 // loop_header_branch
    %13 = sbr.rel (%p11) target = $region8
  $region5: #{lenet5_forward.3} parent=0 // loop_body
    %s15 = ssub.s32 %s10, 1
    %s16 = ssub.s32 %s10, 2
    %s17 = sadd.s32 %s10, 1
    %s18 = ssub.s32 %s10, %s17
    %p19 = scmp.eq.s32.totalorder %s18, 0
    %s21 = sadd.s32 %s20, 1
    %s22 = scalar_select %p19, %s20, %s21
    %p25 = pneg %p19
    %p26 = scmp.eq.s32.totalorder %s10, 1
    %p27 = por %p25, %p26
    %p28 = scmp.ne.s32.totalorder %s20, %s23
    %p29 = scmp.eq.s32.totalorder %s10, 0
    %p30 = por %p28, %p29
    %p31 = scmp.ne.s32.totalorder %s20, %s23
    %p32 = scmp.eq.s32.totalorder %s15, 1
    %p33 = por %p31, %p32
    %p34 = scmp.ne.s32.totalorder %s23, %s24
    %p35 = scmp.eq.s32.totalorder %s15, 0
    %p36 = por %p34, %p35
    %p37 = scmp.ne.s32.totalorder %s23, %s24
    %p38 = scmp.eq.s32.totalorder %s16, 1
    %p39 = por %p37, %p38
    %p41 = scmp.ne.s32.totalorder %s24, %s40
    %p42 = scmp.eq.s32.totalorder %s16, 0
    %p43 = por %p41, %p42
    %s45 = sadd.s32 %s44, 1
    %p48 = scmp.eq.s32.totalorder %s10, 1
    %p49 = scmp.ne.s32.totalorder %s44, %s46
    %p50 = scmp.eq.s32.totalorder %s10, 0
    %p51 = por %p49, %p50
    %p52 = scmp.ne.s32.totalorder %s44, %s46
    %p53 = scmp.eq.s32.totalorder %s15, 1
    %p54 = por %p52, %p53
    %p55 = scmp.ne.s32.totalorder %s46, %s47
    %p56 = scmp.eq.s32.totalorder %s15, 0
    %p57 = por %p55, %p56
    %p58 = scmp.ne.s32.totalorder %s46, %s47
    %p59 = scmp.eq.s32.totalorder %s16, 1
    %p60 = por %p58, %p59
    %p62 = scmp.ne.s32.totalorder %s47, %s61
    %p63 = scmp.eq.s32.totalorder %s16, 0
    %p64 = por %p62, %p63
    %s66 = sadd.s32 %s65, 1
    %p69 = scmp.eq.s32.totalorder %s10, 1
    %p70 = scmp.ne.s32.totalorder %s65, %s67
    %p71 = scmp.eq.s32.totalorder %s10, 0
    %p72 = por %p70, %p71
    %p73 = scmp.ne.s32.totalorder %s65, %s67
    %p74 = scmp.eq.s32.totalorder %s15, 1
    %p75 = por %p73, %p74
    %p76 = scmp.ne.s32.totalorder %s67, %s68
    %p77 = scmp.eq.s32.totalorder %s15, 0
    %p78 = por %p76, %p77
    %p79 = scmp.ne.s32.totalorder %s67, %s68
    %p80 = scmp.eq.s32.totalorder %s16, 1
    %p81 = por %p79, %p80
    %p83 = scmp.ne.s32.totalorder %s68, %s82
    %p84 = scmp.eq.s32.totalorder %s16, 0
    %p85 = por %p83, %p84
    %s87 = sadd.s32 %s86, 1
    %p90 = scmp.eq.s32.totalorder %s10, 1
    %p91 = scmp.ne.s32.totalorder %s86, %s88
    %p92 = scmp.eq.s32.totalorder %s10, 0
    %p93 = por %p91, %p92
    %p94 = scmp.ne.s32.totalorder %s86, %s88
    %p95 = scmp.eq.s32.totalorder %s15, 1
    %p96 = por %p94, %p95
    %p97 = scmp.ne.s32.totalorder %s88, %s89
    %p98 = scmp.eq.s32.totalorder %s15, 0
    %p99 = por %p97, %p98
    %p100 = scmp.ne.s32.totalorder %s88, %s89
    %p101 = scmp.eq.s32.totalorder %s16, 1
    %p102 = por %p100, %p101
    %p104 = scmp.ne.s32.totalorder %s89, %s103
    %p105 = scmp.eq.s32.totalorder %s16, 0
    %p106 = por %p104, %p105
    %s107 = ssub.s32 %s10, %s17
    %p108 = scmp.eq.s32.totalorder %s107, 0
    %s110 = sadd.s32 %s109, 1
    %s111 = scalar_select %p108, %s109, %s110
    %p114 = pneg %p108
    %p115 = scmp.eq.s32.totalorder %s10, 1
    %p116 = por %p114, %p115
    %p117 = scmp.ne.s32.totalorder %s109, %s112
    %p118 = scmp.eq.s32.totalorder %s10, 0
    %p119 = por %p117, %p118
    %p120 = scmp.ne.s32.totalorder %s109, %s112
    %p121 = scmp.eq.s32.totalorder %s15, 1
    %p122 = por %p120, %p121
    %p123 = scmp.ne.s32.totalorder %s112, %s113
    %p124 = scmp.eq.s32.totalorder %s15, 0
    %p125 = por %p123, %p124
    %p126 = scmp.ne.s32.totalorder %s112, %s113
    %p127 = scmp.eq.s32.totalorder %s16, 1
    %p128 = por %p126, %p127
    %p130 = scmp.ne.s32.totalorder %s113, %s129
    %p131 = scmp.eq.s32.totalorder %s16, 0
    %p132 = por %p130, %p131
    %p133 = scmp.le.s32.totalorder 1, %s10
    %p134 = scmp.lt.s32.totalorder %s10, 3
    %p135 = pnand %p133, %p134
    %p136 = pneg %p135
    // Predicated region
    $region9: #{lenet5_forward.3} parent=5 // pred_check
      _
    $region10: #{lenet5_forward.3} parent=5 // pred_check_branch
      %138 = sbr.rel (%p135) target = $region12
    $region11: #{lenet5_forward.3} parent=5 // pred_region
      %s139 = ssub.s32 %s10, 1
      // Predicated region
      $region13: #{lenet5_forward.3} parent=11 // pred_check
        %p140 = pneg %p57
      $region14: #{lenet5_forward.3} parent=11 // pred_check_branch
        %142 = sbr.rel (%p140) target = $region16
      $region15: #{lenet5_forward.3} parent=11 // pred_region
        _
      $region16: #{lenet5_forward.3} parent=11 // pred_fallthru
        _
      // Predicated region
      $region17: #{lenet5_forward.3} parent=11 // pred_check
        %p143 = pneg %p78
      $region18: #{lenet5_forward.3} parent=11 // pred_check_branch
        %145 = sbr.rel (%p143) target = $region20
      $region19: #{lenet5_forward.3} parent=11 // pred_region
        _
      $region20: #{lenet5_forward.3} parent=11 // pred_fallthru
        _
      // Predicated region
      $region21: #{lenet5_forward.3} parent=11 // pred_check
        %p146 = pneg %p99
      $region22: #{lenet5_forward.3} parent=11 // pred_check_branch
        %148 = sbr.rel (%p146) target = $region24
      $region23: #{lenet5_forward.3} parent=11 // pred_region
        _
      $region24: #{lenet5_forward.3} parent=11 // pred_fallthru
        _
    $region12: #{lenet5_forward.3} parent=5 // pred_fallthru
      _
    %p149 = scmp.lt.s32.totalorder %s10, 2
    // Predicated region
    $region25: #{lenet5_forward.3} parent=5 // pred_check
      %p150 = pneg %p149
    $region26: #{lenet5_forward.3} parent=5 // pred_check_branch
      %152 = sbr.rel (%p150) target = $region28
    $region27: #{lenet5_forward.3} parent=5 // pred_region
      // Predicated region
      $region29: #{lenet5_forward.3} parent=27 // pred_check
        %p153 = pneg %p30
      $region30: #{lenet5_forward.3} parent=27 // pred_check_branch
        %155 = sbr.rel (%p153) target = $region32
      $region31: #{lenet5_forward.3} parent=27 // pred_region
        %p156 = scmp.lt.s32.totalorder %s10, 1
        %s157 = scalar_select %p156, %s10, 1
        %s158 = smul.addr %s157, 98
        %s159 = smul.addr %s158, 8
        %s160 = scalar_lea.vmem %s0, %s159
      $region32: #{lenet5_forward.3} parent=27 // pred_fallthru
        _
    $region28: #{lenet5_forward.3} parent=5 // pred_fallthru
      _
    %p161 = scmp.le.s32.totalorder 1, %s10
    %p162 = scmp.lt.s32.totalorder %s10, 3
    %p163 = pnand %p161, %p162
    %p164 = pneg %p163
    // Predicated region
    $region33: #{lenet5_forward.3} parent=5 // pred_check
      _
    $region34: #{lenet5_forward.3} parent=5 // pred_check_branch
      %166 = sbr.rel (%p163) target = $region36
    $region35: #{lenet5_forward.3} parent=5 // pred_region
      %s167 = ssub.s32 %s10, 1
      %p168 = scmp.lt.s32.totalorder %s15, 1
      %s169 = scalar_select %p168, %s15, 1
      %s170 = smul.addr %s169, 98
      %s171 = smul.addr %s170, 8
      %s172 = scalar_lea.vmem %s0, %s171
      %p173 = pneg %p36
      %p174 = pneg %p33
      %p175 = pneg %p57
      %p176 = pneg %p54
      %p177 = pneg %p78
      %p178 = pneg %p75
      %p179 = pneg %p99
      %p180 = pneg %p96
      %p181 = pneg %p125
      %p182 = pneg %p122
      %p183 = scmp.lt.s32.totalorder %s15, 1
      %s184 = scalar_select %p183, %s15, 1
      %s185 = smul.addr %s184, 25
      %s186 = smul.addr %s185, 8
      %s187 = scalar_lea.vmem %s4, %s186
      %p188 = scmp.lt.s32.totalorder %s15, 1
      %s189 = scalar_select %p188, %s15, 1
      %s190 = smul.addr %s189, 98
      %s191 = smul.addr %s190, 8
      %s192 = scalar_lea.vmem %s0, %s191
      %p193 = scmp.lt.s32.totalorder %s15, 1
      %s194 = scalar_select %p193, %s15, 1
      %s195 = smul.addr %s194, 25
      %s196 = smul.addr %s195, 8
      %s197 = scalar_lea.vmem %s4, %s196
      %v199 = vld [vmem:[%s192] sm:$0xff]
      %v200 = vld [vmem:[%s192 + $0x8] sm:$0xff]
      %v201 = vld [vmem:[%s192 + $0x10] sm:$0xff]
      %v202 = vld [vmem:[%s192 + $0x18] sm:$0xff]
      %v203 = vld [vmem:[%s192 + $0x20] sm:$0xff]
      %v204 = vld [vmem:[%s192 + $0x28] sm:$0xff]
      %v205 = vld [vmem:[%s192 + $0x30] sm:$0xff]
      %v206 = vld [vmem:[%s192 + $0x38] sm:$0xff]
      %v207 = vld [vmem:[%s192 + $0x40] sm:$0xff]
      %v208 = vld [vmem:[%s192 + $0x48] sm:$0xff]
      %v209 = vld [vmem:[%s192 + $0x50] sm:$0xff]
      %v210 = vld [vmem:[%s192 + $0x58] sm:$0xff]
      %v211 = vld [vmem:[%s192 + $0x60] sm:$0xff]
      %v212 = vld [vmem:[%s192 + $0x68] sm:$0xff]
      %v213 = vld [vmem:[%s192 + $0x70] sm:$0xff]
      %v214 = vld [vmem:[%s192 + $0x78] sm:$0xff]
      %v215 = vld [vmem:[%s192 + $0x80] sm:$0xff]
      %v216 = vld [vmem:[%s192 + $0x88] sm:$0xff]
      %v217 = vld [vmem:[%s192 + $0x90] sm:$0xff]
      %v218 = vld [vmem:[%s192 + $0x98] sm:$0xff]
      %v219 = vld [vmem:[%s192 + $0xa0] sm:$0xff]
      %v220 = vld [vmem:[%s192 + $0xa8] sm:$0xff]
      %v221 = vld [vmem:[%s192 + $0xb0] sm:$0xff]
      %v222 = vld [vmem:[%s192 + $0xb8] sm:$0xff]
      %v223 = vld [vmem:[%s192 + $0xc0] sm:$0xff]
      %v224 = vld [vmem:[%s192 + $0xc8] sm:$0xff]
      %v225 = vld [vmem:[%s192 + $0xd0] sm:$0xff]
      %v226 = vld [vmem:[%s192 + $0xd8] sm:$0xff]
      %v227 = vld [vmem:[%s192 + $0xe0] sm:$0xff]
      %v228 = vld [vmem:[%s192 + $0xe8] sm:$0xff]
      %v229 = vld [vmem:[%s192 + $0xf0] sm:$0xff]
      %v230 = vld [vmem:[%s192 + $0xf8] sm:$0xff]
      %v231 = vld [vmem:[%s192 + $0x100] sm:$0xff]
      %v232 = vld [vmem:[%s192 + $0x108] sm:$0xff]
      %v233 = vld [vmem:[%s192 + $0x110] sm:$0xff]
      %v234 = vld [vmem:[%s192 + $0x118] sm:$0xff]
      %v235 = vld [vmem:[%s192 + $0x120] sm:$0xff]
      %v236 = vld [vmem:[%s192 + $0x128] sm:$0xff]
      %v237 = vld [vmem:[%s192 + $0x130] sm:$0xff]
      %v238 = vld [vmem:[%s192 + $0x138] sm:$0xff]
      %v239 = vld [vmem:[%s192 + $0x140] sm:$0xff]
      %v240 = vld [vmem:[%s192 + $0x148] sm:$0xff]
      %v241 = vld [vmem:[%s192 + $0x150] sm:$0xff]
      %v242 = vld [vmem:[%s192 + $0x158] sm:$0xff]
      %v243 = vld [vmem:[%s192 + $0x160] sm:$0xff]
      %v244 = vld [vmem:[%s192 + $0x168] sm:$0xff]
      %v245 = vld [vmem:[%s192 + $0x170] sm:$0xff]
      %v246 = vld [vmem:[%s192 + $0x178] sm:$0xff]
      %v247 = vld [vmem:[%s192 + $0x180] sm:$0xff]
      %v248 = vld [vmem:[%s192 + $0x188] sm:$0xff]
      %v249 = vld [vmem:[%s192 + $0x190] sm:$0xff]
      %v250 = vld [vmem:[%s192 + $0x198] sm:$0xff]
      %v251 = vld [vmem:[%s192 + $0x1a0] sm:$0xff]
      %v252 = vld [vmem:[%s192 + $0x1a8] sm:$0xff]
      %v253 = vld [vmem:[%s192 + $0x1b0] sm:$0xff]
      %v254 = vld [vmem:[%s192 + $0x1b8] sm:$0xff]
      %v255 = vld [vmem:[%s192 + $0x1c0] sm:$0xff]
      %v256 = vld [vmem:[%s192 + $0x1c8] sm:$0xff]
      %v257 = vld [vmem:[%s192 + $0x1d0] sm:$0xff]
      %v258 = vld [vmem:[%s192 + $0x1d8] sm:$0xff]
      %v259 = vld [vmem:[%s192 + $0x1e0] sm:$0xff]
      %v260 = vld [vmem:[%s192 + $0x1e8] sm:$0xff]
      %v261 = vld [vmem:[%s192 + $0x1f0] sm:$0xff]
      %v262 = vld [vmem:[%s192 + $0x1f8] sm:$0xff]
      %v263 = vld [vmem:[%s192 + $0x200] sm:$0xff]
      %v264 = vld [vmem:[%s192 + $0x208] sm:$0xff]
      %v265 = vld [vmem:[%s192 + $0x210] sm:$0xff]
      %v266 = vld [vmem:[%s192 + $0x218] sm:$0xff]
      %v267 = vld [vmem:[%s192 + $0x220] sm:$0xff]
      %v268 = vld [vmem:[%s192 + $0x228] sm:$0xff]
      %v269 = vld [vmem:[%s192 + $0x230] sm:$0xff]
      %v270 = vld [vmem:[%s192 + $0x238] sm:$0xff]
      %v271 = vld [vmem:[%s192 + $0x240] sm:$0xff]
      %v272 = vld [vmem:[%s192 + $0x248] sm:$0xff]
      %v273 = vld [vmem:[%s192 + $0x250] sm:$0xff]
      %v274 = vld [vmem:[%s192 + $0x258] sm:$0xff]
      %v275 = vld [vmem:[%s192 + $0x260] sm:$0xff]
      %v276 = vld [vmem:[%s192 + $0x268] sm:$0xff]
      %v277 = vld [vmem:[%s192 + $0x270] sm:$0xff]
      %v278 = vld [vmem:[%s192 + $0x278] sm:$0xff]
      %v279 = vld [vmem:[%s192 + $0x280] sm:$0xff]
      %v280 = vld [vmem:[%s192 + $0x288] sm:$0xff]
      %v281 = vld [vmem:[%s192 + $0x290] sm:$0xff]
      %v282 = vld [vmem:[%s192 + $0x298] sm:$0xff]
      %v283 = vld [vmem:[%s192 + $0x2a0] sm:$0xff]
      %v284 = vld [vmem:[%s192 + $0x2a8] sm:$0xff]
      %v285 = vld [vmem:[%s192 + $0x2b0] sm:$0xff]
      %v286 = vld [vmem:[%s192 + $0x2b8] sm:$0xff]
      %v287 = vld [vmem:[%s192 + $0x2c0] sm:$0xff]
      %v288 = vld [vmem:[%s192 + $0x2c8] sm:$0xff]
      %v289 = vld [vmem:[%s192 + $0x2d0] sm:$0xff]
      %v290 = vld [vmem:[%s192 + $0x2d8] sm:$0xff]
      %v291 = vld [vmem:[%s192 + $0x2e0] sm:$0xff]
      %v292 = vld [vmem:[%s192 + $0x2e8] sm:$0xff]
      %v293 = vld [vmem:[%s192 + $0x2f0] sm:$0xff]
      %v294 = vld [vmem:[%s192 + $0x2f8] sm:$0xff]
      %v295 = vld [vmem:[%s192 + $0x300] sm:$0xff]
      %v296 = vld [vmem:[%s192 + $0x308] sm:$0xff]
      %v297 = vpack.c.bf16 %v200, %v199
      %v298 = vpack.c.bf16 %v202, %v201
      %v299 = vpack.c.bf16 %v204, %v203
      %v300 = vpack.c.bf16 %v206, %v205
      %v301 = vpack.c.bf16 %v208, %v207
      %v302 = vpack.c.bf16 %v210, %v209
      %v303 = vpack.c.bf16 %v212, %v211
      %v304 = vpack.c.bf16 %v214, %v213
      %v305 = vpack.c.bf16 %v216, %v215
      %v306 = vpack.c.bf16 %v218, %v217
      %v307 = vpack.c.bf16 %v220, %v219
      %v308 = vpack.c.bf16 %v222, %v221
      %v309 = vpack.c.bf16 %v224, %v223
      %v310 = vpack.c.bf16 %v226, %v225
      %v311 = vpack.c.bf16 %v228, %v227
      %v312 = vpack.c.bf16 %v230, %v229
      %v313 = vpack.c.bf16 %v232, %v231
      %v314 = vpack.c.bf16 %v234, %v233
      %v315 = vpack.c.bf16 %v236, %v235
      %v316 = vpack.c.bf16 %v238, %v237
      %v317 = vpack.c.bf16 %v240, %v239
      %v318 = vpack.c.bf16 %v242, %v241
      %v319 = vpack.c.bf16 %v244, %v243
      %v320 = vpack.c.bf16 %v246, %v245
      %v321 = vpack.c.bf16 %v248, %v247
      %v322 = vpack.c.bf16 %v250, %v249
      %v323 = vpack.c.bf16 %v252, %v251
      %v324 = vpack.c.bf16 %v254, %v253
      %v325 = vpack.c.bf16 %v256, %v255
      %v326 = vpack.c.bf16 %v258, %v257
      %v327 = vpack.c.bf16 %v260, %v259
      %v328 = vpack.c.bf16 %v262, %v261
      %v329 = vpack.c.bf16 %v264, %v263
      %v330 = vpack.c.bf16 %v266, %v265
      %v331 = vpack.c.bf16 %v268, %v267
      %v332 = vpack.c.bf16 %v270, %v269
      %v333 = vpack.c.bf16 %v272, %v271
      %v334 = vpack.c.bf16 %v274, %v273
      %v335 = vpack.c.bf16 %v276, %v275
      %v336 = vpack.c.bf16 %v278, %v277
      %v337 = vpack.c.bf16 %v280, %v279
      %v338 = vpack.c.bf16 %v282, %v281
      %v339 = vpack.c.bf16 %v284, %v283
      %v340 = vpack.c.bf16 %v286, %v285
      %v341 = vpack.c.bf16 %v288, %v287
      %v342 = vpack.c.bf16 %v290, %v289
      %v343 = vpack.c.bf16 %v292, %v291
      %v344 = vpack.c.bf16 %v294, %v293
      %v345 = vpack.c.bf16 %v296, %v295
      %v346 = vld [vmem:[%s1] sm:$0xf]
      %v347 = vld [vmem:[%s1 + $0x4] sm:$0xf]
      %v348 = vld [vmem:[%s1 + $0x8] sm:$0xf]
      %v349 = vld [vmem:[%s1 + $0xc] sm:$0xf]
      %v350 = vld [vmem:[%s1 + $0x10] sm:$0xf]
      %v351 = vld [vmem:[%s1 + $0x14] sm:$0xf]
      %v352 = vld [vmem:[%s1 + $0x18] sm:$0xf]
      %v353 = vld [vmem:[%s1 + $0x1c] sm:$0xf]
      %v354 = vld [vmem:[%s1 + $0x20] sm:$0xf]
      %v355 = vld [vmem:[%s1 + $0x24] sm:$0x3]
      %v356 = vld [vmem:[%s2] sm:$0x1]
      %v358 = vlaneseq
      %v359 = vshrl.u32 %v358, 7
      %v360 = vsub.s32 0, %v359
      %v361 = vrot.slane %v356, %v360
      %v373 = vunpack.c.l.b16 %v346
      %v374 = vunpack.c.l.b16 %v347
      %v375 = vunpack.c.l.b16 %v348
      %v376 = vunpack.c.l.b16 %v349
      %v377 = vunpack.c.l.b16 %v350
      %v378 = vunpack.c.l.b16 %v351
      %v379 = vunpack.c.l.b16 %v352
      %v380 = vunpack.c.l.b16 %v353
      %v381 = vunpack.c.l.b16 %v354
      %v382 = vunpack.c.l.b16 %v355
      %v383 = vpack.c.b16 %v374, %v373
      %v384 = vpack.c.b16 %v376, %v375
      %v385 = vpack.c.b16 %v378, %v377
      %v386 = vpack.c.b16 %v380, %v379
      %v387 = vpack.c.b16 %v382, %v381
      %vm392 = vcmask 613376
      %v394 = vsel %vm392, %v297, 0
      %v397 = vsel %vm392, %v298, 0
      %v400 = vsel %vm392, %v299, 0
      %v403 = vsel %vm392, %v300, 0
      %v406 = vsel %vm392, %v301, 0
      %v409 = vsel %vm392, %v302, 0
      %v412 = vsel %vm392, %v303, 0
      %v415 = vsel %vm392, %v304, 0
      %v418 = vsel %vm392, %v305, 0
      %v421 = vsel %vm392, %v306, 0
      %v424 = vsel %vm392, %v307, 0
      %v427 = vsel %vm392, %v308, 0
      %v430 = vsel %vm392, %v309, 0
      %v433 = vsel %vm392, %v310, 0
      %v436 = vsel %vm392, %v311, 0
      %v439 = vsel %vm392, %v312, 0
      %v442 = vsel %vm392, %v313, 0
      %v445 = vsel %vm392, %v314, 0
      %v448 = vsel %vm392, %v315, 0
      %v451 = vsel %vm392, %v316, 0
      %v454 = vsel %vm392, %v317, 0
      %v457 = vsel %vm392, %v318, 0
      %v460 = vsel %vm392, %v319, 0
      %v463 = vsel %vm392, %v320, 0
      %v466 = vsel %vm392, %v321, 0
      %v469 = vsel %vm392, %v322, 0
      %v472 = vsel %vm392, %v323, 0
      %v475 = vsel %vm392, %v324, 0
      %v478 = vsel %vm392, %v325, 0
      %v481 = vsel %vm392, %v326, 0
      %v484 = vsel %vm392, %v327, 0
      %v487 = vsel %vm392, %v328, 0
      %v490 = vsel %vm392, %v329, 0
      %v493 = vsel %vm392, %v330, 0
      %v496 = vsel %vm392, %v331, 0
      %v499 = vsel %vm392, %v332, 0
      %v502 = vsel %vm392, %v333, 0
      %v505 = vsel %vm392, %v334, 0
      %v508 = vsel %vm392, %v335, 0
      %v511 = vsel %vm392, %v336, 0
      %v514 = vsel %vm392, %v337, 0
      %v517 = vsel %vm392, %v338, 0
      %v520 = vsel %vm392, %v339, 0
      %v523 = vsel %vm392, %v340, 0
      %v526 = vsel %vm392, %v341, 0
      %v529 = vsel %vm392, %v342, 0
      %v532 = vsel %vm392, %v343, 0
      %v535 = vsel %vm392, %v344, 0
      %v538 = vsel %vm392, %v345, 0
      %vm540 = vcmask 1044480
      %vm541 = vcmask 1045504
      %v542 = vsel %vm540, 4294967295, 65535
      %v543 = vsel %vm541, %v542, 0
      %v545 = vand.u32 %v387, %v543
      %547 = vmatprep.subr.bf16.mxu0 0
      %548 = vmatpush1.bf16.msra.mxu0 %v383
      %549 = vmatprep.subr.bf16.mxu0 0
      %550 = vmatpush1.bf16.msra.mxu0 %v384
      %551 = vmatprep.subr.bf16.mxu0 0
      %552 = vmatpush1.bf16.msra.mxu0 %v385
      %553 = vmatprep.subr.bf16.mxu0 0
      %554 = vmatpush1.bf16.msra.mxu0 %v386
      %555 = vmatprep.subr.bf16.mxu0 0
      %556 = vmatpush1.bf16.msra.mxu0 %v545
      %557 = vmatprep.subr.bf16.mxu0 0
      %558 = vmatpush1.bf16.msra.mxu0 0
      %559 = vmatprep.subr.bf16.mxu0 0
      %560 = vmatpush1.bf16.msra.mxu0 0
      %561 = vmatprep.subr.bf16.mxu0 0
      %562 = vmatpush1.bf16.msra.mxu0 0
      %563 = vmatprep.subr.bf16.mxu0 0
      %564 = vmatpush1.bf16.msra.mxu0 0
      %565 = vmatprep.subr.bf16.mxu0 0
      %566 = vmatpush1.bf16.msra.mxu0 0
      %567 = vmatprep.subr.bf16.mxu0 0
      %568 = vmatpush1.bf16.msra.mxu0 0
      %569 = vmatprep.subr.bf16.mxu0 0
      %570 = vmatpush1.bf16.msra.mxu0 0
      %571 = vmatprep.subr.bf16.mxu0 0
      %572 = vmatpush1.bf16.msra.mxu0 0
      %573 = vmatprep.subr.bf16.mxu0 0
      %574 = vmatpush1.bf16.msra.mxu0 0
      %575 = vmatprep.subr.bf16.mxu0 0
      %576 = vmatpush1.bf16.msra.mxu0 0
      %577 = vmatprep.subr.bf16.mxu0 0
      %578 = vmatpush1.bf16.msra.mxu0 0
      %579 = vmatprep.mubr.bf16.mxu0 0
      %580 = vmatmul.mubr.bf16.gmra.mrb[0].mxu0 %v394
      %v581 = vpop.f32.mrb[0].mxu0
      %v582 = vadd.f32 %v361, %v581
      %v583 = vpop.f32.mrb[0].mxu0
      %v584 = vpop.f32.mrb[0].mxu0
      %v585 = vadd.f32 %v361, %v584
      %v586 = vpop.f32.mrb[0].mxu0
      %587 = vmatprep.mubr.bf16.mxu0 0
      %588 = vmatmul.mubr.bf16.gmra.mrb[0].mxu0 %v397
      %v589 = vpop.f32.mrb[0].mxu0
      %v590 = vadd.f32 %v361, %v589
      %v591 = vpop.f32.mrb[0].mxu0
      %v592 = vpop.f32.mrb[0].mxu0
      %v593 = vadd.f32 %v361, %v592
      %v594 = vpop.f32.mrb[0].mxu0
      %595 = vmatprep.mubr.bf16.mxu0 0
      %596 = vmatmul.mubr.bf16.gmra.mrb[0].mxu0 %v400
      %v597 = vpop.f32.mrb[0].mxu0
      %v598 = vadd.f32 %v361, %v597
      %v599 = vpop.f32.mrb[0].mxu0
      %v600 = vpop.f32.mrb[0].mxu0
      %v601 = vadd.f32 %v361, %v600
      %v602 = vpop.f32.mrb[0].mxu0
      %603 = vmatprep.mubr.bf16.mxu0 0
      %604 = vmatmul.mubr.bf16.gmra.mrb[0].mxu0 %v403
      %v605 = vpop.f32.mrb[0].mxu0
      %v606 = vadd.f32 %v361, %v605
      %v607 = vpop.f32.mrb[0].mxu0
      %v608 = vpop.f32.mrb[0].mxu0
      %v609 = vadd.f32 %v361, %v608
      %v610 = vpop.f32.mrb[0].mxu0
      %611 = vmatprep.mubr.bf16.mxu0 0
      %612 = vmatmul.mubr.bf16.gmra.mrb[0].mxu0 %v406
      %v613 = vpop.f32.mrb[0].mxu0
      %v614 = vadd.f32 %v361, %v613
      %v615 = vpop.f32.mrb[0].mxu0
      %v616 = vpop.f32.mrb[0].mxu0
      %v617 = vadd.f32 %v361, %v616
      %v618 = vpop.f32.mrb[0].mxu0
      %619 = vmatprep.mubr.bf16.mxu0 0
      %620 = vmatmul.mubr.bf16.gmra.mrb[0].mxu0 %v409
      %v621 = vpop.f32.mrb[0].mxu0
      %v622 = vadd.f32 %v361, %v621
      %v623 = vpop.f32.mrb[0].mxu0
      %v624 = vpop.f32.mrb[0].mxu0
      %v625 = vadd.f32 %v361, %v624
      %v626 = vpop.f32.mrb[0].mxu0
      %627 = vmatprep.mubr.bf16.mxu0 0
      %628 = vmatmul.mubr.bf16.gmra.mrb[0].mxu0 %v412
      %v629 = vpop.f32.mrb[0].mxu0
      %v630 = vadd.f32 %v361, %v629
      %v631 = vpop.f32.mrb[0].mxu0
      %v632 = vpop.f32.mrb[0].mxu0
      %v633 = vadd.f32 %v361, %v632
      %v634 = vpop.f32.mrb[0].mxu0
      %635 = vmatprep.mubr.bf16.mxu0 0
      %636 = vmatmul.mubr.bf16.gmra.mrb[0].mxu0 %v415
      %v637 = vpop.f32.mrb[0].mxu0
      %v638 = vadd.f32 %v361, %v637
      %v639 = vpop.f32.mrb[0].mxu0
      %v640 = vpop.f32.mrb[0].mxu0
      %v641 = vadd.f32 %v361, %v640
      %v642 = vpop.f32.mrb[0].mxu0
      %643 = vmatprep.mubr.bf16.mxu0 0
      %644 = vmatmul.mubr.bf16.gmra.mrb[0].mxu0 %v418
      %v645 = vpop.f32.mrb[0].mxu0
      %v646 = vadd.f32 %v361, %v645
      %v647 = vpop.f32.mrb[0].mxu0
      %v648 = vpop.f32.mrb[0].mxu0
      %v649 = vadd.f32 %v361, %v648
      %v650 = vpop.f32.mrb[0].mxu0
      %651 = vmatprep.mubr.bf16.mxu0 0
      %652 = vmatmul.mubr.bf16.gmra.mrb[0].mxu0 %v421
      %v653 = vpop.f32.mrb[0].mxu0
      %v654 = vadd.f32 %v361, %v653
      %v655 = vpop.f32.mrb[0].mxu0
      %v656 = vpop.f32.mrb[0].mxu0
      %v657 = vadd.f32 %v361, %v656
      %v658 = vpop.f32.mrb[0].mxu0
      %659 = vmatprep.mubr.bf16.mxu0 0
      %660 = vmatmul.mubr.bf16.gmra.mrb[0].mxu0 %v424
      %v661 = vpop.f32.mrb[0].mxu0
      %v662 = vadd.f32 %v361, %v661
      %v663 = vpop.f32.mrb[0].mxu0
      %v664 = vpop.f32.mrb[0].mxu0
      %v665 = vadd.f32 %v361, %v664
      %v666 = vpop.f32.mrb[0].mxu0
      %667 = vmatprep.mubr.bf16.mxu0 0
      %668 = vmatmul.mubr.bf16.gmra.mrb[0].mxu0 %v427
      %v669 = vpop.f32.mrb[0].mxu0
      %v670 = vadd.f32 %v361, %v669
      %v671 = vpop.f32.mrb[0].mxu0
      %v672 = vpop.f32.mrb[0].mxu0
      %v673 = vadd.f32 %v361, %v672
      %v674 = vpop.f32.mrb[0].mxu0
      %675 = vmatprep.mubr.bf16.mxu0 0
      %676 = vmatmul.mubr.bf16.gmra.mrb[0].mxu0 %v430
      %v677 = vpop.f32.mrb[0].mxu0
      %v678 = vadd.f32 %v361, %v677
      %v679 = vpop.f32.mrb[0].mxu0
      %v680 = vpop.f32.mrb[0].mxu0
      %v681 = vadd.f32 %v361, %v680
      %v682 = vpop.f32.mrb[0].mxu0
      %683 = vmatprep.mubr.bf16.mxu0 0
      %684 = vmatmul.mubr.bf16.gmra.mrb[0].mxu0 %v433
      %v685 = vpop.f32.mrb[0].mxu0
      %v686 = vadd.f32 %v361, %v685
      %v687 = vpop.f32.mrb[0].mxu0
      %v688 = vpop.f32.mrb[0].mxu0
      %v689 = vadd.f32 %v361, %v688
      %v690 = vpop.f32.mrb[0].mxu0
      %691 = vmatprep.mubr.bf16.mxu0 0
      %692 = vmatmul.mubr.bf16.gmra.mrb[0].mxu0 %v436
      %v693 = vpop.f32.mrb[0].mxu0
      %v694 = vadd.f32 %v361, %v693
      %v695 = vpop.f32.mrb[0].mxu0
      %v696 = vpop.f32.mrb[0].mxu0
      %v697 = vadd.f32 %v361, %v696
      %v698 = vpop.f32.mrb[0].mxu0
      %699 = vmatprep.mubr.bf16.mxu0 0
      %700 = vmatmul.mubr.bf16.gmra.mrb[0].mxu0 %v439
      %v701 = vpop.f32.mrb[0].mxu0
      %v702 = vadd.f32 %v361, %v701
      %v703 = vpop.f32.mrb[0].mxu0
      %v704 = vpop.f32.mrb[0].mxu0
      %v705 = vadd.f32 %v361, %v704
      %v706 = vpop.f32.mrb[0].mxu0
      %707 = vmatprep.mubr.bf16.mxu0 0
      %708 = vmatmul.mubr.bf16.gmra.mrb[0].mxu0 %v442
      %v709 = vpop.f32.mrb[0].mxu0
      %v710 = vadd.f32 %v361, %v709
      %v711 = vpop.f32.mrb[0].mxu0
      %v712 = vpop.f32.mrb[0].mxu0
      %v713 = vadd.f32 %v361, %v712
      %v714 = vpop.f32.mrb[0].mxu0
      %715 = vmatprep.mubr.bf16.mxu0 0
      %716 = vmatmul.mubr.bf16.gmra.mrb[0].mxu0 %v445
      %v717 = vpop.f32.mrb[0].mxu0
      %v718 = vadd.f32 %v361, %v717
      %v719 = vpop.f32.mrb[0].mxu0
      %v720 = vpop.f32.mrb[0].mxu0
      %v721 = vadd.f32 %v361, %v720
      %v722 = vpop.f32.mrb[0].mxu0
      %723 = vmatprep.mubr.bf16.mxu0 0
      %724 = vmatmul.mubr.bf16.gmra.mrb[0].mxu0 %v448
      %v725 = vpop.f32.mrb[0].mxu0
      %v726 = vadd.f32 %v361, %v725
      %v727 = vpop.f32.mrb[0].mxu0
      %v728 = vpop.f32.mrb[0].mxu0
      %v729 = vadd.f32 %v361, %v728
      %v730 = vpop.f32.mrb[0].mxu0
      %731 = vmatprep.mubr.bf16.mxu0 0
      %732 = vmatmul.mubr.bf16.gmra.mrb[0].mxu0 %v451
      %v733 = vpop.f32.mrb[0].mxu0
      %v734 = vadd.f32 %v361, %v733
      %v735 = vpop.f32.mrb[0].mxu0
      %v736 = vpop.f32.mrb[0].mxu0
      %v737 = vadd.f32 %v361, %v736
      %v738 = vpop.f32.mrb[0].mxu0
      %739 = vmatprep.mubr.bf16.mxu0 0
      %740 = vmatmul.mubr.bf16.gmra.mrb[0].mxu0 %v454
      %v741 = vpop.f32.mrb[0].mxu0
      %v742 = vadd.f32 %v361, %v741
      %v743 = vpop.f32.mrb[0].mxu0
      %v744 = vpop.f32.mrb[0].mxu0
      %v745 = vadd.f32 %v361, %v744
      %v746 = vpop.f32.mrb[0].mxu0
      %747 = vmatprep.mubr.bf16.mxu0 0
      %748 = vmatmul.mubr.bf16.gmra.mrb[0].mxu0 %v457
      %v749 = vpop.f32.mrb[0].mxu0
      %v750 = vadd.f32 %v361, %v749
      %v751 = vpop.f32.mrb[0].mxu0
      %v752 = vpop.f32.mrb[0].mxu0
      %v753 = vadd.f32 %v361, %v752
      %v754 = vpop.f32.mrb[0].mxu0
      %755 = vmatprep.mubr.bf16.mxu0 0
      %756 = vmatmul.mubr.bf16.gmra.mrb[0].mxu0 %v460
      %v757 = vpop.f32.mrb[0].mxu0
      %v758 = vadd.f32 %v361, %v757
      %v759 = vpop.f32.mrb[0].mxu0
      %v760 = vpop.f32.mrb[0].mxu0
      %v761 = vadd.f32 %v361, %v760
      %v762 = vpop.f32.mrb[0].mxu0
      %763 = vmatprep.mubr.bf16.mxu0 0
      %764 = vmatmul.mubr.bf16.gmra.mrb[0].mxu0 %v463
      %v765 = vpop.f32.mrb[0].mxu0
      %v766 = vadd.f32 %v361, %v765
      %v767 = vpop.f32.mrb[0].mxu0
      %v768 = vpop.f32.mrb[0].mxu0
      %v769 = vadd.f32 %v361, %v768
      %v770 = vpop.f32.mrb[0].mxu0
      %771 = vmatprep.mubr.bf16.mxu0 0
      %772 = vmatmul.mubr.bf16.gmra.mrb[0].mxu0 %v466
      %v773 = vpop.f32.mrb[0].mxu0
      %v774 = vadd.f32 %v361, %v773
      %v775 = vpop.f32.mrb[0].mxu0
      %v776 = vpop.f32.mrb[0].mxu0
      %v777 = vadd.f32 %v361, %v776
      %v778 = vpop.f32.mrb[0].mxu0
      %779 = vmatprep.mubr.bf16.mxu0 0
      %780 = vmatmul.mubr.bf16.gmra.mrb[0].mxu0 %v469
      %v781 = vpop.f32.mrb[0].mxu0
      %v782 = vadd.f32 %v361, %v781
      %v783 = vpop.f32.mrb[0].mxu0
      %v784 = vpop.f32.mrb[0].mxu0
      %v785 = vadd.f32 %v361, %v784
      %v786 = vpop.f32.mrb[0].mxu0
      %787 = vmatprep.mubr.bf16.mxu0 0
      %788 = vmatmul.mubr.bf16.gmra.mrb[0].mxu0 %v472
      %v789 = vpop.f32.mrb[0].mxu0
      %v790 = vadd.f32 %v361, %v789
      %v791 = vpop.f32.mrb[0].mxu0
      %v792 = vpop.f32.mrb[0].mxu0
      %v793 = vadd.f32 %v361, %v792
      %v794 = vpop.f32.mrb[0].mxu0
      %795 = vmatprep.mubr.bf16.mxu0 0
      %796 = vmatmul.mubr.bf16.gmra.mrb[0].mxu0 %v475
      %v797 = vpop.f32.mrb[0].mxu0
      %v798 = vadd.f32 %v361, %v797
      %v799 = vpop.f32.mrb[0].mxu0
      %v800 = vpop.f32.mrb[0].mxu0
      %v801 = vadd.f32 %v361, %v800
      %v802 = vpop.f32.mrb[0].mxu0
      %803 = vmatprep.mubr.bf16.mxu0 0
      %804 = vmatmul.mubr.bf16.gmra.mrb[0].mxu0 %v478
      %v805 = vpop.f32.mrb[0].mxu0
      %v806 = vadd.f32 %v361, %v805
      %v807 = vpop.f32.mrb[0].mxu0
      %v808 = vpop.f32.mrb[0].mxu0
      %v809 = vadd.f32 %v361, %v808
      %v810 = vpop.f32.mrb[0].mxu0
      %811 = vmatprep.mubr.bf16.mxu0 0
      %812 = vmatmul.mubr.bf16.gmra.mrb[0].mxu0 %v481
      %v813 = vpop.f32.mrb[0].mxu0
      %v814 = vadd.f32 %v361, %v813
      %v815 = vpop.f32.mrb[0].mxu0
      %v816 = vpop.f32.mrb[0].mxu0
      %v817 = vadd.f32 %v361, %v816
      %v818 = vpop.f32.mrb[0].mxu0
      %819 = vmatprep.mubr.bf16.mxu0 0
      %820 = vmatmul.mubr.bf16.gmra.mrb[0].mxu0 %v484
      %v821 = vpop.f32.mrb[0].mxu0
      %v822 = vadd.f32 %v361, %v821
      %v823 = vpop.f32.mrb[0].mxu0
      %v824 = vpop.f32.mrb[0].mxu0
      %v825 = vadd.f32 %v361, %v824
      %v826 = vpop.f32.mrb[0].mxu0
      %827 = vmatprep.mubr.bf16.mxu0 0
      %828 = vmatmul.mubr.bf16.gmra.mrb[0].mxu0 %v487
      %v829 = vpop.f32.mrb[0].mxu0
      %v830 = vadd.f32 %v361, %v829
      %v831 = vpop.f32.mrb[0].mxu0
      %v832 = vpop.f32.mrb[0].mxu0
      %v833 = vadd.f32 %v361, %v832
      %v834 = vpop.f32.mrb[0].mxu0
      %835 = vmatprep.mubr.bf16.mxu0 0
      %836 = vmatmul.mubr.bf16.gmra.mrb[0].mxu0 %v490
      %v837 = vpop.f32.mrb[0].mxu0
      %v838 = vadd.f32 %v361, %v837
      %v839 = vpop.f32.mrb[0].mxu0
      %v840 = vpop.f32.mrb[0].mxu0
      %v841 = vadd.f32 %v361, %v840
      %v842 = vpop.f32.mrb[0].mxu0
      %843 = vmatprep.mubr.bf16.mxu0 0
      %844 = vmatmul.mubr.bf16.gmra.mrb[0].mxu0 %v493
      %v845 = vpop.f32.mrb[0].mxu0
      %v846 = vadd.f32 %v361, %v845
      %v847 = vpop.f32.mrb[0].mxu0
      %v848 = vpop.f32.mrb[0].mxu0
      %v849 = vadd.f32 %v361, %v848
      %v850 = vpop.f32.mrb[0].mxu0
      %851 = vmatprep.mubr.bf16.mxu0 0
      %852 = vmatmul.mubr.bf16.gmra.mrb[0].mxu0 %v496
      %v853 = vpop.f32.mrb[0].mxu0
      %v854 = vadd.f32 %v361, %v853
      %v855 = vpop.f32.mrb[0].mxu0
      %v856 = vpop.f32.mrb[0].mxu0
      %v857 = vadd.f32 %v361, %v856
      %v858 = vpop.f32.mrb[0].mxu0
      %859 = vmatprep.mubr.bf16.mxu0 0
      %860 = vmatmul.mubr.bf16.gmra.mrb[0].mxu0 %v499
      %v861 = vpop.f32.mrb[0].mxu0
      %v862 = vadd.f32 %v361, %v861
      %v863 = vpop.f32.mrb[0].mxu0
      %v864 = vpop.f32.mrb[0].mxu0
      %v865 = vadd.f32 %v361, %v864
      %v866 = vpop.f32.mrb[0].mxu0
      %867 = vmatprep.mubr.bf16.mxu0 0
      %868 = vmatmul.mubr.bf16.gmra.mrb[0].mxu0 %v502
      %v869 = vpop.f32.mrb[0].mxu0
      %v870 = vadd.f32 %v361, %v869
      %v871 = vpop.f32.mrb[0].mxu0
      %v872 = vpop.f32.mrb[0].mxu0
      %v873 = vadd.f32 %v361, %v872
      %v874 = vpop.f32.mrb[0].mxu0
      %875 = vmatprep.mubr.bf16.mxu0 0
      %876 = vmatmul.mubr.bf16.gmra.mrb[0].mxu0 %v505
      %v877 = vpop.f32.mrb[0].mxu0
      %v878 = vadd.f32 %v361, %v877
      %v879 = vpop.f32.mrb[0].mxu0
      %v880 = vpop.f32.mrb[0].mxu0
      %v881 = vadd.f32 %v361, %v880
      %v882 = vpop.f32.mrb[0].mxu0
      %883 = vmatprep.mubr.bf16.mxu0 0
      %884 = vmatmul.mubr.bf16.gmra.mrb[0].mxu0 %v508
      %v885 = vpop.f32.mrb[0].mxu0
      %v886 = vadd.f32 %v361, %v885
      %v887 = vpop.f32.mrb[0].mxu0
      %v888 = vpop.f32.mrb[0].mxu0
      %v889 = vadd.f32 %v361, %v888
      %v890 = vpop.f32.mrb[0].mxu0
      %891 = vmatprep.mubr.bf16.mxu0 0
      %892 = vmatmul.mubr.bf16.gmra.mrb[0].mxu0 %v511
      %v893 = vpop.f32.mrb[0].mxu0
      %v894 = vadd.f32 %v361, %v893
      %v895 = vpop.f32.mrb[0].mxu0
      %v896 = vpop.f32.mrb[0].mxu0
      %v897 = vadd.f32 %v361, %v896
      %v898 = vpop.f32.mrb[0].mxu0
      %899 = vmatprep.mubr.bf16.mxu0 0
      %900 = vmatmul.mubr.bf16.gmra.mrb[0].mxu0 %v514
      %v901 = vpop.f32.mrb[0].mxu0
      %v902 = vadd.f32 %v361, %v901
      %v903 = vpop.f32.mrb[0].mxu0
      %v904 = vpop.f32.mrb[0].mxu0
      %v905 = vadd.f32 %v361, %v904
      %v906 = vpop.f32.mrb[0].mxu0
      %907 = vmatprep.mubr.bf16.mxu0 0
      %908 = vmatmul.mubr.bf16.gmra.mrb[0].mxu0 %v517
      %v909 = vpop.f32.mrb[0].mxu0
      %v910 = vadd.f32 %v361, %v909
      %v911 = vpop.f32.mrb[0].mxu0
      %v912 = vpop.f32.mrb[0].mxu0
      %v913 = vadd.f32 %v361, %v912
      %v914 = vpop.f32.mrb[0].mxu0
      %915 = vmatprep.mubr.bf16.mxu0 0
      %916 = vmatmul.mubr.bf16.gmra.mrb[0].mxu0 %v520
      %v917 = vpop.f32.mrb[0].mxu0
      %v918 = vadd.f32 %v361, %v917
      %v919 = vpop.f32.mrb[0].mxu0
      %v920 = vpop.f32.mrb[0].mxu0
      %v921 = vadd.f32 %v361, %v920
      %v922 = vpop.f32.mrb[0].mxu0
      %923 = vmatprep.mubr.bf16.mxu0 0
      %924 = vmatmul.mubr.bf16.gmra.mrb[0].mxu0 %v523
      %v925 = vpop.f32.mrb[0].mxu0
      %v926 = vadd.f32 %v361, %v925
      %v927 = vpop.f32.mrb[0].mxu0
      %v928 = vpop.f32.mrb[0].mxu0
      %v929 = vadd.f32 %v361, %v928
      %v930 = vpop.f32.mrb[0].mxu0
      %931 = vmatprep.mubr.bf16.mxu0 0
      %932 = vmatmul.mubr.bf16.gmra.mrb[0].mxu0 %v526
      %v933 = vpop.f32.mrb[0].mxu0
      %v934 = vadd.f32 %v361, %v933
      %v935 = vpop.f32.mrb[0].mxu0
      %v936 = vpop.f32.mrb[0].mxu0
      %v937 = vadd.f32 %v361, %v936
      %v938 = vpop.f32.mrb[0].mxu0
      %939 = vmatprep.mubr.bf16.mxu0 0
      %940 = vmatmul.mubr.bf16.gmra.mrb[0].mxu0 %v529
      %v941 = vpop.f32.mrb[0].mxu0
      %v942 = vadd.f32 %v361, %v941
      %v943 = vpop.f32.mrb[0].mxu0
      %v944 = vpop.f32.mrb[0].mxu0
      %v945 = vadd.f32 %v361, %v944
      %v946 = vpop.f32.mrb[0].mxu0
      %947 = vmatprep.mubr.bf16.mxu0 0
      %948 = vmatmul.mubr.bf16.gmra.mrb[0].mxu0 %v532
      %v949 = vpop.f32.mrb[0].mxu0
      %v950 = vadd.f32 %v361, %v949
      %v951 = vpop.f32.mrb[0].mxu0
      %v952 = vpop.f32.mrb[0].mxu0
      %v953 = vadd.f32 %v361, %v952
      %v954 = vpop.f32.mrb[0].mxu0
      %955 = vmatprep.mubr.bf16.mxu0 0
      %956 = vmatmul.mubr.bf16.gmra.mrb[0].mxu0 %v535
      %v957 = vpop.f32.mrb[0].mxu0
      %v958 = vadd.f32 %v361, %v957
      %v959 = vpop.f32.mrb[0].mxu0
      %v960 = vpop.f32.mrb[0].mxu0
      %v961 = vadd.f32 %v361, %v960
      %v962 = vpop.f32.mrb[0].mxu0
      %963 = vmatprep.mubr.bf16.mxu0 0
      %964 = vmatmul.mubr.bf16.gmra.mrb[0].mxu0 %v538
      %v965 = vpop.f32.mrb[0].mxu0
      %v966 = vadd.f32 %v361, %v965
      %v967 = vpop.f32.mrb[0].mxu0
      %v968 = vpop.f32.mrb[0].mxu0
      %v969 = vadd.f32 %v361, %v968
      %v970 = vpop.f32.mrb[0].mxu0
      %971 = vdwg.mxu0
      %v972 = vmax.f32 %v582, 0.0
      %v973 = vmax.f32 %v585, 0.0
      %v974 = vmax.f32 %v590, 0.0
      %v975 = vmax.f32 %v593, 0.0
      %v976 = vmax.f32 %v598, 0.0
      %v977 = vmax.f32 %v601, 0.0
      %v978 = vmax.f32 %v606, 0.0
      %v979 = vmax.f32 %v609, 0.0
      %v980 = vmax.f32 %v614, 0.0
      %v981 = vmax.f32 %v617, 0.0
      %v982 = vmax.f32 %v622, 0.0
      %v983 = vmax.f32 %v625, 0.0
      %v984 = vmax.f32 %v630, 0.0
      %v985 = vmax.f32 %v633, 0.0
      %v986 = vmax.f32 %v638, 0.0
      %v987 = vmax.f32 %v641, 0.0
      %v988 = vmax.f32 %v646, 0.0
      %v989 = vmax.f32 %v649, 0.0
      %v990 = vmax.f32 %v654, 0.0
      %v991 = vmax.f32 %v657, 0.0
      %v992 = vmax.f32 %v662, 0.0
      %v993 = vmax.f32 %v665, 0.0
      %v994 = vmax.f32 %v670, 0.0
      %v995 = vmax.f32 %v673, 0.0
      %v996 = vmax.f32 %v678, 0.0
      %v997 = vmax.f32 %v681, 0.0
      %v998 = vmax.f32 %v686, 0.0
      %v999 = vmax.f32 %v689, 0.0
      %v1000 = vmax.f32 %v694, 0.0
      %v1001 = vmax.f32 %v697, 0.0
      %v1002 = vmax.f32 %v702, 0.0
      %v1003 = vmax.f32 %v705, 0.0
      %v1004 = vmax.f32 %v710, 0.0
      %v1005 = vmax.f32 %v713, 0.0
      %v1006 = vmax.f32 %v718, 0.0
      %v1007 = vmax.f32 %v721, 0.0
      %v1008 = vmax.f32 %v726, 0.0
      %v1009 = vmax.f32 %v729, 0.0
      %v1010 = vmax.f32 %v734, 0.0
      %v1011 = vmax.f32 %v737, 0.0
      %v1012 = vmax.f32 %v742, 0.0
      %v1013 = vmax.f32 %v745, 0.0
      %v1014 = vmax.f32 %v750, 0.0
      %v1015 = vmax.f32 %v753, 0.0
      %v1016 = vmax.f32 %v758, 0.0
      %v1017 = vmax.f32 %v761, 0.0
      %v1018 = vmax.f32 %v766, 0.0
      %v1019 = vmax.f32 %v769, 0.0
      %v1020 = vmax.f32 %v774, 0.0
      %v1021 = vmax.f32 %v777, 0.0
      %v1022 = vmax.f32 %v782, 0.0
      %v1023 = vmax.f32 %v785, 0.0
      %v1024 = vmax.f32 %v790, 0.0
      %v1025 = vmax.f32 %v793, 0.0
      %v1026 = vmax.f32 %v798, 0.0
      %v1027 = vmax.f32 %v801, 0.0
      %v1028 = vmax.f32 %v806, 0.0
      %v1029 = vmax.f32 %v809, 0.0
      %v1030 = vmax.f32 %v814, 0.0
      %v1031 = vmax.f32 %v817, 0.0
      %v1032 = vmax.f32 %v822, 0.0
      %v1033 = vmax.f32 %v825, 0.0
      %v1034 = vmax.f32 %v830, 0.0
      %v1035 = vmax.f32 %v833, 0.0
      %v1036 = vmax.f32 %v838, 0.0
      %v1037 = vmax.f32 %v841, 0.0
      %v1038 = vmax.f32 %v846, 0.0
      %v1039 = vmax.f32 %v849, 0.0
      %v1040 = vmax.f32 %v854, 0.0
      %v1041 = vmax.f32 %v857, 0.0
      %v1042 = vmax.f32 %v862, 0.0
      %v1043 = vmax.f32 %v865, 0.0
      %v1044 = vmax.f32 %v870, 0.0
      %v1045 = vmax.f32 %v873, 0.0
      %v1046 = vmax.f32 %v878, 0.0
      %v1047 = vmax.f32 %v881, 0.0
      %v1048 = vmax.f32 %v886, 0.0
      %v1049 = vmax.f32 %v889, 0.0
      %v1050 = vmax.f32 %v894, 0.0
      %v1051 = vmax.f32 %v897, 0.0
      %v1052 = vmax.f32 %v902, 0.0
      %v1053 = vmax.f32 %v905, 0.0
      %v1054 = vmax.f32 %v910, 0.0
      %v1055 = vmax.f32 %v913, 0.0
      %v1056 = vmax.f32 %v918, 0.0
      %v1057 = vmax.f32 %v921, 0.0
      %v1058 = vmax.f32 %v926, 0.0
      %v1059 = vmax.f32 %v929, 0.0
      %v1060 = vmax.f32 %v934, 0.0
      %v1061 = vmax.f32 %v937, 0.0
      %v1062 = vmax.f32 %v942, 0.0
      %v1063 = vmax.f32 %v945, 0.0
      %v1064 = vmax.f32 %v950, 0.0
      %v1065 = vmax.f32 %v953, 0.0
      %v1066 = vmax.f32 %v958, 0.0
      %v1067 = vmax.f32 %v961, 0.0
      %v1068 = vmax.f32 %v966, 0.0
      %v1069 = vmax.f32 %v969, 0.0
      %v1070 = vld [vmem:[%s3] sm:$0xff]
      %v1071 = vld [vmem:[%s3 + $0x8] sm:$0xff]
      %v1072 = vld [vmem:[%s3 + $0x10] sm:$0xff]
      %v1073 = vld [vmem:[%s3 + $0x18] sm:$0xff]
      %v1074 = vld [vmem:[%s3 + $0x20] sm:$0xff]
      %v1075 = vld [vmem:[%s3 + $0x28] sm:$0xff]
      %v1076 = vld [vmem:[%s3 + $0x30] sm:$0xff]
      %v1077 = vld [vmem:[%s3 + $0x38] sm:$0xff]
      %v1078 = vld [vmem:[%s3 + $0x40] sm:$0xff]
      %v1079 = vld [vmem:[%s3 + $0x48] sm:$0xff]
      %v1080 = vld [vmem:[%s3 + $0x50] sm:$0xff]
      %v1081 = vld [vmem:[%s3 + $0x58] sm:$0xff]
      %v1082 = vld [vmem:[%s3 + $0x60] sm:$0xff]
      %v1083 = vld [vmem:[%s3 + $0x68] sm:$0xff]
      %v1084 = vld [vmem:[%s3 + $0x70] sm:$0xff]
      %v1085 = vld [vmem:[%s3 + $0x78] sm:$0xff]
      %v1086 = vld [vmem:[%s3 + $0x80] sm:$0xff]
      %v1087 = vld [vmem:[%s3 + $0x88] sm:$0xff]
      %v1088 = vld [vmem:[%s3 + $0x90] sm:$0xff]
      %v1089 = vld [vmem:[%s3 + $0x98] sm:$0xff]
      %v1090 = vld [vmem:[%s3 + $0xa0] sm:$0xff]
      %v1091 = vld [vmem:[%s3 + $0xa8] sm:$0xff]
      %v1092 = vld [vmem:[%s3 + $0xb0] sm:$0xff]
      %v1093 = vld [vmem:[%s3 + $0xb8] sm:$0xff]
      %v1094 = vld [vmem:[%s3 + $0xc0] sm:$0xff]
      %v1095 = vld [vmem:[%s3 + $0xc8] sm:$0xff]
      %v1096 = vld [vmem:[%s3 + $0xd0] sm:$0xff]
      %v1097 = vld [vmem:[%s3 + $0xd8] sm:$0xff]
      %v1098 = vld [vmem:[%s3 + $0xe0] sm:$0xff]
      %v1099 = vld [vmem:[%s3 + $0xe8] sm:$0xff]
      %v1100 = vld [vmem:[%s3 + $0xf0] sm:$0xff]
      %v1101 = vld [vmem:[%s3 + $0xf8] sm:$0xff]
      %v1102 = vld [vmem:[%s3 + $0x100] sm:$0xff]
      %v1103 = vld [vmem:[%s3 + $0x108] sm:$0xff]
      %v1104 = vld [vmem:[%s3 + $0x110] sm:$0xff]
      %v1105 = vld [vmem:[%s3 + $0x118] sm:$0xff]
      %v1106 = vld [vmem:[%s3 + $0x120] sm:$0xff]
      %v1107 = vld [vmem:[%s3 + $0x128] sm:$0xff]
      %v1108 = vld [vmem:[%s3 + $0x130] sm:$0xff]
      %v1109 = vld [vmem:[%s3 + $0x138] sm:$0xff]
      %v1110 = vld [vmem:[%s3 + $0x140] sm:$0xff]
      %v1111 = vld [vmem:[%s3 + $0x148] sm:$0xff]
      %v1112 = vld [vmem:[%s3 + $0x150] sm:$0xff]
      %v1113 = vld [vmem:[%s3 + $0x158] sm:$0xff]
      %v1114 = vld [vmem:[%s3 + $0x160] sm:$0xff]
      %v1115 = vld [vmem:[%s3 + $0x168] sm:$0xff]
      %v1116 = vld [vmem:[%s3 + $0x170] sm:$0xff]
      %v1117 = vld [vmem:[%s3 + $0x178] sm:$0xff]
      %v1118 = vld [vmem:[%s3 + $0x180] sm:$0xff]
      %v1119 = vld [vmem:[%s3 + $0x188] sm:$0xff]
      %v1120 = vld [vmem:[%s3 + $0x190] sm:$0xff]
      %v1121 = vld [vmem:[%s3 + $0x198] sm:$0xff]
      %v1122 = vld [vmem:[%s3 + $0x1a0] sm:$0xff]
      %v1123 = vld [vmem:[%s3 + $0x1a8] sm:$0xff]
      %v1124 = vld [vmem:[%s3 + $0x1b0] sm:$0xff]
      %v1125 = vld [vmem:[%s3 + $0x1b8] sm:$0xff]
      %v1126 = vld [vmem:[%s3 + $0x1c0] sm:$0xff]
      %v1127 = vld [vmem:[%s3 + $0x1c8] sm:$0xff]
      %v1128 = vld [vmem:[%s3 + $0x1d0] sm:$0xff]
      %v1129 = vld [vmem:[%s3 + $0x1d8] sm:$0xff]
      %v1130 = vld [vmem:[%s3 + $0x1e0] sm:$0xff]
      %v1131 = vld [vmem:[%s3 + $0x1e8] sm:$0xff]
      %v1132 = vld [vmem:[%s3 + $0x1f0] sm:$0xff]
      %v1133 = vld [vmem:[%s3 + $0x1f8] sm:$0xff]
      %v1134 = vld [vmem:[%s3 + $0x200] sm:$0xff]
      %v1135 = vld [vmem:[%s3 + $0x208] sm:$0xff]
      %v1136 = vld [vmem:[%s3 + $0x210] sm:$0xff]
      %v1137 = vld [vmem:[%s3 + $0x218] sm:$0xff]
      %v1138 = vld [vmem:[%s3 + $0x220] sm:$0xff]
      %v1139 = vld [vmem:[%s3 + $0x228] sm:$0xff]
      %v1140 = vld [vmem:[%s3 + $0x230] sm:$0xff]
      %v1141 = vld [vmem:[%s3 + $0x238] sm:$0xff]
      %v1142 = vld [vmem:[%s3 + $0x240] sm:$0xff]
      %v1143 = vld [vmem:[%s3 + $0x248] sm:$0xff]
      %v1144 = vld [vmem:[%s3 + $0x250] sm:$0xff]
      %v1145 = vld [vmem:[%s3 + $0x258] sm:$0xff]
      %v1146 = vld [vmem:[%s3 + $0x260] sm:$0xff]
      %v1147 = vld [vmem:[%s3 + $0x268] sm:$0xff]
      %v1148 = vld [vmem:[%s3 + $0x270] sm:$0xff]
      %v1149 = vld [vmem:[%s3 + $0x278] sm:$0xff]
      %v1150 = vld [vmem:[%s3 + $0x280] sm:$0xff]
      %v1151 = vld [vmem:[%s3 + $0x288] sm:$0xff]
      %v1152 = vld [vmem:[%s3 + $0x290] sm:$0xff]
      %v1153 = vld [vmem:[%s3 + $0x298] sm:$0xff]
      %v1154 = vld [vmem:[%s3 + $0x2a0] sm:$0xff]
      %v1155 = vld [vmem:[%s3 + $0x2a8] sm:$0xff]
      %v1156 = vld [vmem:[%s3 + $0x2b0] sm:$0xff]
      %v1157 = vld [vmem:[%s3 + $0x2b8] sm:$0xff]
      %v1158 = vld [vmem:[%s3 + $0x2c0] sm:$0xff]
      %v1159 = vld [vmem:[%s3 + $0x2c8] sm:$0xff]
      %v1160 = vld [vmem:[%s3 + $0x2d0] sm:$0xff]
      %v1161 = vld [vmem:[%s3 + $0x2d8] sm:$0xff]
      %v1162 = vld [vmem:[%s3 + $0x2e0] sm:$0xff]
      %v1163 = vld [vmem:[%s3 + $0x2e8] sm:$0xff]
      %v1164 = vld [vmem:[%s3 + $0x2f0] sm:$0xff]
      %v1165 = vld [vmem:[%s3 + $0x2f8] sm:$0xff]
      %v1166 = vld [vmem:[%s3 + $0x300] sm:$0xff]
      %v1167 = vld [vmem:[%s3 + $0x308] sm:$0xff]
      %v1168 = vld [vmem:[%s3 + $0x310] sm:$0xff]
      %v1169 = vld [vmem:[%s3 + $0x318] sm:$0xff]
      %v1170 = vld [vmem:[%s3 + $0x320] sm:$0xff]
      %v1171 = vld [vmem:[%s3 + $0x328] sm:$0xff]
      %v1172 = vld [vmem:[%s3 + $0x330] sm:$0xff]
      %v1173 = vld [vmem:[%s3 + $0x338] sm:$0xff]
      %v1174 = vld [vmem:[%s3 + $0x340] sm:$0xff]
      %v1175 = vld [vmem:[%s3 + $0x348] sm:$0xff]
      %v1176 = vld [vmem:[%s3 + $0x350] sm:$0xff]
      %v1177 = vld [vmem:[%s3 + $0x358] sm:$0xff]
      %v1178 = vld [vmem:[%s3 + $0x360] sm:$0xff]
      %v1179 = vld [vmem:[%s3 + $0x368] sm:$0xff]
      %v1180 = vld [vmem:[%s3 + $0x370] sm:$0xff]
      %v1181 = vld [vmem:[%s3 + $0x378] sm:$0xff]
      %v1182 = vld [vmem:[%s3 + $0x380] sm:$0xff]
      %v1183 = vld [vmem:[%s3 + $0x388] sm:$0xff]
      %v1184 = vld [vmem:[%s3 + $0x390] sm:$0xff]
      %v1185 = vld [vmem:[%s3 + $0x398] sm:$0xff]
      %v1186 = vld [vmem:[%s3 + $0x3a0] sm:$0xff]
      %v1187 = vld [vmem:[%s3 + $0x3a8] sm:$0xff]
      %v1188 = vld [vmem:[%s3 + $0x3b0] sm:$0xff]
      %v1189 = vld [vmem:[%s3 + $0x3b8] sm:$0xff]
      %v1190 = vld [vmem:[%s3 + $0x3c0] sm:$0xff]
      %v1191 = vld [vmem:[%s3 + $0x3c8] sm:$0xff]
      %v1192 = vld [vmem:[%s3 + $0x3d0] sm:$0xff]
      %v1193 = vld [vmem:[%s3 + $0x3d8] sm:$0xff]
      %v1194 = vld [vmem:[%s3 + $0x3e0] sm:$0xff]
      %v1195 = vld [vmem:[%s3 + $0x3e8] sm:$0xff]
      %v1196 = vld [vmem:[%s3 + $0x3f0] sm:$0xff]
      %v1197 = vld [vmem:[%s3 + $0x3f8] sm:$0xff]
      %v1198 = vld [vmem:[%s3 + $0x400] sm:$0xff]
      %v1199 = vld [vmem:[%s3 + $0x408] sm:$0xff]
      %v1200 = vld [vmem:[%s3 + $0x410] sm:$0xff]
      %v1201 = vld [vmem:[%s3 + $0x418] sm:$0xff]
      %v1202 = vld [vmem:[%s3 + $0x420] sm:$0xff]
      %v1203 = vld [vmem:[%s3 + $0x428] sm:$0xff]
      %v1204 = vld [vmem:[%s3 + $0x430] sm:$0xff]
      %v1205 = vld [vmem:[%s3 + $0x438] sm:$0xff]
      %v1206 = vld [vmem:[%s3 + $0x440] sm:$0xff]
      %v1207 = vld [vmem:[%s3 + $0x448] sm:$0xff]
      %v1208 = vld [vmem:[%s3 + $0x450] sm:$0xff]
      %v1209 = vld [vmem:[%s3 + $0x458] sm:$0xff]
      %v1210 = vld [vmem:[%s3 + $0x460] sm:$0xff]
      %v1211 = vld [vmem:[%s3 + $0x468] sm:$0xff]
      %v1212 = vld [vmem:[%s3 + $0x470] sm:$0xff]
      %v1213 = vld [vmem:[%s3 + $0x478] sm:$0xff]
      %v1214 = vld [vmem:[%s3 + $0x480] sm:$0xff]
      %v1215 = vld [vmem:[%s3 + $0x488] sm:$0xff]
      %v1216 = vld [vmem:[%s3 + $0x490] sm:$0xff]
      %v1217 = vld [vmem:[%s3 + $0x498] sm:$0xff]
      %v1218 = vld [vmem:[%s3 + $0x4a0] sm:$0xff]
      %v1219 = vld [vmem:[%s3 + $0x4a8] sm:$0xff]
      %v1220 = vld [vmem:[%s3 + $0x4b0] sm:$0xff]
      %v1221 = vld [vmem:[%s3 + $0x4b8] sm:$0xff]
      %v1222 = vld [vmem:[%s3 + $0x4c0] sm:$0xff]
      %v1223 = vld [vmem:[%s3 + $0x4c8] sm:$0xff]
      %v1224 = vld [vmem:[%s3 + $0x4d0] sm:$0xff]
      %v1225 = vld [vmem:[%s3 + $0x4d8] sm:$0xff]
      %v1226 = vld [vmem:[%s3 + $0x4e0] sm:$0xff]
      %v1227 = vld [vmem:[%s3 + $0x4e8] sm:$0xff]
      %v1228 = vld [vmem:[%s3 + $0x4f0] sm:$0xff]
      %v1229 = vld [vmem:[%s3 + $0x4f8] sm:$0xff]
      %v1230 = vld [vmem:[%s3 + $0x500] sm:$0xff]
      %v1231 = vld [vmem:[%s3 + $0x508] sm:$0xff]
      %v1232 = vld [vmem:[%s3 + $0x510] sm:$0xff]
      %v1233 = vld [vmem:[%s3 + $0x518] sm:$0xff]
      %v1234 = vld [vmem:[%s3 + $0x520] sm:$0xff]
      %v1235 = vld [vmem:[%s3 + $0x528] sm:$0xff]
      %v1236 = vld [vmem:[%s3 + $0x530] sm:$0xff]
      %v1237 = vld [vmem:[%s3 + $0x538] sm:$0xff]
      %v1238 = vld [vmem:[%s3 + $0x540] sm:$0xf]
      %v1239 = vld [vmem:[%s3 + $0x548] sm:$0xf]
      %v1240 = vld [vmem:[%s3 + $0x550] sm:$0xf]
      %v1241 = vld [vmem:[%s3 + $0x558] sm:$0xf]
      %v1242 = vld [vmem:[%s3 + $0x560] sm:$0xf]
      %v1243 = vld [vmem:[%s3 + $0x568] sm:$0xf]
      %v1244 = vld [vmem:[%s3 + $0x570] sm:$0xf]
      %vm1245 = vcmask 130048
      %v1247 = vsel %vm1245, %v1076, 0
      %v1250 = vsel %vm1245, %v1083, 0
      %v1253 = vsel %vm1245, %v1090, 0
      %v1256 = vsel %vm1245, %v1097, 0
      %v1259 = vsel %vm1245, %v1104, 0
      %v1262 = vsel %vm1245, %v1111, 0
      %v1265 = vsel %vm1245, %v1118, 0
      %v1268 = vsel %vm1245, %v1125, 0
      %v1271 = vsel %vm1245, %v1132, 0
      %v1274 = vsel %vm1245, %v1139, 0
      %v1277 = vsel %vm1245, %v1146, 0
      %v1280 = vsel %vm1245, %v1153, 0
      %v1283 = vsel %vm1245, %v1160, 0
      %v1286 = vsel %vm1245, %v1167, 0
      %v1289 = vsel %vm1245, %v1174, 0
      %v1292 = vsel %vm1245, %v1181, 0
      %v1295 = vsel %vm1245, %v1188, 0
      %v1298 = vsel %vm1245, %v1195, 0
      %v1301 = vsel %vm1245, %v1202, 0
      %v1304 = vsel %vm1245, %v1209, 0
      %v1307 = vsel %vm1245, %v1216, 0
      %v1310 = vsel %vm1245, %v1223, 0
      %v1313 = vsel %vm1245, %v1230, 0
      %v1316 = vsel %vm1245, %v1237, 0
      %v1319 = vsel %vm1245, %v1244, 0
      %1321 = vmatprep.subr.mxu0 0.0
      %1322 = vmatpush1.msra.mxu0 %v972
      %1323 = vmatprep.subr.mxu0 0.0
      %1324 = vmatpush1.msra.mxu0 %v973
      %1325 = vmatprep.subr.mxu0 0.0
      %1326 = vmatpush1.msra.mxu0 %v974
      %1327 = vmatprep.subr.mxu0 0.0
      %1328 = vmatpush1.msra.mxu0 %v975
      %1329 = vmatprep.subr.mxu0 0.0
      %1330 = vmatpush1.msra.mxu0 %v976
      %1331 = vmatprep.subr.mxu0 0.0
      %1332 = vmatpush1.msra.mxu0 %v977
      %1333 = vmatprep.subr.mxu0 0.0
      %1334 = vmatpush1.msra.mxu0 %v978
      %1335 = vmatprep.subr.mxu0 0.0
      %1336 = vmatpush1.msra.mxu0 %v979
      %1337 = vmatprep.subr.mxu0 0.0
      %1338 = vmatpush1.msra.mxu0 %v980
      %1339 = vmatprep.subr.mxu0 0.0
      %1340 = vmatpush1.msra.mxu0 %v981
      %1341 = vmatprep.subr.mxu0 0.0
      %1342 = vmatpush1.msra.mxu0 %v982
      %1343 = vmatprep.subr.mxu0 0.0
      %1344 = vmatpush1.msra.mxu0 %v983
      %1345 = vmatprep.subr.mxu0 0.0
      %1346 = vmatpush1.msra.mxu0 %v984
      %1347 = vmatprep.subr.mxu0 0.0
      %1348 = vmatpush1.msra.mxu0 %v985
      %1349 = vmatprep.subr.mxu0 0.0
      %1350 = vmatpush1.msra.mxu0 %v986
      %1351 = vmatprep.subr.mxu0 0.0
      %1352 = vmatpush1.msra.mxu0 %v987
      %1353 = vmatprep.subr.mxu0 0.0
      %1354 = vmatpush1.msra.mxu0 %v988
      %1355 = vmatprep.subr.mxu0 0.0
      %1356 = vmatpush1.msra.mxu0 %v989
      %1357 = vmatprep.subr.mxu0 0.0
      %1358 = vmatpush1.msra.mxu0 %v990
      %1359 = vmatprep.subr.mxu0 0.0
      %1360 = vmatpush1.msra.mxu0 %v991
      %1361 = vmatprep.subr.mxu0 0.0
      %1362 = vmatpush1.msra.mxu0 %v992
      %1363 = vmatprep.subr.mxu0 0.0
      %1364 = vmatpush1.msra.mxu0 %v993
      %1365 = vmatprep.subr.mxu0 0.0
      %1366 = vmatpush1.msra.mxu0 %v994
      %1367 = vmatprep.subr.mxu0 0.0
      %1368 = vmatpush1.msra.mxu0 %v995
      %1369 = vmatprep.subr.mxu0 0.0
      %1370 = vmatpush1.msra.mxu0 %v996
      %1371 = vmatprep.subr.mxu0 0.0
      %1372 = vmatpush1.msra.mxu0 %v997
      %1373 = vmatprep.subr.mxu0 0.0
      %1374 = vmatpush1.msra.mxu0 %v998
      %1375 = vmatprep.subr.mxu0 0.0
      %1376 = vmatpush1.msra.mxu0 %v999
      %1377 = vmatprep.subr.mxu0 0.0
      %1378 = vmatpush1.msra.mxu0 %v1000
      %1379 = vmatprep.subr.mxu0 0.0
      %1380 = vmatpush1.msra.mxu0 %v1001
      %1381 = vmatprep.subr.mxu0 0.0
      %1382 = vmatpush1.msra.mxu0 %v1002
      %1383 = vmatprep.subr.mxu0 0.0
      %1384 = vmatpush1.msra.mxu0 %v1003
      %1385 = vmatprep.mubr.f32.mxu0 %v1071
      %1386 = vmatmul.mubr.f32.gmra.mrb[0].mxu0 %v1070
      %v1387 = vpop.f32.mrb[0].mxu0
      %v1388 = vadd.f32 0.0, %v1387
      %v1389 = vpop.f32.mrb[0].mxu0
      %1390 = vmatprep.mubr.f32.mxu0 %v1078
      %1391 = vmatmul.mubr.f32.gmra.mrb[0].mxu0 %v1077
      %v1392 = vpop.f32.mrb[0].mxu0
      %v1393 = vadd.f32 0.0, %v1392
      %v1394 = vpop.f32.mrb[0].mxu0
      %1395 = vmatprep.mubr.f32.mxu0 %v1085
      %1396 = vmatmul.mubr.f32.gmra.mrb[0].mxu0 %v1084
      %v1397 = vpop.f32.mrb[0].mxu0
      %v1398 = vadd.f32 0.0, %v1397
      %v1399 = vpop.f32.mrb[0].mxu0
      %1400 = vmatprep.mubr.f32.mxu0 %v1092
      %1401 = vmatmul.mubr.f32.gmra.mrb[0].mxu0 %v1091
      %v1402 = vpop.f32.mrb[0].mxu0
      %v1403 = vadd.f32 0.0, %v1402
      %v1404 = vpop.f32.mrb[0].mxu0
      %1405 = vmatprep.mubr.f32.mxu0 %v1099
      %1406 = vmatmul.mubr.f32.gmra.mrb[0].mxu0 %v1098
      %v1407 = vpop.f32.mrb[0].mxu0
      %v1408 = vadd.f32 0.0, %v1407
      %v1409 = vpop.f32.mrb[0].mxu0
      %1410 = vmatprep.mubr.f32.mxu0 %v1106
      %1411 = vmatmul.mubr.f32.gmra.mrb[0].mxu0 %v1105
      %v1412 = vpop.f32.mrb[0].mxu0
      %v1413 = vadd.f32 0.0, %v1412
      %v1414 = vpop.f32.mrb[0].mxu0
      %1415 = vmatprep.mubr.f32.mxu0 %v1113
      %1416 = vmatmul.mubr.f32.gmra.mrb[0].mxu0 %v1112
      %v1417 = vpop.f32.mrb[0].mxu0
      %v1418 = vadd.f32 0.0, %v1417
      %v1419 = vpop.f32.mrb[0].mxu0
      %1420 = vmatprep.mubr.f32.mxu0 %v1120
      %1421 = vmatmul.mubr.f32.gmra.mrb[0].mxu0 %v1119
      %v1422 = vpop.f32.mrb[0].mxu0
      %v1423 = vadd.f32 0.0, %v1422
      %v1424 = vpop.f32.mrb[0].mxu0
      %1425 = vmatprep.mubr.f32.mxu0 %v1127
      %1426 = vmatmul.mubr.f32.gmra.mrb[0].mxu0 %v1126
      %v1427 = vpop.f32.mrb[0].mxu0
      %v1428 = vadd.f32 0.0, %v1427
      %v1429 = vpop.f32.mrb[0].mxu0
      %1430 = vmatprep.mubr.f32.mxu0 %v1134
      %1431 = vmatmul.mubr.f32.gmra.mrb[0].mxu0 %v1133
      %v1432 = vpop.f32.mrb[0].mxu0
      %v1433 = vadd.f32 0.0, %v1432
      %v1434 = vpop.f32.mrb[0].mxu0
      %1435 = vmatprep.mubr.f32.mxu0 %v1141
      %1436 = vmatmul.mubr.f32.gmra.mrb[0].mxu0 %v1140
      %v1437 = vpop.f32.mrb[0].mxu0
      %v1438 = vadd.f32 0.0, %v1437
      %v1439 = vpop.f32.mrb[0].mxu0
      %1440 = vmatprep.mubr.f32.mxu0 %v1148
      %1441 = vmatmul.mubr.f32.gmra.mrb[0].mxu0 %v1147
      %v1442 = vpop.f32.mrb[0].mxu0
      %v1443 = vadd.f32 0.0, %v1442
      %v1444 = vpop.f32.mrb[0].mxu0
      %1445 = vmatprep.mubr.f32.mxu0 %v1155
      %1446 = vmatmul.mubr.f32.gmra.mrb[0].mxu0 %v1154
      %v1447 = vpop.f32.mrb[0].mxu0
      %v1448 = vadd.f32 0.0, %v1447
      %v1449 = vpop.f32.mrb[0].mxu0
      %1450 = vmatprep.mubr.f32.mxu0 %v1162
      %1451 = vmatmul.mubr.f32.gmra.mrb[0].mxu0 %v1161
      %v1452 = vpop.f32.mrb[0].mxu0
      %v1453 = vadd.f32 0.0, %v1452
      %v1454 = vpop.f32.mrb[0].mxu0
      %1455 = vmatprep.mubr.f32.mxu0 %v1169
      %1456 = vmatmul.mubr.f32.gmra.mrb[0].mxu0 %v1168
      %v1457 = vpop.f32.mrb[0].mxu0
      %v1458 = vadd.f32 0.0, %v1457
      %v1459 = vpop.f32.mrb[0].mxu0
      %1460 = vmatprep.mubr.f32.mxu0 %v1176
      %1461 = vmatmul.mubr.f32.gmra.mrb[0].mxu0 %v1175
      %v1462 = vpop.f32.mrb[0].mxu0
      %v1463 = vadd.f32 0.0, %v1462
      %v1464 = vpop.f32.mrb[0].mxu0
      %1465 = vmatprep.mubr.f32.mxu0 %v1183
      %1466 = vmatmul.mubr.f32.gmra.mrb[0].mxu0 %v1182
      %v1467 = vpop.f32.mrb[0].mxu0
      %v1468 = vadd.f32 0.0, %v1467
      %v1469 = vpop.f32.mrb[0].mxu0
      %1470 = vmatprep.mubr.f32.mxu0 %v1190
      %1471 = vmatmul.mubr.f32.gmra.mrb[0].mxu0 %v1189
      %v1472 = vpop.f32.mrb[0].mxu0
      %v1473 = vadd.f32 0.0, %v1472
      %v1474 = vpop.f32.mrb[0].mxu0
      %1475 = vmatprep.mubr.f32.mxu0 %v1197
      %1476 = vmatmul.mubr.f32.gmra.mrb[0].mxu0 %v1196
      %v1477 = vpop.f32.mrb[0].mxu0
      %v1478 = vadd.f32 0.0, %v1477
      %v1479 = vpop.f32.mrb[0].mxu0
      %1480 = vmatprep.mubr.f32.mxu0 %v1204
      %1481 = vmatmul.mubr.f32.gmra.mrb[0].mxu0 %v1203
      %v1482 = vpop.f32.mrb[0].mxu0
      %v1483 = vadd.f32 0.0, %v1482
      %v1484 = vpop.f32.mrb[0].mxu0
      %1485 = vmatprep.mubr.f32.mxu0 %v1211
      %1486 = vmatmul.mubr.f32.gmra.mrb[0].mxu0 %v1210
      %v1487 = vpop.f32.mrb[0].mxu0
      %v1488 = vadd.f32 0.0, %v1487
      %v1489 = vpop.f32.mrb[0].mxu0
      %1490 = vmatprep.mubr.f32.mxu0 %v1218
      %1491 = vmatmul.mubr.f32.gmra.mrb[0].mxu0 %v1217
      %v1492 = vpop.f32.mrb[0].mxu0
      %v1493 = vadd.f32 0.0, %v1492
      %v1494 = vpop.f32.mrb[0].mxu0
      %1495 = vmatprep.mubr.f32.mxu0 %v1225
      %1496 = vmatmul.mubr.f32.gmra.mrb[0].mxu0 %v1224
      %v1497 = vpop.f32.mrb[0].mxu0
      %v1498 = vadd.f32 0.0, %v1497
      %v1499 = vpop.f32.mrb[0].mxu0
      %1500 = vmatprep.mubr.f32.mxu0 %v1232
      %1501 = vmatmul.mubr.f32.gmra.mrb[0].mxu0 %v1231
      %v1502 = vpop.f32.mrb[0].mxu0
      %v1503 = vadd.f32 0.0, %v1502
      %v1504 = vpop.f32.mrb[0].mxu0
      %1505 = vmatprep.mubr.f32.mxu0 %v1239
      %1506 = vmatmul.mubr.f32.gmra.mrb[0].mxu0 %v1238
      %v1507 = vpop.f32.mrb[0].mxu0
      %v1508 = vadd.f32 0.0, %v1507
      %v1509 = vpop.f32.mrb[0].mxu0
      %1510 = vdwg.mxu0
      %1511 = vmatprep.subr.mxu0 0.0
      %1512 = vmatpush1.msra.mxu0 %v1004
      %1513 = vmatprep.subr.mxu0 0.0
      %1514 = vmatpush1.msra.mxu0 %v1005
      %1515 = vmatprep.subr.mxu0 0.0
      %1516 = vmatpush1.msra.mxu0 %v1006
      %1517 = vmatprep.subr.mxu0 0.0
      %1518 = vmatpush1.msra.mxu0 %v1007
      %1519 = vmatprep.subr.mxu0 0.0
      %1520 = vmatpush1.msra.mxu0 %v1008
      %1521 = vmatprep.subr.mxu0 0.0
      %1522 = vmatpush1.msra.mxu0 %v1009
      %1523 = vmatprep.subr.mxu0 0.0
      %1524 = vmatpush1.msra.mxu0 %v1010
      %1525 = vmatprep.subr.mxu0 0.0
      %1526 = vmatpush1.msra.mxu0 %v1011
      %1527 = vmatprep.subr.mxu0 0.0
      %1528 = vmatpush1.msra.mxu0 %v1012
      %1529 = vmatprep.subr.mxu0 0.0
      %1530 = vmatpush1.msra.mxu0 %v1013
      %1531 = vmatprep.subr.mxu0 0.0
      %1532 = vmatpush1.msra.mxu0 %v1014
      %1533 = vmatprep.subr.mxu0 0.0
      %1534 = vmatpush1.msra.mxu0 %v1015
      %1535 = vmatprep.subr.mxu0 0.0
      %1536 = vmatpush1.msra.mxu0 %v1016
      %1537 = vmatprep.subr.mxu0 0.0
      %1538 = vmatpush1.msra.mxu0 %v1017
      %1539 = vmatprep.subr.mxu0 0.0
      %1540 = vmatpush1.msra.mxu0 %v1018
      %1541 = vmatprep.subr.mxu0 0.0
      %1542 = vmatpush1.msra.mxu0 %v1019
      %1543 = vmatprep.subr.mxu0 0.0
      %1544 = vmatpush1.msra.mxu0 %v1020
      %1545 = vmatprep.subr.mxu0 0.0
      %1546 = vmatpush1.msra.mxu0 %v1021
      %1547 = vmatprep.subr.mxu0 0.0
      %1548 = vmatpush1.msra.mxu0 %v1022
      %1549 = vmatprep.subr.mxu0 0.0
      %1550 = vmatpush1.msra.mxu0 %v1023
      %1551 = vmatprep.subr.mxu0 0.0
      %1552 = vmatpush1.msra.mxu0 %v1024
      %1553 = vmatprep.subr.mxu0 0.0
      %1554 = vmatpush1.msra.mxu0 %v1025
      %1555 = vmatprep.subr.mxu0 0.0
      %1556 = vmatpush1.msra.mxu0 %v1026
      %1557 = vmatprep.subr.mxu0 0.0
      %1558 = vmatpush1.msra.mxu0 %v1027
      %1559 = vmatprep.subr.mxu0 0.0
      %1560 = vmatpush1.msra.mxu0 %v1028
      %1561 = vmatprep.subr.mxu0 0.0
      %1562 = vmatpush1.msra.mxu0 %v1029
      %1563 = vmatprep.subr.mxu0 0.0
      %1564 = vmatpush1.msra.mxu0 %v1030
      %1565 = vmatprep.subr.mxu0 0.0
      %1566 = vmatpush1.msra.mxu0 %v1031
      %1567 = vmatprep.subr.mxu0 0.0
      %1568 = vmatpush1.msra.mxu0 %v1032
      %1569 = vmatprep.subr.mxu0 0.0
      %1570 = vmatpush1.msra.mxu0 %v1033
      %1571 = vmatprep.subr.mxu0 0.0
      %1572 = vmatpush1.msra.mxu0 %v1034
      %1573 = vmatprep.subr.mxu0 0.0
      %1574 = vmatpush1.msra.mxu0 %v1035
      %1575 = vmatprep.mubr.f32.mxu0 %v1073
      %1576 = vmatmul.mubr.f32.gmra.mrb[0].mxu0 %v1072
      %v1577 = vpop.f32.mrb[0].mxu0
      %v1578 = vadd.f32 %v1388, %v1577
      %v1579 = vpop.f32.mrb[0].mxu0
      %1580 = vmatprep.mubr.f32.mxu0 %v1080
      %1581 = vmatmul.mubr.f32.gmra.mrb[0].mxu0 %v1079
      %v1582 = vpop.f32.mrb[0].mxu0
      %v1583 = vadd.f32 %v1393, %v1582
      %v1584 = vpop.f32.mrb[0].mxu0
      %1585 = vmatprep.mubr.f32.mxu0 %v1087
      %1586 = vmatmul.mubr.f32.gmra.mrb[0].mxu0 %v1086
      %v1587 = vpop.f32.mrb[0].mxu0
      %v1588 = vadd.f32 %v1398, %v1587
      %v1589 = vpop.f32.mrb[0].mxu0
      %1590 = vmatprep.mubr.f32.mxu0 %v1094
      %1591 = vmatmul.mubr.f32.gmra.mrb[0].mxu0 %v1093
      %v1592 = vpop.f32.mrb[0].mxu0
      %v1593 = vadd.f32 %v1403, %v1592
      %v1594 = vpop.f32.mrb[0].mxu0
      %1595 = vmatprep.mubr.f32.mxu0 %v1101
      %1596 = vmatmul.mubr.f32.gmra.mrb[0].mxu0 %v1100
      %v1597 = vpop.f32.mrb[0].mxu0
      %v1598 = vadd.f32 %v1408, %v1597
      %v1599 = vpop.f32.mrb[0].mxu0
      %1600 = vmatprep.mubr.f32.mxu0 %v1108
      %1601 = vmatmul.mubr.f32.gmra.mrb[0].mxu0 %v1107
      %v1602 = vpop.f32.mrb[0].mxu0
      %v1603 = vadd.f32 %v1413, %v1602
      %v1604 = vpop.f32.mrb[0].mxu0
      %1605 = vmatprep.mubr.f32.mxu0 %v1115
      %1606 = vmatmul.mubr.f32.gmra.mrb[0].mxu0 %v1114
      %v1607 = vpop.f32.mrb[0].mxu0
      %v1608 = vadd.f32 %v1418, %v1607
      %v1609 = vpop.f32.mrb[0].mxu0
      %1610 = vmatprep.mubr.f32.mxu0 %v1122
      %1611 = vmatmul.mubr.f32.gmra.mrb[0].mxu0 %v1121
      %v1612 = vpop.f32.mrb[0].mxu0
      %v1613 = vadd.f32 %v1423, %v1612
      %v1614 = vpop.f32.mrb[0].mxu0
      %1615 = vmatprep.mubr.f32.mxu0 %v1129
      %1616 = vmatmul.mubr.f32.gmra.mrb[0].mxu0 %v1128
      %v1617 = vpop.f32.mrb[0].mxu0
      %v1618 = vadd.f32 %v1428, %v1617
      %v1619 = vpop.f32.mrb[0].mxu0
      %1620 = vmatprep.mubr.f32.mxu0 %v1136
      %1621 = vmatmul.mubr.f32.gmra.mrb[0].mxu0 %v1135
      %v1622 = vpop.f32.mrb[0].mxu0
      %v1623 = vadd.f32 %v1433, %v1622
      %v1624 = vpop.f32.mrb[0].mxu0
      %1625 = vmatprep.mubr.f32.mxu0 %v1143
      %1626 = vmatmul.mubr.f32.gmra.mrb[0].mxu0 %v1142
      %v1627 = vpop.f32.mrb[0].mxu0
      %v1628 = vadd.f32 %v1438, %v1627
      %v1629 = vpop.f32.mrb[0].mxu0
      %1630 = vmatprep.mubr.f32.mxu0 %v1150
      %1631 = vmatmul.mubr.f32.gmra.mrb[0].mxu0 %v1149
      %v1632 = vpop.f32.mrb[0].mxu0
      %v1633 = vadd.f32 %v1443, %v1632
      %v1634 = vpop.f32.mrb[0].mxu0
      %1635 = vmatprep.mubr.f32.mxu0 %v1157
      %1636 = vmatmul.mubr.f32.gmra.mrb[0].mxu0 %v1156
      %v1637 = vpop.f32.mrb[0].mxu0
      %v1638 = vadd.f32 %v1448, %v1637
      %v1639 = vpop.f32.mrb[0].mxu0
      %1640 = vmatprep.mubr.f32.mxu0 %v1164
      %1641 = vmatmul.mubr.f32.gmra.mrb[0].mxu0 %v1163
      %v1642 = vpop.f32.mrb[0].mxu0
      %v1643 = vadd.f32 %v1453, %v1642
      %v1644 = vpop.f32.mrb[0].mxu0
      %1645 = vmatprep.mubr.f32.mxu0 %v1171
      %1646 = vmatmul.mubr.f32.gmra.mrb[0].mxu0 %v1170
      %v1647 = vpop.f32.mrb[0].mxu0
      %v1648 = vadd.f32 %v1458, %v1647
      %v1649 = vpop.f32.mrb[0].mxu0
      %1650 = vmatprep.mubr.f32.mxu0 %v1178
      %1651 = vmatmul.mubr.f32.gmra.mrb[0].mxu0 %v1177
      %v1652 = vpop.f32.mrb[0].mxu0
      %v1653 = vadd.f32 %v1463, %v1652
      %v1654 = vpop.f32.mrb[0].mxu0
      %1655 = vmatprep.mubr.f32.mxu0 %v1185
      %1656 = vmatmul.mubr.f32.gmra.mrb[0].mxu0 %v1184
      %v1657 = vpop.f32.mrb[0].mxu0
      %v1658 = vadd.f32 %v1468, %v1657
      %v1659 = vpop.f32.mrb[0].mxu0
      %1660 = vmatprep.mubr.f32.mxu0 %v1192
      %1661 = vmatmul.mubr.f32.gmra.mrb[0].mxu0 %v1191
      %v1662 = vpop.f32.mrb[0].mxu0
      %v1663 = vadd.f32 %v1473, %v1662
      %v1664 = vpop.f32.mrb[0].mxu0
      %1665 = vmatprep.mubr.f32.mxu0 %v1199
      %1666 = vmatmul.mubr.f32.gmra.mrb[0].mxu0 %v1198
      %v1667 = vpop.f32.mrb[0].mxu0
      %v1668 = vadd.f32 %v1478, %v1667
      %v1669 = vpop.f32.mrb[0].mxu0
      %1670 = vmatprep.mubr.f32.mxu0 %v1206
      %1671 = vmatmul.mubr.f32.gmra.mrb[0].mxu0 %v1205
      %v1672 = vpop.f32.mrb[0].mxu0
      %v1673 = vadd.f32 %v1483, %v1672
      %v1674 = vpop.f32.mrb[0].mxu0
      %1675 = vmatprep.mubr.f32.mxu0 %v1213
      %1676 = vmatmul.mubr.f32.gmra.mrb[0].mxu0 %v1212
      %v1677 = vpop.f32.mrb[0].mxu0
      %v1678 = vadd.f32 %v1488, %v1677
      %v1679 = vpop.f32.mrb[0].mxu0
      %1680 = vmatprep.mubr.f32.mxu0 %v1220
      %1681 = vmatmul.mubr.f32.gmra.mrb[0].mxu0 %v1219
      %v1682 = vpop.f32.mrb[0].mxu0
      %v1683 = vadd.f32 %v1493, %v1682
      %v1684 = vpop.f32.mrb[0].mxu0
      %1685 = vmatprep.mubr.f32.mxu0 %v1227
      %1686 = vmatmul.mubr.f32.gmra.mrb[0].mxu0 %v1226
      %v1687 = vpop.f32.mrb[0].mxu0
      %v1688 = vadd.f32 %v1498, %v1687
      %v1689 = vpop.f32.mrb[0].mxu0
      %1690 = vmatprep.mubr.f32.mxu0 %v1234
      %1691 = vmatmul.mubr.f32.gmra.mrb[0].mxu0 %v1233
      %v1692 = vpop.f32.mrb[0].mxu0
      %v1693 = vadd.f32 %v1503, %v1692
      %v1694 = vpop.f32.mrb[0].mxu0
      %1695 = vmatprep.mubr.f32.mxu0 %v1241
      %1696 = vmatmul.mubr.f32.gmra.mrb[0].mxu0 %v1240
      %v1697 = vpop.f32.mrb[0].mxu0
      %v1698 = vadd.f32 %v1508, %v1697
      %v1699 = vpop.f32.mrb[0].mxu0
      %1700 = vdwg.mxu0
      %1701 = vmatprep.subr.mxu0 0.0
      %1702 = vmatpush1.msra.mxu0 %v1036
      %1703 = vmatprep.subr.mxu0 0.0
      %1704 = vmatpush1.msra.mxu0 %v1037
      %1705 = vmatprep.subr.mxu0 0.0
      %1706 = vmatpush1.msra.mxu0 %v1038
      %1707 = vmatprep.subr.mxu0 0.0
      %1708 = vmatpush1.msra.mxu0 %v1039
      %1709 = vmatprep.subr.mxu0 0.0
      %1710 = vmatpush1.msra.mxu0 %v1040
      %1711 = vmatprep.subr.mxu0 0.0
      %1712 = vmatpush1.msra.mxu0 %v1041
      %1713 = vmatprep.subr.mxu0 0.0
      %1714 = vmatpush1.msra.mxu0 %v1042
      %1715 = vmatprep.subr.mxu0 0.0
      %1716 = vmatpush1.msra.mxu0 %v1043
      %1717 = vmatprep.subr.mxu0 0.0
      %1718 = vmatpush1.msra.mxu0 %v1044
      %1719 = vmatprep.subr.mxu0 0.0
      %1720 = vmatpush1.msra.mxu0 %v1045
      %1721 = vmatprep.subr.mxu0 0.0
      %1722 = vmatpush1.msra.mxu0 %v1046
      %1723 = vmatprep.subr.mxu0 0.0
      %1724 = vmatpush1.msra.mxu0 %v1047
      %1725 = vmatprep.subr.mxu0 0.0
      %1726 = vmatpush1.msra.mxu0 %v1048
      %1727 = vmatprep.subr.mxu0 0.0
      %1728 = vmatpush1.msra.mxu0 %v1049
      %1729 = vmatprep.subr.mxu0 0.0
      %1730 = vmatpush1.msra.mxu0 %v1050
      %1731 = vmatprep.subr.mxu0 0.0
      %1732 = vmatpush1.msra.mxu0 %v1051
      %1733 = vmatprep.subr.mxu0 0.0
      %1734 = vmatpush1.msra.mxu0 %v1052
      %1735 = vmatprep.subr.mxu0 0.0
      %1736 = vmatpush1.msra.mxu0 %v1053
      %1737 = vmatprep.subr.mxu0 0.0
      %1738 = vmatpush1.msra.mxu0 %v1054
      %1739 = vmatprep.subr.mxu0 0.0
      %1740 = vmatpush1.msra.mxu0 %v1055
      %1741 = vmatprep.subr.mxu0 0.0
      %1742 = vmatpush1.msra.mxu0 %v1056
      %1743 = vmatprep.subr.mxu0 0.0
      %1744 = vmatpush1.msra.mxu0 %v1057
      %1745 = vmatprep.subr.mxu0 0.0
      %1746 = vmatpush1.msra.mxu0 %v1058
      %1747 = vmatprep.subr.mxu0 0.0
      %1748 = vmatpush1.msra.mxu0 %v1059
      %1749 = vmatprep.subr.mxu0 0.0
      %1750 = vmatpush1.msra.mxu0 %v1060
      %1751 = vmatprep.subr.mxu0 0.0
      %1752 = vmatpush1.msra.mxu0 %v1061
      %1753 = vmatprep.subr.mxu0 0.0
      %1754 = vmatpush1.msra.mxu0 %v1062
      %1755 = vmatprep.subr.mxu0 0.0
      %1756 = vmatpush1.msra.mxu0 %v1063
      %1757 = vmatprep.subr.mxu0 0.0
      %1758 = vmatpush1.msra.mxu0 %v1064
      %1759 = vmatprep.subr.mxu0 0.0
      %1760 = vmatpush1.msra.mxu0 %v1065
      %1761 = vmatprep.subr.mxu0 0.0
      %1762 = vmatpush1.msra.mxu0 %v1066
      %1763 = vmatprep.subr.mxu0 0.0
      %1764 = vmatpush1.msra.mxu0 %v1067
      %1765 = vmatprep.mubr.f32.mxu0 %v1075
      %1766 = vmatmul.mubr.f32.gmra.mrb[0].mxu0 %v1074
      %v1767 = vpop.f32.mrb[0].mxu0
      %v1768 = vadd.f32 %v1578, %v1767
      %v1769 = vpop.f32.mrb[0].mxu0
      %1770 = vmatprep.mubr.f32.mxu0 %v1082
      %1771 = vmatmul.mubr.f32.gmra.mrb[0].mxu0 %v1081
      %v1772 = vpop.f32.mrb[0].mxu0
      %v1773 = vadd.f32 %v1583, %v1772
      %v1774 = vpop.f32.mrb[0].mxu0
      %1775 = vmatprep.mubr.f32.mxu0 %v1089
      %1776 = vmatmul.mubr.f32.gmra.mrb[0].mxu0 %v1088
      %v1777 = vpop.f32.mrb[0].mxu0
      %v1778 = vadd.f32 %v1588, %v1777
      %v1779 = vpop.f32.mrb[0].mxu0
      %1780 = vmatprep.mubr.f32.mxu0 %v1096
      %1781 = vmatmul.mubr.f32.gmra.mrb[0].mxu0 %v1095
      %v1782 = vpop.f32.mrb[0].mxu0
      %v1783 = vadd.f32 %v1593, %v1782
      %v1784 = vpop.f32.mrb[0].mxu0
      %1785 = vmatprep.mubr.f32.mxu0 %v1103
      %1786 = vmatmul.mubr.f32.gmra.mrb[0].mxu0 %v1102
      %v1787 = vpop.f32.mrb[0].mxu0
      %v1788 = vadd.f32 %v1598, %v1787
      %v1789 = vpop.f32.mrb[0].mxu0
      %1790 = vmatprep.mubr.f32.mxu0 %v1110
      %1791 = vmatmul.mubr.f32.gmra.mrb[0].mxu0 %v1109
      %v1792 = vpop.f32.mrb[0].mxu0
      %v1793 = vadd.f32 %v1603, %v1792
      %v1794 = vpop.f32.mrb[0].mxu0
      %1795 = vmatprep.mubr.f32.mxu0 %v1117
      %1796 = vmatmul.mubr.f32.gmra.mrb[0].mxu0 %v1116
      %v1797 = vpop.f32.mrb[0].mxu0
      %v1798 = vadd.f32 %v1608, %v1797
      %v1799 = vpop.f32.mrb[0].mxu0
      %1800 = vmatprep.mubr.f32.mxu0 %v1124
      %1801 = vmatmul.mubr.f32.gmra.mrb[0].mxu0 %v1123
      %v1802 = vpop.f32.mrb[0].mxu0
      %v1803 = vadd.f32 %v1613, %v1802
      %v1804 = vpop.f32.mrb[0].mxu0
      %1805 = vmatprep.mubr.f32.mxu0 %v1131
      %1806 = vmatmul.mubr.f32.gmra.mrb[0].mxu0 %v1130
      %v1807 = vpop.f32.mrb[0].mxu0
      %v1808 = vadd.f32 %v1618, %v1807
      %v1809 = vpop.f32.mrb[0].mxu0
      %1810 = vmatprep.mubr.f32.mxu0 %v1138
      %1811 = vmatmul.mubr.f32.gmra.mrb[0].mxu0 %v1137
      %v1812 = vpop.f32.mrb[0].mxu0
      %v1813 = vadd.f32 %v1623, %v1812
      %v1814 = vpop.f32.mrb[0].mxu0
      %1815 = vmatprep.mubr.f32.mxu0 %v1145
      %1816 = vmatmul.mubr.f32.gmra.mrb[0].mxu0 %v1144
      %v1817 = vpop.f32.mrb[0].mxu0
      %v1818 = vadd.f32 %v1628, %v1817
      %v1819 = vpop.f32.mrb[0].mxu0
      %1820 = vmatprep.mubr.f32.mxu0 %v1152
      %1821 = vmatmul.mubr.f32.gmra.mrb[0].mxu0 %v1151
      %v1822 = vpop.f32.mrb[0].mxu0
      %v1823 = vadd.f32 %v1633, %v1822
      %v1824 = vpop.f32.mrb[0].mxu0
      %1825 = vmatprep.mubr.f32.mxu0 %v1159
      %1826 = vmatmul.mubr.f32.gmra.mrb[0].mxu0 %v1158
      %v1827 = vpop.f32.mrb[0].mxu0
      %v1828 = vadd.f32 %v1638, %v1827
      %v1829 = vpop.f32.mrb[0].mxu0
      %1830 = vmatprep.mubr.f32.mxu0 %v1166
      %1831 = vmatmul.mubr.f32.gmra.mrb[0].mxu0 %v1165
      %v1832 = vpop.f32.mrb[0].mxu0
      %v1833 = vadd.f32 %v1643, %v1832
      %v1834 = vpop.f32.mrb[0].mxu0
      %1835 = vmatprep.mubr.f32.mxu0 %v1173
      %1836 = vmatmul.mubr.f32.gmra.mrb[0].mxu0 %v1172
      %v1837 = vpop.f32.mrb[0].mxu0
      %v1838 = vadd.f32 %v1648, %v1837
      %v1839 = vpop.f32.mrb[0].mxu0
      %1840 = vmatprep.mubr.f32.mxu0 %v1180
      %1841 = vmatmul.mubr.f32.gmra.mrb[0].mxu0 %v1179
      %v1842 = vpop.f32.mrb[0].mxu0
      %v1843 = vadd.f32 %v1653, %v1842
      %v1844 = vpop.f32.mrb[0].mxu0
      %1845 = vmatprep.mubr.f32.mxu0 %v1187
      %1846 = vmatmul.mubr.f32.gmra.mrb[0].mxu0 %v1186
      %v1847 = vpop.f32.mrb[0].mxu0
      %v1848 = vadd.f32 %v1658, %v1847
      %v1849 = vpop.f32.mrb[0].mxu0
      %1850 = vmatprep.mubr.f32.mxu0 %v1194
      %1851 = vmatmul.mubr.f32.gmra.mrb[0].mxu0 %v1193
      %v1852 = vpop.f32.mrb[0].mxu0
      %v1853 = vadd.f32 %v1663, %v1852
      %v1854 = vpop.f32.mrb[0].mxu0
      %1855 = vmatprep.mubr.f32.mxu0 %v1201
      %1856 = vmatmul.mubr.f32.gmra.mrb[0].mxu0 %v1200
      %v1857 = vpop.f32.mrb[0].mxu0
      %v1858 = vadd.f32 %v1668, %v1857
      %v1859 = vpop.f32.mrb[0].mxu0
      %1860 = vmatprep.mubr.f32.mxu0 %v1208
      %1861 = vmatmul.mubr.f32.gmra.mrb[0].mxu0 %v1207
      %v1862 = vpop.f32.mrb[0].mxu0
      %v1863 = vadd.f32 %v1673, %v1862
      %v1864 = vpop.f32.mrb[0].mxu0
      %1865 = vmatprep.mubr.f32.mxu0 %v1215
      %1866 = vmatmul.mubr.f32.gmra.mrb[0].mxu0 %v1214
      %v1867 = vpop.f32.mrb[0].mxu0
      %v1868 = vadd.f32 %v1678, %v1867
      %v1869 = vpop.f32.mrb[0].mxu0
      %1870 = vmatprep.mubr.f32.mxu0 %v1222
      %1871 = vmatmul.mubr.f32.gmra.mrb[0].mxu0 %v1221
      %v1872 = vpop.f32.mrb[0].mxu0
      %v1873 = vadd.f32 %v1683, %v1872
      %v1874 = vpop.f32.mrb[0].mxu0
      %1875 = vmatprep.mubr.f32.mxu0 %v1229
      %1876 = vmatmul.mubr.f32.gmra.mrb[0].mxu0 %v1228
      %v1877 = vpop.f32.mrb[0].mxu0
      %v1878 = vadd.f32 %v1688, %v1877
      %v1879 = vpop.f32.mrb[0].mxu0
      %1880 = vmatprep.mubr.f32.mxu0 %v1236
      %1881 = vmatmul.mubr.f32.gmra.mrb[0].mxu0 %v1235
      %v1882 = vpop.f32.mrb[0].mxu0
      %v1883 = vadd.f32 %v1693, %v1882
      %v1884 = vpop.f32.mrb[0].mxu0
      %1885 = vmatprep.mubr.f32.mxu0 %v1243
      %1886 = vmatmul.mubr.f32.gmra.mrb[0].mxu0 %v1242
      %v1887 = vpop.f32.mrb[0].mxu0
      %v1888 = vadd.f32 %v1698, %v1887
      %v1889 = vpop.f32.mrb[0].mxu0
      %1890 = vdwg.mxu0
      %1891 = vmatprep.subr.mxu0 0.0
      %1892 = vmatpush1.msra.mxu0 %v1068
      %1893 = vmatprep.subr.mxu0 0.0
      %1894 = vmatpush1.msra.mxu0 %v1069
      %1895 = vmatprep.subr.mxu0 0.0
      %1896 = vmatpush1.msra.mxu0 0.0
      %1897 = vmatprep.subr.mxu0 0.0
      %1898 = vmatpush1.msra.mxu0 0.0
      %1899 = vmatprep.subr.mxu0 0.0
      %1900 = vmatpush1.msra.mxu0 0.0
      %1901 = vmatprep.subr.mxu0 0.0
      %1902 = vmatpush1.msra.mxu0 0.0
      %1903 = vmatprep.subr.mxu0 0.0
      %1904 = vmatpush1.msra.mxu0 0.0
      %1905 = vmatprep.subr.mxu0 0.0
      %1906 = vmatpush1.msra.mxu0 0.0
      %1907 = vmatprep.subr.mxu0 0.0
      %1908 = vmatpush1.msra.mxu0 0.0
      %1909 = vmatprep.subr.mxu0 0.0
      %1910 = vmatpush1.msra.mxu0 0.0
      %1911 = vmatprep.subr.mxu0 0.0
      %1912 = vmatpush1.msra.mxu0 0.0
      %1913 = vmatprep.subr.mxu0 0.0
      %1914 = vmatpush1.msra.mxu0 0.0
      %1915 = vmatprep.subr.mxu0 0.0
      %1916 = vmatpush1.msra.mxu0 0.0
      %1917 = vmatprep.subr.mxu0 0.0
      %1918 = vmatpush1.msra.mxu0 0.0
      %1919 = vmatprep.subr.mxu0 0.0
      %1920 = vmatpush1.msra.mxu0 0.0
      %1921 = vmatprep.subr.mxu0 0.0
      %1922 = vmatpush1.msra.mxu0 0.0
      %1923 = vmatprep.subr.mxu0 0.0
      %1924 = vmatpush1.msra.mxu0 0.0
      %1925 = vmatprep.subr.mxu0 0.0
      %1926 = vmatpush1.msra.mxu0 0.0
      %1927 = vmatprep.subr.mxu0 0.0
      %1928 = vmatpush1.msra.mxu0 0.0
      %1929 = vmatprep.subr.mxu0 0.0
      %1930 = vmatpush1.msra.mxu0 0.0
      %1931 = vmatprep.subr.mxu0 0.0
      %1932 = vmatpush1.msra.mxu0 0.0
      %1933 = vmatprep.subr.mxu0 0.0
      %1934 = vmatpush1.msra.mxu0 0.0
      %1935 = vmatprep.subr.mxu0 0.0
      %1936 = vmatpush1.msra.mxu0 0.0
      %1937 = vmatprep.subr.mxu0 0.0
      %1938 = vmatpush1.msra.mxu0 0.0
      %1939 = vmatprep.subr.mxu0 0.0
      %1940 = vmatpush1.msra.mxu0 0.0
      %1941 = vmatprep.subr.mxu0 0.0
      %1942 = vmatpush1.msra.mxu0 0.0
      %1943 = vmatprep.subr.mxu0 0.0
      %1944 = vmatpush1.msra.mxu0 0.0
      %1945 = vmatprep.subr.mxu0 0.0
      %1946 = vmatpush1.msra.mxu0 0.0
      %1947 = vmatprep.subr.mxu0 0.0
      %1948 = vmatpush1.msra.mxu0 0.0
      %1949 = vmatprep.subr.mxu0 0.0
      %1950 = vmatpush1.msra.mxu0 0.0
      %1951 = vmatprep.subr.mxu0 0.0
      %1952 = vmatpush1.msra.mxu0 0.0
      %1953 = vmatprep.subr.mxu0 0.0
      %1954 = vmatpush1.msra.mxu0 0.0
      %1955 = vmatprep.mubr.f32.mxu0 0.0
      %1956 = vmatmul.mubr.f32.gmra.mrb[0].mxu0 %v1247
      %v1957 = vpop.f32.mrb[0].mxu0
      %v1958 = vadd.f32 %v1768, %v1957
      %v1959 = vpop.f32.mrb[0].mxu0
      %1960 = vmatprep.mubr.f32.mxu0 0.0
      %1961 = vmatmul.mubr.f32.gmra.mrb[0].mxu0 %v1250
      %v1962 = vpop.f32.mrb[0].mxu0
      %v1963 = vadd.f32 %v1773, %v1962
      %v1964 = vpop.f32.mrb[0].mxu0
      %1965 = vmatprep.mubr.f32.mxu0 0.0
      %1966 = vmatmul.mubr.f32.gmra.mrb[0].mxu0 %v1253
      %v1967 = vpop.f32.mrb[0].mxu0
      %v1968 = vadd.f32 %v1778, %v1967
      %v1969 = vpop.f32.mrb[0].mxu0
      %1970 = vmatprep.mubr.f32.mxu0 0.0
      %1971 = vmatmul.mubr.f32.gmra.mrb[0].mxu0 %v1256
      %v1972 = vpop.f32.mrb[0].mxu0
      %v1973 = vadd.f32 %v1783, %v1972
      %v1974 = vpop.f32.mrb[0].mxu0
      %1975 = vmatprep.mubr.f32.mxu0 0.0
      %1976 = vmatmul.mubr.f32.gmra.mrb[0].mxu0 %v1259
      %v1977 = vpop.f32.mrb[0].mxu0
      %v1978 = vadd.f32 %v1788, %v1977
      %v1979 = vpop.f32.mrb[0].mxu0
      %1980 = vmatprep.mubr.f32.mxu0 0.0
      %1981 = vmatmul.mubr.f32.gmra.mrb[0].mxu0 %v1262
      %v1982 = vpop.f32.mrb[0].mxu0
      %v1983 = vadd.f32 %v1793, %v1982
      %v1984 = vpop.f32.mrb[0].mxu0
      %1985 = vmatprep.mubr.f32.mxu0 0.0
      %1986 = vmatmul.mubr.f32.gmra.mrb[0].mxu0 %v1265
      %v1987 = vpop.f32.mrb[0].mxu0
      %v1988 = vadd.f32 %v1798, %v1987
      %v1989 = vpop.f32.mrb[0].mxu0
      %1990 = vmatprep.mubr.f32.mxu0 0.0
      %1991 = vmatmul.mubr.f32.gmra.mrb[0].mxu0 %v1268
      %v1992 = vpop.f32.mrb[0].mxu0
      %v1993 = vadd.f32 %v1803, %v1992
      %v1994 = vpop.f32.mrb[0].mxu0
      %1995 = vmatprep.mubr.f32.mxu0 0.0
      %1996 = vmatmul.mubr.f32.gmra.mrb[0].mxu0 %v1271
      %v1997 = vpop.f32.mrb[0].mxu0
      %v1998 = vadd.f32 %v1808, %v1997
      %v1999 = vpop.f32.mrb[0].mxu0
      %2000 = vmatprep.mubr.f32.mxu0 0.0
      %2001 = vmatmul.mubr.f32.gmra.mrb[0].mxu0 %v1274
      %v2002 = vpop.f32.mrb[0].mxu0
      %v2003 = vadd.f32 %v1813, %v2002
      %v2004 = vpop.f32.mrb[0].mxu0
      %2005 = vmatprep.mubr.f32.mxu0 0.0
      %2006 = vmatmul.mubr.f32.gmra.mrb[0].mxu0 %v1277
      %v2007 = vpop.f32.mrb[0].mxu0
      %v2008 = vadd.f32 %v1818, %v2007
      %v2009 = vpop.f32.mrb[0].mxu0
      %2010 = vmatprep.mubr.f32.mxu0 0.0
      %2011 = vmatmul.mubr.f32.gmra.mrb[0].mxu0 %v1280
      %v2012 = vpop.f32.mrb[0].mxu0
      %v2013 = vadd.f32 %v1823, %v2012
      %v2014 = vpop.f32.mrb[0].mxu0
      %2015 = vmatprep.mubr.f32.mxu0 0.0
      %2016 = vmatmul.mubr.f32.gmra.mrb[0].mxu0 %v1283
      %v2017 = vpop.f32.mrb[0].mxu0
      %v2018 = vadd.f32 %v1828, %v2017
      %v2019 = vpop.f32.mrb[0].mxu0
      %2020 = vmatprep.mubr.f32.mxu0 0.0
      %2021 = vmatmul.mubr.f32.gmra.mrb[0].mxu0 %v1286
      %v2022 = vpop.f32.mrb[0].mxu0
      %v2023 = vadd.f32 %v1833, %v2022
      %v2024 = vpop.f32.mrb[0].mxu0
      %2025 = vmatprep.mubr.f32.mxu0 0.0
      %2026 = vmatmul.mubr.f32.gmra.mrb[0].mxu0 %v1289
      %v2027 = vpop.f32.mrb[0].mxu0
      %v2028 = vadd.f32 %v1838, %v2027
      %v2029 = vpop.f32.mrb[0].mxu0
      %2030 = vmatprep.mubr.f32.mxu0 0.0
      %2031 = vmatmul.mubr.f32.gmra.mrb[0].mxu0 %v1292
      %v2032 = vpop.f32.mrb[0].mxu0
      %v2033 = vadd.f32 %v1843, %v2032
      %v2034 = vpop.f32.mrb[0].mxu0
      %2035 = vmatprep.mubr.f32.mxu0 0.0
      %2036 = vmatmul.mubr.f32.gmra.mrb[0].mxu0 %v1295
      %v2037 = vpop.f32.mrb[0].mxu0
      %v2038 = vadd.f32 %v1848, %v2037
      %v2039 = vpop.f32.mrb[0].mxu0
      %2040 = vmatprep.mubr.f32.mxu0 0.0
      %2041 = vmatmul.mubr.f32.gmra.mrb[0].mxu0 %v1298
      %v2042 = vpop.f32.mrb[0].mxu0
      %v2043 = vadd.f32 %v1853, %v2042
      %v2044 = vpop.f32.mrb[0].mxu0
      %2045 = vmatprep.mubr.f32.mxu0 0.0
      %2046 = vmatmul.mubr.f32.gmra.mrb[0].mxu0 %v1301
      %v2047 = vpop.f32.mrb[0].mxu0
      %v2048 = vadd.f32 %v1858, %v2047
      %v2049 = vpop.f32.mrb[0].mxu0
      %2050 = vmatprep.mubr.f32.mxu0 0.0
      %2051 = vmatmul.mubr.f32.gmra.mrb[0].mxu0 %v1304
      %v2052 = vpop.f32.mrb[0].mxu0
      %v2053 = vadd.f32 %v1863, %v2052
      %v2054 = vpop.f32.mrb[0].mxu0
      %2055 = vmatprep.mubr.f32.mxu0 0.0
      %2056 = vmatmul.mubr.f32.gmra.mrb[0].mxu0 %v1307
      %v2057 = vpop.f32.mrb[0].mxu0
      %v2058 = vadd.f32 %v1868, %v2057
      %v2059 = vpop.f32.mrb[0].mxu0
      %2060 = vmatprep.mubr.f32.mxu0 0.0
      %2061 = vmatmul.mubr.f32.gmra.mrb[0].mxu0 %v1310
      %v2062 = vpop.f32.mrb[0].mxu0
      %v2063 = vadd.f32 %v1873, %v2062
      %v2064 = vpop.f32.mrb[0].mxu0
      %2065 = vmatprep.mubr.f32.mxu0 0.0
      %2066 = vmatmul.mubr.f32.gmra.mrb[0].mxu0 %v1313
      %v2067 = vpop.f32.mrb[0].mxu0
      %v2068 = vadd.f32 %v1878, %v2067
      %v2069 = vpop.f32.mrb[0].mxu0
      %2070 = vmatprep.mubr.f32.mxu0 0.0
      %2071 = vmatmul.mubr.f32.gmra.mrb[0].mxu0 %v1316
      %v2072 = vpop.f32.mrb[0].mxu0
      %v2073 = vadd.f32 %v1883, %v2072
      %v2074 = vpop.f32.mrb[0].mxu0
      %2075 = vmatprep.mubr.f32.mxu0 0.0
      %2076 = vmatmul.mubr.f32.gmra.mrb[0].mxu0 %v1319
      %v2077 = vpop.f32.mrb[0].mxu0
      %v2078 = vadd.f32 %v1888, %v2077
      %v2079 = vpop.f32.mrb[0].mxu0
      %2080 = vdwg.mxu0
      %2081 = vst [vmem:[%s197] sm:$0xff] %v1958
      %2082 = vst [vmem:[%s197 + $0x8] sm:$0xff] %v1963
      %2083 = vst [vmem:[%s197 + $0x10] sm:$0xff] %v1968
      %2084 = vst [vmem:[%s197 + $0x18] sm:$0xff] %v1973
      %2085 = vst [vmem:[%s197 + $0x20] sm:$0xff] %v1978
      %2086 = vst [vmem:[%s197 + $0x28] sm:$0xff] %v1983
      %2087 = vst [vmem:[%s197 + $0x30] sm:$0xff] %v1988
      %2088 = vst [vmem:[%s197 + $0x38] sm:$0xff] %v1993
      %2089 = vst [vmem:[%s197 + $0x40] sm:$0xff] %v1998
      %2090 = vst [vmem:[%s197 + $0x48] sm:$0xff] %v2003
      %2091 = vst [vmem:[%s197 + $0x50] sm:$0xff] %v2008
      %2092 = vst [vmem:[%s197 + $0x58] sm:$0xff] %v2013
      %2093 = vst [vmem:[%s197 + $0x60] sm:$0xff] %v2018
      %2094 = vst [vmem:[%s197 + $0x68] sm:$0xff] %v2023
      %2095 = vst [vmem:[%s197 + $0x70] sm:$0xff] %v2028
      %2096 = vst [vmem:[%s197 + $0x78] sm:$0xff] %v2033
      %2097 = vst [vmem:[%s197 + $0x80] sm:$0xff] %v2038
      %2098 = vst [vmem:[%s197 + $0x88] sm:$0xff] %v2043
      %2099 = vst [vmem:[%s197 + $0x90] sm:$0xff] %v2048
      %2100 = vst [vmem:[%s197 + $0x98] sm:$0xff] %v2053
      %2101 = vst [vmem:[%s197 + $0xa0] sm:$0xff] %v2058
      %2102 = vst [vmem:[%s197 + $0xa8] sm:$0xff] %v2063
      %2103 = vst [vmem:[%s197 + $0xb0] sm:$0xff] %v2068
      %2104 = vst [vmem:[%s197 + $0xb8] sm:$0xff] %v2073
      %2105 = vst [vmem:[%s197 + $0xc0] sm:$0xf] %v2078
      %p2106 = scmp.lt.s32.totalorder %s15, 1
      %s2107 = scalar_select %p2106, %s15, 1
      %s2108 = smul.addr %s2107, 25
      %s2109 = smul.addr %s2108, 8
      %s2110 = scalar_lea.vmem %s4, %s2109
      // Predicated region
      $region37: #{lenet5_forward.3} parent=35 // pred_check
        %p2111 = pneg %p122
      $region38: #{lenet5_forward.3} parent=35 // pred_check_branch
        %2113 = sbr.rel (%p2111) target = $region40
      $region39: #{lenet5_forward.3} parent=35 // pred_region
        _
      $region40: #{lenet5_forward.3} parent=35 // pred_fallthru
        _
    $region36: #{lenet5_forward.3} parent=5 // pred_fallthru
      _
    %p2114 = scmp.le.s32.totalorder 2, %s10
    // Predicated region
    $region41: #{lenet5_forward.3} parent=5 // pred_check
      %p2115 = pneg %p2114
    $region42: #{lenet5_forward.3} parent=5 // pred_check_branch
      %2117 = sbr.rel (%p2115) target = $region44
    $region43: #{lenet5_forward.3} parent=5 // pred_region
      %s2118 = ssub.s32 %s10, 2
      // Predicated region
      $region45: #{lenet5_forward.3} parent=43 // pred_check
        %p2119 = pneg %p128
      $region46: #{lenet5_forward.3} parent=43 // pred_check_branch
        %2121 = sbr.rel (%p2119) target = $region48
      $region47: #{lenet5_forward.3} parent=43 // pred_region
        %p2122 = scmp.lt.s32.totalorder %s16, 1
        %s2123 = scalar_select %p2122, %s16, 1
        %s2124 = smul.addr %s2123, 25
        %s2125 = smul.addr %s2124, 8
        %s2126 = scalar_lea.vmem %s4, %s2125
      $region48: #{lenet5_forward.3} parent=43 // pred_fallthru
        _
    $region44: #{lenet5_forward.3} parent=5 // pred_fallthru
      _
  $region6: #{lenet5_forward.3} parent=0 // loop_footer
    %s14 = sadd.s32 1, %s10
  $region7: #{lenet5_forward.3} parent=0 // loop_footer_branch
    %9 = sbr.rel target = $region3
  $region8: #{lenet5_forward.3} parent=0 // loop_exit
    _

// kernel: lenet5_forward.4
$region0: #{lenet5_forward.4}
  #allocation0 [shape = 'u32[]', space=smem, size = 0x4, offset = 0x4, fixed_abs, tag = 'smem constant byte address 0x4 - core index']
  #allocation1 [shape = 'u32[144,128]{1,0:T(1,128)}', space=vmem, size = 0x12000, scoped, tag = 'internal scratch']
  %s0 = inlined_call_operand.vmem [shape: f32[2,100,150], index: 0, kind: input, shape index: {}]
  %s1 = inlined_call_operand.vmem [shape: bf16[150,128], index: 1, kind: input, shape index: {}]
  %s2 = inlined_call_operand.vmem [shape: f32[1,128], index: 2, kind: input, shape index: {}]
  %s3 = inlined_call_operand.vmem [shape: f32[25,100], index: 3, kind: input, shape index: {}]
  %s4 = inlined_call_operand.vmem [shape: f32[2,25,128], index: 4, kind: output, shape index: {}]
  %s5 = sld [smem:[#allocation0]]
  $region49: #{lenet5_forward.4} parent=0
    _
  %s7 = ssub.s32 1, %s5
  %s8 = scalar_select 0, %s7, %s5
  loop: start=0, step=1, limit=4
  $region2: #{lenet5_forward.4} parent=0 // loop_pre_header
    _
  $region3: #{lenet5_forward.4} parent=0 // loop_header
    %s10 = sphi 0, %s14
    %p11 = scmp.ge.s32.totalorder %s10, 4
    %s20 = sphi 0, %s22
    %s23 = sphi 0, %s20
    %s24 = sphi 0, %s23
    %s40 = sphi 0, %s24
    %s44 = sphi 0, %s44
    %s46 = sphi 0, %s44
    %s47 = sphi 0, %s46
    %s61 = sphi 0, %s47
    %s65 = sphi 0, %s65
    %s67 = sphi 0, %s65
    %s68 = sphi 0, %s67
    %s82 = sphi 0, %s68
    %s86 = sphi 0, %s86
    %s88 = sphi 0, %s86
    %s89 = sphi 0, %s88
    %s103 = sphi 0, %s89
    %s109 = sphi 0, %s111
    %s112 = sphi 0, %s109
    %s113 = sphi 0, %s112
    %s129 = sphi 0, %s113
  $region4: #{lenet5_forward.4} parent=0 // loop_header_branch
    %13 = sbr.rel (%p11) target = $region8
  $region5: #{lenet5_forward.4} parent=0 // loop_body
    %s15 = ssub.s32 %s10, 1
    %s16 = ssub.s32 %s10, 2
    %s17 = sadd.s32 %s10, 1
    %s18 = ssub.s32 %s10, %s17
    %p19 = scmp.eq.s32.totalorder %s18, 0
    %s21 = sadd.s32 %s20, 1
    %s22 = scalar_select %p19, %s20, %s21
    %p25 = pneg %p19
    %p26 = scmp.eq.s32.totalorder %s10, 1
    %p27 = por %p25, %p26
    %p28 = scmp.ne.s32.totalorder %s20, %s23
    %p29 = scmp.eq.s32.totalorder %s10, 0
    %p30 = por %p28, %p29
    %p31 = scmp.ne.s32.totalorder %s20, %s23
    %p32 = scmp.eq.s32.totalorder %s15, 1
    %p33 = por %p31, %p32
    %p34 = scmp.ne.s32.totalorder %s23, %s24
    %p35 = scmp.eq.s32.totalorder %s15, 0
    %p36 = por %p34, %p35
    %p37 = scmp.ne.s32.totalorder %s23, %s24
    %p38 = scmp.eq.s32.totalorder %s16, 1
    %p39 = por %p37, %p38
    %p41 = scmp.ne.s32.totalorder %s24, %s40
    %p42 = scmp.eq.s32.totalorder %s16, 0
    %p43 = por %p41, %p42
    %s45 = sadd.s32 %s44, 1
    %p48 = scmp.eq.s32.totalorder %s10, 1
    %p49 = scmp.ne.s32.totalorder %s44, %s46
    %p50 = scmp.eq.s32.totalorder %s10, 0
    %p51 = por %p49, %p50
    %p52 = scmp.ne.s32.totalorder %s44, %s46
    %p53 = scmp.eq.s32.totalorder %s15, 1
    %p54 = por %p52, %p53
    %p55 = scmp.ne.s32.totalorder %s46, %s47
    %p56 = scmp.eq.s32.totalorder %s15, 0
    %p57 = por %p55, %p56
    %p58 = scmp.ne.s32.totalorder %s46, %s47
    %p59 = scmp.eq.s32.totalorder %s16, 1
    %p60 = por %p58, %p59
    %p62 = scmp.ne.s32.totalorder %s47, %s61
    %p63 = scmp.eq.s32.totalorder %s16, 0
    %p64 = por %p62, %p63
    %s66 = sadd.s32 %s65, 1
    %p69 = scmp.eq.s32.totalorder %s10, 1
    %p70 = scmp.ne.s32.totalorder %s65, %s67
    %p71 = scmp.eq.s32.totalorder %s10, 0
    %p72 = por %p70, %p71
    %p73 = scmp.ne.s32.totalorder %s65, %s67
    %p74 = scmp.eq.s32.totalorder %s15, 1
    %p75 = por %p73, %p74
    %p76 = scmp.ne.s32.totalorder %s67, %s68
    %p77 = scmp.eq.s32.totalorder %s15, 0
    %p78 = por %p76, %p77
    %p79 = scmp.ne.s32.totalorder %s67, %s68
    %p80 = scmp.eq.s32.totalorder %s16, 1
    %p81 = por %p79, %p80
    %p83 = scmp.ne.s32.totalorder %s68, %s82
    %p84 = scmp.eq.s32.totalorder %s16, 0
    %p85 = por %p83, %p84
    %s87 = sadd.s32 %s86, 1
    %p90 = scmp.eq.s32.totalorder %s10, 1
    %p91 = scmp.ne.s32.totalorder %s86, %s88
    %p92 = scmp.eq.s32.totalorder %s10, 0
    %p93 = por %p91, %p92
    %p94 = scmp.ne.s32.totalorder %s86, %s88
    %p95 = scmp.eq.s32.totalorder %s15, 1
    %p96 = por %p94, %p95
    %p97 = scmp.ne.s32.totalorder %s88, %s89
    %p98 = scmp.eq.s32.totalorder %s15, 0
    %p99 = por %p97, %p98
    %p100 = scmp.ne.s32.totalorder %s88, %s89
    %p101 = scmp.eq.s32.totalorder %s16, 1
    %p102 = por %p100, %p101
    %p104 = scmp.ne.s32.totalorder %s89, %s103
    %p105 = scmp.eq.s32.totalorder %s16, 0
    %p106 = por %p104, %p105
    %s107 = ssub.s32 %s10, %s17
    %p108 = scmp.eq.s32.totalorder %s107, 0
    %s110 = sadd.s32 %s109, 1
    %s111 = scalar_select %p108, %s109, %s110
    %p114 = pneg %p108
    %p115 = scmp.eq.s32.totalorder %s10, 1
    %p116 = por %p114, %p115
    %p117 = scmp.ne.s32.totalorder %s109, %s112
    %p118 = scmp.eq.s32.totalorder %s10, 0
    %p119 = por %p117, %p118
    %p120 = scmp.ne.s32.totalorder %s109, %s112
    %p121 = scmp.eq.s32.totalorder %s15, 1
    %p122 = por %p120, %p121
    %p123 = scmp.ne.s32.totalorder %s112, %s113
    %p124 = scmp.eq.s32.totalorder %s15, 0
    %p125 = por %p123, %p124
    %p126 = scmp.ne.s32.totalorder %s112, %s113
    %p127 = scmp.eq.s32.totalorder %s16, 1
    %p128 = por %p126, %p127
    %p130 = scmp.ne.s32.totalorder %s113, %s129
    %p131 = scmp.eq.s32.totalorder %s16, 0
    %p132 = por %p130, %p131
    %p133 = scmp.le.s32.totalorder 1, %s10
    %p134 = scmp.lt.s32.totalorder %s10, 3
    %p135 = pnand %p133, %p134
    %p136 = pneg %p135
    // Predicated region
    $region9: #{lenet5_forward.4} parent=5 // pred_check
      _
    $region10: #{lenet5_forward.4} parent=5 // pred_check_branch
      %138 = sbr.rel (%p135) target = $region12
    $region11: #{lenet5_forward.4} parent=5 // pred_region
      %s139 = ssub.s32 %s10, 1
      // Predicated region
      $region13: #{lenet5_forward.4} parent=11 // pred_check
        %p140 = pneg %p57
      $region14: #{lenet5_forward.4} parent=11 // pred_check_branch
        %142 = sbr.rel (%p140) target = $region16
      $region15: #{lenet5_forward.4} parent=11 // pred_region
        _
      $region16: #{lenet5_forward.4} parent=11 // pred_fallthru
        _
      // Predicated region
      $region17: #{lenet5_forward.4} parent=11 // pred_check
        %p143 = pneg %p78
      $region18: #{lenet5_forward.4} parent=11 // pred_check_branch
        %145 = sbr.rel (%p143) target = $region20
      $region19: #{lenet5_forward.4} parent=11 // pred_region
        _
      $region20: #{lenet5_forward.4} parent=11 // pred_fallthru
        _
      // Predicated region
      $region21: #{lenet5_forward.4} parent=11 // pred_check
        %p146 = pneg %p99
      $region22: #{lenet5_forward.4} parent=11 // pred_check_branch
        %148 = sbr.rel (%p146) target = $region24
      $region23: #{lenet5_forward.4} parent=11 // pred_region
        _
      $region24: #{lenet5_forward.4} parent=11 // pred_fallthru
        _
    $region12: #{lenet5_forward.4} parent=5 // pred_fallthru
      _
    %p149 = scmp.lt.s32.totalorder %s10, 2
    // Predicated region
    $region25: #{lenet5_forward.4} parent=5 // pred_check
      %p150 = pneg %p149
    $region26: #{lenet5_forward.4} parent=5 // pred_check_branch
      %152 = sbr.rel (%p150) target = $region28
    $region27: #{lenet5_forward.4} parent=5 // pred_region
      // Predicated region
      $region29: #{lenet5_forward.4} parent=27 // pred_check
        %p153 = pneg %p30
      $region30: #{lenet5_forward.4} parent=27 // pred_check_branch
        %155 = sbr.rel (%p153) target = $region32
      $region31: #{lenet5_forward.4} parent=27 // pred_region
        %p156 = scmp.lt.s32.totalorder %s10, 1
        %s157 = scalar_select %p156, %s10, 1
        %s158 = smul.addr %s157, 26
        %s159 = smul.addr %s158, 8
        %s160 = scalar_lea.vmem %s0, %s159
      $region32: #{lenet5_forward.4} parent=27 // pred_fallthru
        _
    $region28: #{lenet5_forward.4} parent=5 // pred_fallthru
      _
    %p161 = scmp.le.s32.totalorder 1, %s10
    %p162 = scmp.lt.s32.totalorder %s10, 3
    %p163 = pnand %p161, %p162
    %p164 = pneg %p163
    // Predicated region
    $region33: #{lenet5_forward.4} parent=5 // pred_check
      _
    $region34: #{lenet5_forward.4} parent=5 // pred_check_branch
      %166 = sbr.rel (%p163) target = $region36
    $region35: #{lenet5_forward.4} parent=5 // pred_region
      %s167 = ssub.s32 %s10, 1
      %p168 = scmp.lt.s32.totalorder %s15, 1
      %s169 = scalar_select %p168, %s15, 1
      %s170 = smul.addr %s169, 26
      %s171 = smul.addr %s170, 8
      %s172 = scalar_lea.vmem %s0, %s171
      %p173 = pneg %p36
      %p174 = pneg %p33
      %p175 = pneg %p57
      %p176 = pneg %p54
      %p177 = pneg %p78
      %p178 = pneg %p75
      %p179 = pneg %p99
      %p180 = pneg %p96
      %p181 = pneg %p125
      %p182 = pneg %p122
      %p183 = scmp.lt.s32.totalorder %s15, 1
      %s184 = scalar_select %p183, %s15, 1
      %s185 = smul.addr %s184, 4
      %s186 = smul.addr %s185, 8
      %s187 = scalar_lea.vmem %s4, %s186
      %p188 = scmp.lt.s32.totalorder %s15, 1
      %s189 = scalar_select %p188, %s15, 1
      %s190 = smul.addr %s189, 26
      %s191 = smul.addr %s190, 8
      %s192 = scalar_lea.vmem %s0, %s191
      %p193 = scmp.lt.s32.totalorder %s15, 1
      %s194 = scalar_select %p193, %s15, 1
      %s195 = smul.addr %s194, 4
      %s196 = smul.addr %s195, 8
      %s197 = scalar_lea.vmem %s4, %s196
      %v199 = vld [vmem:[%s192] sm:$0xff]
      %v200 = vld [vmem:[%s192 + $0x8] sm:$0xff]
      %v201 = vld [vmem:[%s192 + $0x10] sm:$0xff]
      %v202 = vld [vmem:[%s192 + $0x18] sm:$0xff]
      %v203 = vld [vmem:[%s192 + $0x20] sm:$0xff]
      %v204 = vld [vmem:[%s192 + $0x28] sm:$0xff]
      %v205 = vld [vmem:[%s192 + $0x30] sm:$0xff]
      %v206 = vld [vmem:[%s192 + $0x38] sm:$0xff]
      %v207 = vld [vmem:[%s192 + $0x40] sm:$0xff]
      %v208 = vld [vmem:[%s192 + $0x48] sm:$0xff]
      %v209 = vld [vmem:[%s192 + $0x50] sm:$0xff]
      %v210 = vld [vmem:[%s192 + $0x58] sm:$0xff]
      %v211 = vld [vmem:[%s192 + $0x60] sm:$0xff]
      %v212 = vld [vmem:[%s192 + $0x68] sm:$0xff]
      %v213 = vld [vmem:[%s192 + $0x70] sm:$0xff]
      %v214 = vld [vmem:[%s192 + $0x78] sm:$0xff]
      %v215 = vld [vmem:[%s192 + $0x80] sm:$0xff]
      %v216 = vld [vmem:[%s192 + $0x88] sm:$0xff]
      %v217 = vld [vmem:[%s192 + $0x90] sm:$0xff]
      %v218 = vld [vmem:[%s192 + $0x98] sm:$0xff]
      %v219 = vld [vmem:[%s192 + $0xa0] sm:$0xff]
      %v220 = vld [vmem:[%s192 + $0xa8] sm:$0xff]
      %v221 = vld [vmem:[%s192 + $0xb0] sm:$0xff]
      %v222 = vld [vmem:[%s192 + $0xb8] sm:$0xff]
      %v223 = vld [vmem:[%s192 + $0xc0] sm:$0xf]
      %v224 = vld [vmem:[%s192 + $0xc8] sm:$0xf]
      %v225 = vpack.c.bf16 %v201, %v199
      %v226 = vpack.c.bf16 %v202, %v200
      %v227 = vpack.c.bf16 %v205, %v203
      %v228 = vpack.c.bf16 %v206, %v204
      %v229 = vpack.c.bf16 %v209, %v207
      %v230 = vpack.c.bf16 %v210, %v208
      %v231 = vpack.c.bf16 %v213, %v211
      %v232 = vpack.c.bf16 %v214, %v212
      %v233 = vpack.c.bf16 %v217, %v215
      %v234 = vpack.c.bf16 %v218, %v216
      %v235 = vpack.c.bf16 %v221, %v219
      %v236 = vpack.c.bf16 %v222, %v220
      %v237 = vpack.c.bf16 %v223, %v223
      %v238 = vpack.c.bf16 %v224, %v224
      %v239 = vld [vmem:[%s1] sm:$0xf]
      %v240 = vld [vmem:[%s1 + $0x4] sm:$0xf]
      %v241 = vld [vmem:[%s1 + $0x8] sm:$0xf]
      %v242 = vld [vmem:[%s1 + $0xc] sm:$0xf]
      %v243 = vld [vmem:[%s1 + $0x10] sm:$0xf]
      %v244 = vld [vmem:[%s1 + $0x14] sm:$0xf]
      %v245 = vld [vmem:[%s1 + $0x18] sm:$0xf]
      %v246 = vld [vmem:[%s1 + $0x1c] sm:$0xf]
      %v247 = vld [vmem:[%s1 + $0x20] sm:$0xf]
      %v248 = vld [vmem:[%s1 + $0x24] sm:$0xf]
      %v249 = vld [vmem:[%s1 + $0x28] sm:$0xf]
      %v250 = vld [vmem:[%s1 + $0x2c] sm:$0xf]
      %v251 = vld [vmem:[%s1 + $0x30] sm:$0xf]
      %v252 = vld [vmem:[%s1 + $0x34] sm:$0xf]
      %v253 = vld [vmem:[%s1 + $0x38] sm:$0xf]
      %v254 = vld [vmem:[%s1 + $0x3c] sm:$0xf]
      %v255 = vld [vmem:[%s1 + $0x40] sm:$0xf]
      %v256 = vld [vmem:[%s1 + $0x44] sm:$0xf]
      %v257 = vld [vmem:[%s1 + $0x48] sm:$0x7]
      %v258 = vld [vmem:[%s2] sm:$0x1]
      %v260 = vlaneseq
      %v261 = vshrl.u32 %v260, 7
      %v262 = vsub.s32 0, %v261
      %v263 = vrot.slane %v258, %v262
      %v284 = vunpack.c.l.b16 %v239
      %v285 = vunpack.c.l.b16 %v240
      %v286 = vunpack.c.l.b16 %v241
      %v287 = vunpack.c.l.b16 %v242
      %v288 = vunpack.c.l.b16 %v243
      %v289 = vunpack.c.l.b16 %v244
      %v290 = vunpack.c.l.b16 %v245
      %v291 = vunpack.c.l.b16 %v246
      %v292 = vunpack.c.l.b16 %v247
      %v293 = vunpack.c.l.b16 %v248
      %v294 = vunpack.c.l.b16 %v249
      %v295 = vunpack.c.l.b16 %v250
      %v296 = vunpack.c.l.b16 %v251
      %v297 = vunpack.c.l.b16 %v252
      %v298 = vunpack.c.l.b16 %v253
      %v299 = vunpack.c.l.b16 %v254
      %v300 = vunpack.c.l.b16 %v255
      %v301 = vunpack.c.l.b16 %v256
      %v302 = vunpack.c.l.b16 %v257
      %v303 = vpack.c.b16 %v285, %v284
      %v304 = vpack.c.b16 %v287, %v286
      %v305 = vpack.c.b16 %v289, %v288
      %v306 = vpack.c.b16 %v291, %v290
      %v307 = vpack.c.b16 %v293, %v292
      %v308 = vpack.c.b16 %v295, %v294
      %v309 = vpack.c.b16 %v297, %v296
      %v310 = vpack.c.b16 %v299, %v298
      %v311 = vpack.c.b16 %v301, %v300
      %v312 = vpack.c.b16 %v302, %v302
      %vm322 = vcmask 179200
      %v324 = vsel %vm322, %v226, 0
      %v327 = vsel %vm322, %v228, 0
      %v330 = vsel %vm322, %v230, 0
      %v333 = vsel %vm322, %v232, 0
      %v336 = vsel %vm322, %v234, 0
      %v339 = vsel %vm322, %v236, 0
      %v342 = vsel %vm322, %v238, 0
      %vm344 = vcmask 1042432
      %v346 = vsel %vm344, %v312, 0
      %348 = vmatprep.subr.bf16.mxu0 0
      %349 = vmatpush1.bf16.msra.mxu0 %v303
      %350 = vmatprep.subr.bf16.mxu0 0
      %351 = vmatpush1.bf16.msra.mxu0 %v304
      %352 = vmatprep.subr.bf16.mxu0 0
      %353 = vmatpush1.bf16.msra.mxu0 %v305
      %354 = vmatprep.subr.bf16.mxu0 0
      %355 = vmatpush1.bf16.msra.mxu0 %v306
      %356 = vmatprep.subr.bf16.mxu0 0
      %357 = vmatpush1.bf16.msra.mxu0 %v307
      %358 = vmatprep.subr.bf16.mxu0 0
      %359 = vmatpush1.bf16.msra.mxu0 %v308
      %360 = vmatprep.subr.bf16.mxu0 0
      %361 = vmatpush1.bf16.msra.mxu0 %v309
      %362 = vmatprep.subr.bf16.mxu0 0
      %363 = vmatpush1.bf16.msra.mxu0 %v310
      %364 = vmatprep.subr.bf16.mxu0 0
      %365 = vmatpush1.bf16.msra.mxu0 %v311
      %366 = vmatprep.subr.bf16.mxu0 0
      %367 = vmatpush1.bf16.msra.mxu0 %v346
      %368 = vmatprep.subr.bf16.mxu0 0
      %369 = vmatpush1.bf16.msra.mxu0 0
      %370 = vmatprep.subr.bf16.mxu0 0
      %371 = vmatpush1.bf16.msra.mxu0 0
      %372 = vmatprep.subr.bf16.mxu0 0
      %373 = vmatpush1.bf16.msra.mxu0 0
      %374 = vmatprep.subr.bf16.mxu0 0
      %375 = vmatpush1.bf16.msra.mxu0 0
      %376 = vmatprep.subr.bf16.mxu0 0
      %377 = vmatpush1.bf16.msra.mxu0 0
      %378 = vmatprep.subr.bf16.mxu0 0
      %379 = vmatpush1.bf16.msra.mxu0 0
      %380 = vmatprep.mubr.bf16.mxu0 %v324
      %381 = vmatmul.mubr.bf16.gmra.mrb[0].mxu0 %v225
      %v382 = vpop.f32.mrb[0].mxu0
      %v383 = vadd.f32 %v263, %v382
      %v384 = vpop.f32.mrb[0].mxu0
      %v385 = vpop.f32.mrb[0].mxu0
      %v386 = vadd.f32 %v263, %v385
      %v387 = vpop.f32.mrb[0].mxu0
      %388 = vmatprep.mubr.bf16.mxu0 %v327
      %389 = vmatmul.mubr.bf16.gmra.mrb[0].mxu0 %v227
      %v390 = vpop.f32.mrb[0].mxu0
      %v391 = vadd.f32 %v263, %v390
      %v392 = vpop.f32.mrb[0].mxu0
      %v393 = vpop.f32.mrb[0].mxu0
      %v394 = vadd.f32 %v263, %v393
      %v395 = vpop.f32.mrb[0].mxu0
      %396 = vmatprep.mubr.bf16.mxu0 %v330
      %397 = vmatmul.mubr.bf16.gmra.mrb[0].mxu0 %v229
      %v398 = vpop.f32.mrb[0].mxu0
      %v399 = vadd.f32 %v263, %v398
      %v400 = vpop.f32.mrb[0].mxu0
      %v401 = vpop.f32.mrb[0].mxu0
      %v402 = vadd.f32 %v263, %v401
      %v403 = vpop.f32.mrb[0].mxu0
      %404 = vmatprep.mubr.bf16.mxu0 %v333
      %405 = vmatmul.mubr.bf16.gmra.mrb[0].mxu0 %v231
      %v406 = vpop.f32.mrb[0].mxu0
      %v407 = vadd.f32 %v263, %v406
      %v408 = vpop.f32.mrb[0].mxu0
      %v409 = vpop.f32.mrb[0].mxu0
      %v410 = vadd.f32 %v263, %v409
      %v411 = vpop.f32.mrb[0].mxu0
      %412 = vmatprep.mubr.bf16.mxu0 %v336
      %413 = vmatmul.mubr.bf16.gmra.mrb[0].mxu0 %v233
      %v414 = vpop.f32.mrb[0].mxu0
      %v415 = vadd.f32 %v263, %v414
      %v416 = vpop.f32.mrb[0].mxu0
      %v417 = vpop.f32.mrb[0].mxu0
      %v418 = vadd.f32 %v263, %v417
      %v419 = vpop.f32.mrb[0].mxu0
      %420 = vmatprep.mubr.bf16.mxu0 %v339
      %421 = vmatmul.mubr.bf16.gmra.mrb[0].mxu0 %v235
      %v422 = vpop.f32.mrb[0].mxu0
      %v423 = vadd.f32 %v263, %v422
      %v424 = vpop.f32.mrb[0].mxu0
      %v425 = vpop.f32.mrb[0].mxu0
      %v426 = vadd.f32 %v263, %v425
      %v427 = vpop.f32.mrb[0].mxu0
      %428 = vmatprep.mubr.bf16.mxu0 %v342
      %429 = vmatmul.mubr.bf16.gmra.mrb[0].mxu0 %v237
      %v430 = vpop.f32.mrb[0].mxu0
      %v431 = vadd.f32 %v263, %v430
      %v432 = vpop.f32.mrb[0].mxu0
      %v433 = vpop.f32.mrb[0].mxu0
      %v434 = vpop.f32.mrb[0].mxu0
      %435 = vdwg.mxu0
      %v436 = vmax.f32 %v383, 0.0
      %v437 = vmax.f32 %v386, 0.0
      %v438 = vmax.f32 %v391, 0.0
      %v439 = vmax.f32 %v394, 0.0
      %v440 = vmax.f32 %v399, 0.0
      %v441 = vmax.f32 %v402, 0.0
      %v442 = vmax.f32 %v407, 0.0
      %v443 = vmax.f32 %v410, 0.0
      %v444 = vmax.f32 %v415, 0.0
      %v445 = vmax.f32 %v418, 0.0
      %v446 = vmax.f32 %v423, 0.0
      %v447 = vmax.f32 %v426, 0.0
      %v448 = vmax.f32 %v431, 0.0
      %v449 = vld [vmem:[%s3] sm:$0xff]
      %v450 = vld [vmem:[%s3 + $0x8] sm:$0xff]
      %v451 = vld [vmem:[%s3 + $0x10] sm:$0xff]
      %v452 = vld [vmem:[%s3 + $0x18] sm:$0x1]
      %vm453 = vcmask 818176
      %v455 = vsel %vm453, %v449, 0
      %v458 = vsel %vm453, %v450, 0
      %v461 = vsel %vm453, %v451, 0
      %v464 = vsel %vm453, %v452, 0
      %vm466 = vcmask 1043456
      %v468 = vsel %vm466, %v448, 0
      %470 = vmatprep.subr.mxu0 0.0
      %471 = vmatpush1.msra.mxu0 %v436
      %472 = vmatprep.subr.mxu0 0.0
      %473 = vmatpush1.msra.mxu0 %v437
      %474 = vmatprep.subr.mxu0 0.0
      %475 = vmatpush1.msra.mxu0 %v438
      %476 = vmatprep.subr.mxu0 0.0
      %477 = vmatpush1.msra.mxu0 %v439
      %478 = vmatprep.subr.mxu0 0.0
      %479 = vmatpush1.msra.mxu0 %v440
      %480 = vmatprep.subr.mxu0 0.0
      %481 = vmatpush1.msra.mxu0 %v441
      %482 = vmatprep.subr.mxu0 0.0
      %483 = vmatpush1.msra.mxu0 %v442
      %484 = vmatprep.subr.mxu0 0.0
      %485 = vmatpush1.msra.mxu0 %v443
      %486 = vmatprep.subr.mxu0 0.0
      %487 = vmatpush1.msra.mxu0 %v444
      %488 = vmatprep.subr.mxu0 0.0
      %489 = vmatpush1.msra.mxu0 %v445
      %490 = vmatprep.subr.mxu0 0.0
      %491 = vmatpush1.msra.mxu0 %v446
      %492 = vmatprep.subr.mxu0 0.0
      %493 = vmatpush1.msra.mxu0 %v447
      %494 = vmatprep.subr.mxu0 0.0
      %495 = vmatpush1.msra.mxu0 %v468
      %496 = vmatprep.subr.mxu0 0.0
      %497 = vmatpush1.msra.mxu0 0.0
      %498 = vmatprep.subr.mxu0 0.0
      %499 = vmatpush1.msra.mxu0 0.0
      %500 = vmatprep.subr.mxu0 0.0
      %501 = vmatpush1.msra.mxu0 0.0
      %502 = vmatprep.subr.mxu0 0.0
      %503 = vmatpush1.msra.mxu0 0.0
      %504 = vmatprep.subr.mxu0 0.0
      %505 = vmatpush1.msra.mxu0 0.0
      %506 = vmatprep.subr.mxu0 0.0
      %507 = vmatpush1.msra.mxu0 0.0
      %508 = vmatprep.subr.mxu0 0.0
      %509 = vmatpush1.msra.mxu0 0.0
      %510 = vmatprep.subr.mxu0 0.0
      %511 = vmatpush1.msra.mxu0 0.0
      %512 = vmatprep.subr.mxu0 0.0
      %513 = vmatpush1.msra.mxu0 0.0
      %514 = vmatprep.subr.mxu0 0.0
      %515 = vmatpush1.msra.mxu0 0.0
      %516 = vmatprep.subr.mxu0 0.0
      %517 = vmatpush1.msra.mxu0 0.0
      %518 = vmatprep.subr.mxu0 0.0
      %519 = vmatpush1.msra.mxu0 0.0
      %520 = vmatprep.subr.mxu0 0.0
      %521 = vmatpush1.msra.mxu0 0.0
      %522 = vmatprep.subr.mxu0 0.0
      %523 = vmatpush1.msra.mxu0 0.0
      %524 = vmatprep.subr.mxu0 0.0
      %525 = vmatpush1.msra.mxu0 0.0
      %526 = vmatprep.subr.mxu0 0.0
      %527 = vmatpush1.msra.mxu0 0.0
      %528 = vmatprep.subr.mxu0 0.0
      %529 = vmatpush1.msra.mxu0 0.0
      %530 = vmatprep.subr.mxu0 0.0
      %531 = vmatpush1.msra.mxu0 0.0
      %532 = vmatprep.subr.mxu0 0.0
      %533 = vmatpush1.msra.mxu0 0.0
      %534 = vmatprep.mubr.f32.mxu0 0.0
      %535 = vmatmul.mubr.f32.gmra.mrb[0].mxu0 %v455
      %v536 = vpop.f32.mrb[0].mxu0
      %v537 = vadd.f32 0.0, %v536
      %v538 = vpop.f32.mrb[0].mxu0
      %539 = vmatprep.mubr.f32.mxu0 0.0
      %540 = vmatmul.mubr.f32.gmra.mrb[0].mxu0 %v458
      %v541 = vpop.f32.mrb[0].mxu0
      %v542 = vadd.f32 0.0, %v541
      %v543 = vpop.f32.mrb[0].mxu0
      %544 = vmatprep.mubr.f32.mxu0 0.0
      %545 = vmatmul.mubr.f32.gmra.mrb[0].mxu0 %v461
      %v546 = vpop.f32.mrb[0].mxu0
      %v547 = vadd.f32 0.0, %v546
      %v548 = vpop.f32.mrb[0].mxu0
      %549 = vmatprep.mubr.f32.mxu0 0.0
      %550 = vmatmul.mubr.f32.gmra.mrb[0].mxu0 %v464
      %v551 = vpop.f32.mrb[0].mxu0
      %v552 = vadd.f32 0.0, %v551
      %v553 = vpop.f32.mrb[0].mxu0
      %554 = vdwg.mxu0
      %555 = vst [vmem:[%s197] sm:$0xff] %v537
      %556 = vst [vmem:[%s197 + $0x8] sm:$0xff] %v542
      %557 = vst [vmem:[%s197 + $0x10] sm:$0xff] %v547
      %558 = vst [vmem:[%s197 + $0x18] sm:$0x1] %v552
      %p559 = scmp.lt.s32.totalorder %s15, 1
      %s560 = scalar_select %p559, %s15, 1
      %s561 = smul.addr %s560, 4
      %s562 = smul.addr %s561, 8
      %s563 = scalar_lea.vmem %s4, %s562
      // Predicated region
      $region37: #{lenet5_forward.4} parent=35 // pred_check
        %p564 = pneg %p122
      $region38: #{lenet5_forward.4} parent=35 // pred_check_branch
        %566 = sbr.rel (%p564) target = $region40
      $region39: #{lenet5_forward.4} parent=35 // pred_region
        _
      $region40: #{lenet5_forward.4} parent=35 // pred_fallthru
        _
    $region36: #{lenet5_forward.4} parent=5 // pred_fallthru
      _
    %p567 = scmp.le.s32.totalorder 2, %s10
    // Predicated region
    $region41: #{lenet5_forward.4} parent=5 // pred_check
      %p568 = pneg %p567
    $region42: #{lenet5_forward.4} parent=5 // pred_check_branch
      %570 = sbr.rel (%p568) target = $region44
    $region43: #{lenet5_forward.4} parent=5 // pred_region
      %s571 = ssub.s32 %s10, 2
      // Predicated region
      $region45: #{lenet5_forward.4} parent=43 // pred_check
        %p572 = pneg %p128
      $region46: #{lenet5_forward.4} parent=43 // pred_check_branch
        %574 = sbr.rel (%p572) target = $region48
      $region47: #{lenet5_forward.4} parent=43 // pred_region
        %p575 = scmp.lt.s32.totalorder %s16, 1
        %s576 = scalar_select %p575, %s16, 1
        %s577 = smul.addr %s576, 4
        %s578 = smul.addr %s577, 8
        %s579 = scalar_lea.vmem %s4, %s578
      $region48: #{lenet5_forward.4} parent=43 // pred_fallthru
        _
    $region44: #{lenet5_forward.4} parent=5 // pred_fallthru
      _
  $region6: #{lenet5_forward.4} parent=0 // loop_footer
    %s14 = sadd.s32 1, %s10
  $region7: #{lenet5_forward.4} parent=0 // loop_footer_branch
    %9 = sbr.rel target = $region3
  $region8: #{lenet5_forward.4} parent=0 // loop_exit
    _

// kernel: lenet5_forward.5
$region0: #{lenet5_forward.5}
  #allocation0 [shape = 'u32[]', space=smem, size = 0x4, offset = 0x4, fixed_abs, tag = 'smem constant byte address 0x4 - core index']
  #allocation1 [shape = 'u32[144,128]{1,0:T(1,128)}', space=vmem, size = 0x12000, scoped, tag = 'internal scratch']
  %s0 = inlined_call_operand.vmem [shape: f32[2,3200], index: 0, kind: input, shape index: {}]
  %s1 = inlined_call_operand.vmem [shape: bf16[3200,128], index: 1, kind: input, shape index: {}]
  %s2 = inlined_call_operand.vmem [shape: f32[1,128], index: 2, kind: input, shape index: {}]
  %s3 = inlined_call_operand.vmem [shape: bf16[128,128], index: 3, kind: input, shape index: {}]
  %s4 = inlined_call_operand.vmem [shape: f32[1,128], index: 4, kind: input, shape index: {}]
  %s5 = inlined_call_operand.vmem [shape: bf16[128,128], index: 5, kind: input, shape index: {}]
  %s6 = inlined_call_operand.vmem [shape: f32[1,128], index: 6, kind: input, shape index: {}]
  %s7 = inlined_call_operand.hbm [shape: f32[2,128], index: 7, kind: output, shape index: {}]
  %s8 = sld [smem:[#allocation0]]
  $region38: #{lenet5_forward.5} parent=0
    _
  %s10 = ssub.s32 1, %s8
  %s11 = scalar_select 0, %s10, %s8
  $region1: #{lenet5_forward.5} parent=0
    #allocation2 [shape = 'u8[1024]{0}', space=vmem, size = 0x400, scoped, tag = 'output window, operand 0, single buffered']
    #allocation3 [shape = 's32[1]{0}', space=sflag, size = 0x4, scoped, tag = 'scoped memory for lenet5_forward.5']
    %12 = vsyncpa [#allocation3], 0
    // Predicated region
    $region2: #{lenet5_forward.5} parent=1 // pred_check
      _
    $region3: #{lenet5_forward.5} parent=1 // pred_check_branch
      %14 = sbr.rel (0) target = $region5
    $region4: #{lenet5_forward.5} parent=1 // pred_region
      _
    $region5: #{lenet5_forward.5} parent=1 // pred_fallthru
      _
    // Predicated region
    $region6: #{lenet5_forward.5} parent=1 // pred_check
      _
    $region7: #{lenet5_forward.5} parent=1 // pred_check_branch
      %16 = sbr.rel (0) target = $region9
    $region8: #{lenet5_forward.5} parent=1 // pred_region
      _
    $region9: #{lenet5_forward.5} parent=1 // pred_fallthru
      _
    // Predicated region
    $region10: #{lenet5_forward.5} parent=1 // pred_check
      _
    $region11: #{lenet5_forward.5} parent=1 // pred_check_branch
      %18 = sbr.rel (0) target = $region13
    $region12: #{lenet5_forward.5} parent=1 // pred_region
      _
    $region13: #{lenet5_forward.5} parent=1 // pred_fallthru
      _
    // Predicated region
    $region14: #{lenet5_forward.5} parent=1 // pred_check
      _
    $region15: #{lenet5_forward.5} parent=1 // pred_check_branch
      %20 = sbr.rel (0) target = $region17
    $region16: #{lenet5_forward.5} parent=1 // pred_region
      _
    $region17: #{lenet5_forward.5} parent=1 // pred_fallthru
      _
    // Predicated region
    $region18: #{lenet5_forward.5} parent=1 // pred_check
      _
    $region19: #{lenet5_forward.5} parent=1 // pred_check_branch
      %22 = sbr.rel (0) target = $region21
    $region20: #{lenet5_forward.5} parent=1 // pred_region
      _
    $region21: #{lenet5_forward.5} parent=1 // pred_fallthru
      _
    // Predicated region
    $region22: #{lenet5_forward.5} parent=1 // pred_check
      _
    $region23: #{lenet5_forward.5} parent=1 // pred_check_branch
      %24 = sbr.rel (0) target = $region25
    $region24: #{lenet5_forward.5} parent=1 // pred_region
      _
    $region25: #{lenet5_forward.5} parent=1 // pred_fallthru
      _
    // Predicated region
    $region26: #{lenet5_forward.5} parent=1 // pred_check
      _
    $region27: #{lenet5_forward.5} parent=1 // pred_check_branch
      %26 = sbr.rel (0) target = $region29
    $region28: #{lenet5_forward.5} parent=1 // pred_region
      _
    $region29: #{lenet5_forward.5} parent=1 // pred_fallthru
      _
    %v28 = vld [vmem:[%s0] sm:$0xff]
    %v29 = vld [vmem:[%s0 + $0x8] sm:$0xff]
    %v30 = vld [vmem:[%s0 + $0x10] sm:$0xff]
    %v31 = vld [vmem:[%s0 + $0x18] sm:$0xff]
    %v32 = vld [vmem:[%s0 + $0x20] sm:$0xff]
    %v33 = vld [vmem:[%s0 + $0x28] sm:$0xff]
    %v34 = vld [vmem:[%s0 + $0x30] sm:$0x3]
    %v42 = vcombine.high %v28, %v28
    %v44 = vunpack.c.l.s4 1983009808
    %v45 = vunpack.c.0.s8 %v44
    %v46 = vlaneseq
    %v47 = vshrl.u32 %v46, 7
    %v48 = vsub.s32 %v45, %v47
    %v49 = vrot.slane %v28, %v48
    %v51 = vunpack.c.l.s4 1983009808
    %v52 = vunpack.c.0.s8 %v51
    %v53 = vlaneseq
    %v54 = vshrl.u32 %v53, 7
    %v55 = vsub.s32 %v52, %v54
    %v56 = vrot.slane %v42, %v55
    %v57 = vcombine.high %v49, %v49
    %v58 = vcombine.high %v56, %v56
    %v59 = vcombine.high %v29, %v29
    %v61 = vunpack.c.l.s4 1983009808
    %v62 = vunpack.c.0.s8 %v61
    %v63 = vlaneseq
    %v64 = vshrl.u32 %v63, 7
    %v65 = vsub.s32 %v62, %v64
    %v66 = vrot.slane %v29, %v65
    %v68 = vunpack.c.l.s4 1983009808
    %v69 = vunpack.c.0.s8 %v68
    %v70 = vlaneseq
    %v71 = vshrl.u32 %v70, 7
    %v72 = vsub.s32 %v69, %v71
    %v73 = vrot.slane %v59, %v72
    %v74 = vcombine.high %v66, %v66
    %v75 = vcombine.high %v73, %v73
    %v76 = vcombine.high %v30, %v30
    %v78 = vunpack.c.l.s4 1983009808
    %v79 = vunpack.c.0.s8 %v78
    %v80 = vlaneseq
    %v81 = vshrl.u32 %v80, 7
    %v82 = vsub.s32 %v79, %v81
    %v83 = vrot.slane %v30, %v82
    %v85 = vunpack.c.l.s4 1983009808
    %v86 = vunpack.c.0.s8 %v85
    %v87 = vlaneseq
    %v88 = vshrl.u32 %v87, 7
    %v89 = vsub.s32 %v86, %v88
    %v90 = vrot.slane %v76, %v89
    %v91 = vcombine.high %v83, %v83
    %v92 = vcombine.high %v90, %v90
    %v93 = vcombine.high %v31, %v31
    %v95 = vunpack.c.l.s4 1983009808
    %v96 = vunpack.c.0.s8 %v95
    %v97 = vlaneseq
    %v98 = vshrl.u32 %v97, 7
    %v99 = vsub.s32 %v96, %v98
    %v100 = vrot.slane %v31, %v99
    %v102 = vunpack.c.l.s4 1983009808
    %v103 = vunpack.c.0.s8 %v102
    %v104 = vlaneseq
    %v105 = vshrl.u32 %v104, 7
    %v106 = vsub.s32 %v103, %v105
    %v107 = vrot.slane %v93, %v106
    %v108 = vcombine.high %v100, %v100
    %v109 = vcombine.high %v107, %v107
    %v110 = vcombine.high %v32, %v32
    %v112 = vunpack.c.l.s4 1983009808
    %v113 = vunpack.c.0.s8 %v112
    %v114 = vlaneseq
    %v115 = vshrl.u32 %v114, 7
    %v116 = vsub.s32 %v113, %v115
    %v117 = vrot.slane %v32, %v116
    %v119 = vunpack.c.l.s4 1983009808
    %v120 = vunpack.c.0.s8 %v119
    %v121 = vlaneseq
    %v122 = vshrl.u32 %v121, 7
    %v123 = vsub.s32 %v120, %v122
    %v124 = vrot.slane %v110, %v123
    %v125 = vcombine.high %v117, %v117
    %v126 = vcombine.high %v124, %v124
    %v127 = vcombine.high %v33, %v33
    %v129 = vunpack.c.l.s4 1983009808
    %v130 = vunpack.c.0.s8 %v129
    %v131 = vlaneseq
    %v132 = vshrl.u32 %v131, 7
    %v133 = vsub.s32 %v130, %v132
    %v134 = vrot.slane %v33, %v133
    %v136 = vunpack.c.l.s4 1983009808
    %v137 = vunpack.c.0.s8 %v136
    %v138 = vlaneseq
    %v139 = vshrl.u32 %v138, 7
    %v140 = vsub.s32 %v137, %v139
    %v141 = vrot.slane %v127, %v140
    %v142 = vcombine.high %v134, %v134
    %v143 = vcombine.high %v141, %v141
    %v145 = vunpack.c.l.s4 1983009808
    %v146 = vunpack.c.0.s8 %v145
    %v147 = vlaneseq
    %v148 = vshrl.u32 %v147, 7
    %v149 = vsub.s32 %v146, %v148
    %v150 = vrot.slane %v34, %v149
    %v176 = vpack.c.bf16 %v49, %v49
    %v177 = vpack.c.bf16 %v57, %v57
    %v178 = vpack.c.bf16 %v56, %v56
    %v179 = vpack.c.bf16 %v58, %v58
    %v180 = vpack.c.bf16 %v66, %v66
    %v181 = vpack.c.bf16 %v74, %v74
    %v182 = vpack.c.bf16 %v73, %v73
    %v183 = vpack.c.bf16 %v75, %v75
    %v184 = vpack.c.bf16 %v83, %v83
    %v185 = vpack.c.bf16 %v91, %v91
    %v186 = vpack.c.bf16 %v90, %v90
    %v187 = vpack.c.bf16 %v92, %v92
    %v188 = vpack.c.bf16 %v100, %v100
    %v189 = vpack.c.bf16 %v108, %v108
    %v190 = vpack.c.bf16 %v107, %v107
    %v191 = vpack.c.bf16 %v109, %v109
    %v192 = vpack.c.bf16 %v117, %v117
    %v193 = vpack.c.bf16 %v125, %v125
    %v194 = vpack.c.bf16 %v124, %v124
    %v195 = vpack.c.bf16 %v126, %v126
    %v196 = vpack.c.bf16 %v134, %v134
    %v197 = vpack.c.bf16 %v142, %v142
    %v198 = vpack.c.bf16 %v141, %v141
    %v199 = vpack.c.bf16 %v143, %v143
    %v200 = vpack.c.bf16 %v150, %v150
    %v201 = vld [vmem:[%s1] sm:$0xf]
    %v202 = vld [vmem:[%s1 + $0x4] sm:$0xf]
    %v203 = vld [vmem:[%s1 + $0x8] sm:$0xf]
    %v204 = vld [vmem:[%s1 + $0xc] sm:$0xf]
    %v205 = vld [vmem:[%s1 + $0x10] sm:$0xf]
    %v206 = vld [vmem:[%s1 + $0x14] sm:$0xf]
    %v207 = vld [vmem:[%s1 + $0x18] sm:$0xf]
    %v208 = vld [vmem:[%s1 + $0x1c] sm:$0xf]
    %v209 = vld [vmem:[%s1 + $0x20] sm:$0xf]
    %v210 = vld [vmem:[%s1 + $0x24] sm:$0xf]
    %v211 = vld [vmem:[%s1 + $0x28] sm:$0xf]
    %v212 = vld [vmem:[%s1 + $0x2c] sm:$0xf]
    %v213 = vld [vmem:[%s1 + $0x30] sm:$0xf]
    %v214 = vld [vmem:[%s1 + $0x34] sm:$0xf]
    %v215 = vld [vmem:[%s1 + $0x38] sm:$0xf]
    %v216 = vld [vmem:[%s1 + $0x3c] sm:$0xf]
    %v217 = vld [vmem:[%s1 + $0x40] sm:$0xf]
    %v218 = vld [vmem:[%s1 + $0x44] sm:$0xf]
    %v219 = vld [vmem:[%s1 + $0x48] sm:$0xf]
    %v220 = vld [vmem:[%s1 + $0x4c] sm:$0xf]
    %v221 = vld [vmem:[%s1 + $0x50] sm:$0xf]
    %v222 = vld [vmem:[%s1 + $0x54] sm:$0xf]
    %v223 = vld [vmem:[%s1 + $0x58] sm:$0xf]
    %v224 = vld [vmem:[%s1 + $0x5c] sm:$0xf]
    %v225 = vld [vmem:[%s1 + $0x60] sm:$0xf]
    %v226 = vld [vmem:[%s1 + $0x64] sm:$0xf]
    %v227 = vld [vmem:[%s1 + $0x68] sm:$0xf]
    %v228 = vld [vmem:[%s1 + $0x6c] sm:$0xf]
    %v229 = vld [vmem:[%s1 + $0x70] sm:$0xf]
    %v230 = vld [vmem:[%s1 + $0x74] sm:$0xf]
    %v231 = vld [vmem:[%s1 + $0x78] sm:$0xf]
    %v232 = vld [vmem:[%s1 + $0x7c] sm:$0xf]
    %v233 = vld [vmem:[%s1 + $0x80] sm:$0xf]
    %v234 = vld [vmem:[%s1 + $0x84] sm:$0xf]
    %v235 = vld [vmem:[%s1 + $0x88] sm:$0xf]
    %v236 = vld [vmem:[%s1 + $0x8c] sm:$0xf]
    %v237 = vld [vmem:[%s1 + $0x90] sm:$0xf]
    %v238 = vld [vmem:[%s1 + $0x94] sm:$0xf]
    %v239 = vld [vmem:[%s1 + $0x98] sm:$0xf]
    %v240 = vld [vmem:[%s1 + $0x9c] sm:$0xf]
    %v241 = vld [vmem:[%s1 + $0xa0] sm:$0xf]
    %v242 = vld [vmem:[%s1 + $0xa4] sm:$0xf]
    %v243 = vld [vmem:[%s1 + $0xa8] sm:$0xf]
    %v244 = vld [vmem:[%s1 + $0xac] sm:$0xf]
    %v245 = vld [vmem:[%s1 + $0xb0] sm:$0xf]
    %v246 = vld [vmem:[%s1 + $0xb4] sm:$0xf]
    %v247 = vld [vmem:[%s1 + $0xb8] sm:$0xf]
    %v248 = vld [vmem:[%s1 + $0xbc] sm:$0xf]
    %v249 = vld [vmem:[%s1 + $0xc0] sm:$0xf]
    %v250 = vld [vmem:[%s1 + $0xc4] sm:$0xf]
    %v251 = vld [vmem:[%s1 + $0xc8] sm:$0xf]
    %v252 = vld [vmem:[%s1 + $0xcc] sm:$0xf]
    %v253 = vld [vmem:[%s1 + $0xd0] sm:$0xf]
    %v254 = vld [vmem:[%s1 + $0xd4] sm:$0xf]
    %v255 = vld [vmem:[%s1 + $0xd8] sm:$0xf]
    %v256 = vld [vmem:[%s1 + $0xdc] sm:$0xf]
    %v257 = vld [vmem:[%s1 + $0xe0] sm:$0xf]
    %v258 = vld [vmem:[%s1 + $0xe4] sm:$0xf]
    %v259 = vld [vmem:[%s1 + $0xe8] sm:$0xf]
    %v260 = vld [vmem:[%s1 + $0xec] sm:$0xf]
    %v261 = vld [vmem:[%s1 + $0xf0] sm:$0xf]
    %v262 = vld [vmem:[%s1 + $0xf4] sm:$0xf]
    %v263 = vld [vmem:[%s1 + $0xf8] sm:$0xf]
    %v264 = vld [vmem:[%s1 + $0xfc] sm:$0xf]
    %v265 = vld [vmem:[%s1 + $0x100] sm:$0xf]
    %v266 = vld [vmem:[%s1 + $0x104] sm:$0xf]
    %v267 = vld [vmem:[%s1 + $0x108] sm:$0xf]
    %v268 = vld [vmem:[%s1 + $0x10c] sm:$0xf]
    %v269 = vld [vmem:[%s1 + $0x110] sm:$0xf]
    %v270 = vld [vmem:[%s1 + $0x114] sm:$0xf]
    %v271 = vld [vmem:[%s1 + $0x118] sm:$0xf]
    %v272 = vld [vmem:[%s1 + $0x11c] sm:$0xf]
    %v273 = vld [vmem:[%s1 + $0x120] sm:$0xf]
    %v274 = vld [vmem:[%s1 + $0x124] sm:$0xf]
    %v275 = vld [vmem:[%s1 + $0x128] sm:$0xf]
    %v276 = vld [vmem:[%s1 + $0x12c] sm:$0xf]
    %v277 = vld [vmem:[%s1 + $0x130] sm:$0xf]
    %v278 = vld [vmem:[%s1 + $0x134] sm:$0xf]
    %v279 = vld [vmem:[%s1 + $0x138] sm:$0xf]
    %v280 = vld [vmem:[%s1 + $0x13c] sm:$0xf]
    %v281 = vld [vmem:[%s1 + $0x140] sm:$0xf]
    %v282 = vld [vmem:[%s1 + $0x144] sm:$0xf]
    %v283 = vld [vmem:[%s1 + $0x148] sm:$0xf]
    %v284 = vld [vmem:[%s1 + $0x14c] sm:$0xf]
    %v285 = vld [vmem:[%s1 + $0x150] sm:$0xf]
    %v286 = vld [vmem:[%s1 + $0x154] sm:$0xf]
    %v287 = vld [vmem:[%s1 + $0x158] sm:$0xf]
    %v288 = vld [vmem:[%s1 + $0x15c] sm:$0xf]
    %v289 = vld [vmem:[%s1 + $0x160] sm:$0xf]
    %v290 = vld [vmem:[%s1 + $0x164] sm:$0xf]
    %v291 = vld [vmem:[%s1 + $0x168] sm:$0xf]
    %v292 = vld [vmem:[%s1 + $0x16c] sm:$0xf]
    %v293 = vld [vmem:[%s1 + $0x170] sm:$0xf]
    %v294 = vld [vmem:[%s1 + $0x174] sm:$0xf]
    %v295 = vld [vmem:[%s1 + $0x178] sm:$0xf]
    %v296 = vld [vmem:[%s1 + $0x17c] sm:$0xf]
    %v297 = vld [vmem:[%s1 + $0x180] sm:$0xf]
    %v298 = vld [vmem:[%s1 + $0x184] sm:$0xf]
    %v299 = vld [vmem:[%s1 + $0x188] sm:$0xf]
    %v300 = vld [vmem:[%s1 + $0x18c] sm:$0xf]
    %v301 = vld [vmem:[%s1 + $0x190] sm:$0xf]
    %v302 = vld [vmem:[%s1 + $0x194] sm:$0xf]
    %v303 = vld [vmem:[%s1 + $0x198] sm:$0xf]
    %v304 = vld [vmem:[%s1 + $0x19c] sm:$0xf]
    %v305 = vld [vmem:[%s1 + $0x1a0] sm:$0xf]
    %v306 = vld [vmem:[%s1 + $0x1a4] sm:$0xf]
    %v307 = vld [vmem:[%s1 + $0x1a8] sm:$0xf]
    %v308 = vld [vmem:[%s1 + $0x1ac] sm:$0xf]
    %v309 = vld [vmem:[%s1 + $0x1b0] sm:$0xf]
    %v310 = vld [vmem:[%s1 + $0x1b4] sm:$0xf]
    %v311 = vld [vmem:[%s1 + $0x1b8] sm:$0xf]
    %v312 = vld [vmem:[%s1 + $0x1bc] sm:$0xf]
    %v313 = vld [vmem:[%s1 + $0x1c0] sm:$0xf]
    %v314 = vld [vmem:[%s1 + $0x1c4] sm:$0xf]
    %v315 = vld [vmem:[%s1 + $0x1c8] sm:$0xf]
    %v316 = vld [vmem:[%s1 + $0x1cc] sm:$0xf]
    %v317 = vld [vmem:[%s1 + $0x1d0] sm:$0xf]
    %v318 = vld [vmem:[%s1 + $0x1d4] sm:$0xf]
    %v319 = vld [vmem:[%s1 + $0x1d8] sm:$0xf]
    %v320 = vld [vmem:[%s1 + $0x1dc] sm:$0xf]
    %v321 = vld [vmem:[%s1 + $0x1e0] sm:$0xf]
    %v322 = vld [vmem:[%s1 + $0x1e4] sm:$0xf]
    %v323 = vld [vmem:[%s1 + $0x1e8] sm:$0xf]
    %v324 = vld [vmem:[%s1 + $0x1ec] sm:$0xf]
    %v325 = vld [vmem:[%s1 + $0x1f0] sm:$0xf]
    %v326 = vld [vmem:[%s1 + $0x1f4] sm:$0xf]
    %v327 = vld [vmem:[%s1 + $0x1f8] sm:$0xf]
    %v328 = vld [vmem:[%s1 + $0x1fc] sm:$0xf]
    %v329 = vld [vmem:[%s1 + $0x200] sm:$0xf]
    %v330 = vld [vmem:[%s1 + $0x204] sm:$0xf]
    %v331 = vld [vmem:[%s1 + $0x208] sm:$0xf]
    %v332 = vld [vmem:[%s1 + $0x20c] sm:$0xf]
    %v333 = vld [vmem:[%s1 + $0x210] sm:$0xf]
    %v334 = vld [vmem:[%s1 + $0x214] sm:$0xf]
    %v335 = vld [vmem:[%s1 + $0x218] sm:$0xf]
    %v336 = vld [vmem:[%s1 + $0x21c] sm:$0xf]
    %v337 = vld [vmem:[%s1 + $0x220] sm:$0xf]
    %v338 = vld [vmem:[%s1 + $0x224] sm:$0xf]
    %v339 = vld [vmem:[%s1 + $0x228] sm:$0xf]
    %v340 = vld [vmem:[%s1 + $0x22c] sm:$0xf]
    %v341 = vld [vmem:[%s1 + $0x230] sm:$0xf]
    %v342 = vld [vmem:[%s1 + $0x234] sm:$0xf]
    %v343 = vld [vmem:[%s1 + $0x238] sm:$0xf]
    %v344 = vld [vmem:[%s1 + $0x23c] sm:$0xf]
    %v345 = vld [vmem:[%s1 + $0x240] sm:$0xf]
    %v346 = vld [vmem:[%s1 + $0x244] sm:$0xf]
    %v347 = vld [vmem:[%s1 + $0x248] sm:$0xf]
    %v348 = vld [vmem:[%s1 + $0x24c] sm:$0xf]
    %v349 = vld [vmem:[%s1 + $0x250] sm:$0xf]
    %v350 = vld [vmem:[%s1 + $0x254] sm:$0xf]
    %v351 = vld [vmem:[%s1 + $0x258] sm:$0xf]
    %v352 = vld [vmem:[%s1 + $0x25c] sm:$0xf]
    %v353 = vld [vmem:[%s1 + $0x260] sm:$0xf]
    %v354 = vld [vmem:[%s1 + $0x264] sm:$0xf]
    %v355 = vld [vmem:[%s1 + $0x268] sm:$0xf]
    %v356 = vld [vmem:[%s1 + $0x26c] sm:$0xf]
    %v357 = vld [vmem:[%s1 + $0x270] sm:$0xf]
    %v358 = vld [vmem:[%s1 + $0x274] sm:$0xf]
    %v359 = vld [vmem:[%s1 + $0x278] sm:$0xf]
    %v360 = vld [vmem:[%s1 + $0x27c] sm:$0xf]
    %v361 = vld [vmem:[%s1 + $0x280] sm:$0xf]
    %v362 = vld [vmem:[%s1 + $0x284] sm:$0xf]
    %v363 = vld [vmem:[%s1 + $0x288] sm:$0xf]
    %v364 = vld [vmem:[%s1 + $0x28c] sm:$0xf]
    %v365 = vld [vmem:[%s1 + $0x290] sm:$0xf]
    %v366 = vld [vmem:[%s1 + $0x294] sm:$0xf]
    %v367 = vld [vmem:[%s1 + $0x298] sm:$0xf]
    %v368 = vld [vmem:[%s1 + $0x29c] sm:$0xf]
    %v369 = vld [vmem:[%s1 + $0x2a0] sm:$0xf]
    %v370 = vld [vmem:[%s1 + $0x2a4] sm:$0xf]
    %v371 = vld [vmem:[%s1 + $0x2a8] sm:$0xf]
    %v372 = vld [vmem:[%s1 + $0x2ac] sm:$0xf]
    %v373 = vld [vmem:[%s1 + $0x2b0] sm:$0xf]
    %v374 = vld [vmem:[%s1 + $0x2b4] sm:$0xf]
    %v375 = vld [vmem:[%s1 + $0x2b8] sm:$0xf]
    %v376 = vld [vmem:[%s1 + $0x2bc] sm:$0xf]
    %v377 = vld [vmem:[%s1 + $0x2c0] sm:$0xf]
    %v378 = vld [vmem:[%s1 + $0x2c4] sm:$0xf]
    %v379 = vld [vmem:[%s1 + $0x2c8] sm:$0xf]
    %v380 = vld [vmem:[%s1 + $0x2cc] sm:$0xf]
    %v381 = vld [vmem:[%s1 + $0x2d0] sm:$0xf]
    %v382 = vld [vmem:[%s1 + $0x2d4] sm:$0xf]
    %v383 = vld [vmem:[%s1 + $0x2d8] sm:$0xf]
    %v384 = vld [vmem:[%s1 + $0x2dc] sm:$0xf]
    %v385 = vld [vmem:[%s1 + $0x2e0] sm:$0xf]
    %v386 = vld [vmem:[%s1 + $0x2e4] sm:$0xf]
    %v387 = vld [vmem:[%s1 + $0x2e8] sm:$0xf]
    %v388 = vld [vmem:[%s1 + $0x2ec] sm:$0xf]
    %v389 = vld [vmem:[%s1 + $0x2f0] sm:$0xf]
    %v390 = vld [vmem:[%s1 + $0x2f4] sm:$0xf]
    %v391 = vld [vmem:[%s1 + $0x2f8] sm:$0xf]
    %v392 = vld [vmem:[%s1 + $0x2fc] sm:$0xf]
    %v393 = vld [vmem:[%s1 + $0x300] sm:$0xf]
    %v394 = vld [vmem:[%s1 + $0x304] sm:$0xf]
    %v395 = vld [vmem:[%s1 + $0x308] sm:$0xf]
    %v396 = vld [vmem:[%s1 + $0x30c] sm:$0xf]
    %v397 = vld [vmem:[%s1 + $0x310] sm:$0xf]
    %v398 = vld [vmem:[%s1 + $0x314] sm:$0xf]
    %v399 = vld [vmem:[%s1 + $0x318] sm:$0xf]
    %v400 = vld [vmem:[%s1 + $0x31c] sm:$0xf]
    %v401 = vld [vmem:[%s1 + $0x320] sm:$0xf]
    %v402 = vld [vmem:[%s1 + $0x324] sm:$0xf]
    %v403 = vld [vmem:[%s1 + $0x328] sm:$0xf]
    %v404 = vld [vmem:[%s1 + $0x32c] sm:$0xf]
    %v405 = vld [vmem:[%s1 + $0x330] sm:$0xf]
    %v406 = vld [vmem:[%s1 + $0x334] sm:$0xf]
    %v407 = vld [vmem:[%s1 + $0x338] sm:$0xf]
    %v408 = vld [vmem:[%s1 + $0x33c] sm:$0xf]
    %v409 = vld [vmem:[%s1 + $0x340] sm:$0xf]
    %v410 = vld [vmem:[%s1 + $0x344] sm:$0xf]
    %v411 = vld [vmem:[%s1 + $0x348] sm:$0xf]
    %v412 = vld [vmem:[%s1 + $0x34c] sm:$0xf]
    %v413 = vld [vmem:[%s1 + $0x350] sm:$0xf]
    %v414 = vld [vmem:[%s1 + $0x354] sm:$0xf]
    %v415 = vld [vmem:[%s1 + $0x358] sm:$0xf]
    %v416 = vld [vmem:[%s1 + $0x35c] sm:$0xf]
    %v417 = vld [vmem:[%s1 + $0x360] sm:$0xf]
    %v418 = vld [vmem:[%s1 + $0x364] sm:$0xf]
    %v419 = vld [vmem:[%s1 + $0x368] sm:$0xf]
    %v420 = vld [vmem:[%s1 + $0x36c] sm:$0xf]
    %v421 = vld [vmem:[%s1 + $0x370] sm:$0xf]
    %v422 = vld [vmem:[%s1 + $0x374] sm:$0xf]
    %v423 = vld [vmem:[%s1 + $0x378] sm:$0xf]
    %v424 = vld [vmem:[%s1 + $0x37c] sm:$0xf]
    %v425 = vld [vmem:[%s1 + $0x380] sm:$0xf]
    %v426 = vld [vmem:[%s1 + $0x384] sm:$0xf]
    %v427 = vld [vmem:[%s1 + $0x388] sm:$0xf]
    %v428 = vld [vmem:[%s1 + $0x38c] sm:$0xf]
    %v429 = vld [vmem:[%s1 + $0x390] sm:$0xf]
    %v430 = vld [vmem:[%s1 + $0x394] sm:$0xf]
    %v431 = vld [vmem:[%s1 + $0x398] sm:$0xf]
    %v432 = vld [vmem:[%s1 + $0x39c] sm:$0xf]
    %v433 = vld [vmem:[%s1 + $0x3a0] sm:$0xf]
    %v434 = vld [vmem:[%s1 + $0x3a4] sm:$0xf]
    %v435 = vld [vmem:[%s1 + $0x3a8] sm:$0xf]
    %v436 = vld [vmem:[%s1 + $0x3ac] sm:$0xf]
    %v437 = vld [vmem:[%s1 + $0x3b0] sm:$0xf]
    %v438 = vld [vmem:[%s1 + $0x3b4] sm:$0xf]
    %v439 = vld [vmem:[%s1 + $0x3b8] sm:$0xf]
    %v440 = vld [vmem:[%s1 + $0x3bc] sm:$0xf]
    %v441 = vld [vmem:[%s1 + $0x3c0] sm:$0xf]
    %v442 = vld [vmem:[%s1 + $0x3c4] sm:$0xf]
    %v443 = vld [vmem:[%s1 + $0x3c8] sm:$0xf]
    %v444 = vld [vmem:[%s1 + $0x3cc] sm:$0xf]
    %v445 = vld [vmem:[%s1 + $0x3d0] sm:$0xf]
    %v446 = vld [vmem:[%s1 + $0x3d4] sm:$0xf]
    %v447 = vld [vmem:[%s1 + $0x3d8] sm:$0xf]
    %v448 = vld [vmem:[%s1 + $0x3dc] sm:$0xf]
    %v449 = vld [vmem:[%s1 + $0x3e0] sm:$0xf]
    %v450 = vld [vmem:[%s1 + $0x3e4] sm:$0xf]
    %v451 = vld [vmem:[%s1 + $0x3e8] sm:$0xf]
    %v452 = vld [vmem:[%s1 + $0x3ec] sm:$0xf]
    %v453 = vld [vmem:[%s1 + $0x3f0] sm:$0xf]
    %v454 = vld [vmem:[%s1 + $0x3f4] sm:$0xf]
    %v455 = vld [vmem:[%s1 + $0x3f8] sm:$0xf]
    %v456 = vld [vmem:[%s1 + $0x3fc] sm:$0xf]
    %v457 = vld [vmem:[%s1 + $0x400] sm:$0xf]
    %v458 = vld [vmem:[%s1 + $0x404] sm:$0xf]
    %v459 = vld [vmem:[%s1 + $0x408] sm:$0xf]
    %v460 = vld [vmem:[%s1 + $0x40c] sm:$0xf]
    %v461 = vld [vmem:[%s1 + $0x410] sm:$0xf]
    %v462 = vld [vmem:[%s1 + $0x414] sm:$0xf]
    %v463 = vld [vmem:[%s1 + $0x418] sm:$0xf]
    %v464 = vld [vmem:[%s1 + $0x41c] sm:$0xf]
    %v465 = vld [vmem:[%s1 + $0x420] sm:$0xf]
    %v466 = vld [vmem:[%s1 + $0x424] sm:$0xf]
    %v467 = vld [vmem:[%s1 + $0x428] sm:$0xf]
    %v468 = vld [vmem:[%s1 + $0x42c] sm:$0xf]
    %v469 = vld [vmem:[%s1 + $0x430] sm:$0xf]
    %v470 = vld [vmem:[%s1 + $0x434] sm:$0xf]
    %v471 = vld [vmem:[%s1 + $0x438] sm:$0xf]
    %v472 = vld [vmem:[%s1 + $0x43c] sm:$0xf]
    %v473 = vld [vmem:[%s1 + $0x440] sm:$0xf]
    %v474 = vld [vmem:[%s1 + $0x444] sm:$0xf]
    %v475 = vld [vmem:[%s1 + $0x448] sm:$0xf]
    %v476 = vld [vmem:[%s1 + $0x44c] sm:$0xf]
    %v477 = vld [vmem:[%s1 + $0x450] sm:$0xf]
    %v478 = vld [vmem:[%s1 + $0x454] sm:$0xf]
    %v479 = vld [vmem:[%s1 + $0x458] sm:$0xf]
    %v480 = vld [vmem:[%s1 + $0x45c] sm:$0xf]
    %v481 = vld [vmem:[%s1 + $0x460] sm:$0xf]
    %v482 = vld [vmem:[%s1 + $0x464] sm:$0xf]
    %v483 = vld [vmem:[%s1 + $0x468] sm:$0xf]
    %v484 = vld [vmem:[%s1 + $0x46c] sm:$0xf]
    %v485 = vld [vmem:[%s1 + $0x470] sm:$0xf]
    %v486 = vld [vmem:[%s1 + $0x474] sm:$0xf]
    %v487 = vld [vmem:[%s1 + $0x478] sm:$0xf]
    %v488 = vld [vmem:[%s1 + $0x47c] sm:$0xf]
    %v489 = vld [vmem:[%s1 + $0x480] sm:$0xf]
    %v490 = vld [vmem:[%s1 + $0x484] sm:$0xf]
    %v491 = vld [vmem:[%s1 + $0x488] sm:$0xf]
    %v492 = vld [vmem:[%s1 + $0x48c] sm:$0xf]
    %v493 = vld [vmem:[%s1 + $0x490] sm:$0xf]
    %v494 = vld [vmem:[%s1 + $0x494] sm:$0xf]
    %v495 = vld [vmem:[%s1 + $0x498] sm:$0xf]
    %v496 = vld [vmem:[%s1 + $0x49c] sm:$0xf]
    %v497 = vld [vmem:[%s1 + $0x4a0] sm:$0xf]
    %v498 = vld [vmem:[%s1 + $0x4a4] sm:$0xf]
    %v499 = vld [vmem:[%s1 + $0x4a8] sm:$0xf]
    %v500 = vld [vmem:[%s1 + $0x4ac] sm:$0xf]
    %v501 = vld [vmem:[%s1 + $0x4b0] sm:$0xf]
    %v502 = vld [vmem:[%s1 + $0x4b4] sm:$0xf]
    %v503 = vld [vmem:[%s1 + $0x4b8] sm:$0xf]
    %v504 = vld [vmem:[%s1 + $0x4bc] sm:$0xf]
    %v505 = vld [vmem:[%s1 + $0x4c0] sm:$0xf]
    %v506 = vld [vmem:[%s1 + $0x4c4] sm:$0xf]
    %v507 = vld [vmem:[%s1 + $0x4c8] sm:$0xf]
    %v508 = vld [vmem:[%s1 + $0x4cc] sm:$0xf]
    %v509 = vld [vmem:[%s1 + $0x4d0] sm:$0xf]
    %v510 = vld [vmem:[%s1 + $0x4d4] sm:$0xf]
    %v511 = vld [vmem:[%s1 + $0x4d8] sm:$0xf]
    %v512 = vld [vmem:[%s1 + $0x4dc] sm:$0xf]
    %v513 = vld [vmem:[%s1 + $0x4e0] sm:$0xf]
    %v514 = vld [vmem:[%s1 + $0x4e4] sm:$0xf]
    %v515 = vld [vmem:[%s1 + $0x4e8] sm:$0xf]
    %v516 = vld [vmem:[%s1 + $0x4ec] sm:$0xf]
    %v517 = vld [vmem:[%s1 + $0x4f0] sm:$0xf]
    %v518 = vld [vmem:[%s1 + $0x4f4] sm:$0xf]
    %v519 = vld [vmem:[%s1 + $0x4f8] sm:$0xf]
    %v520 = vld [vmem:[%s1 + $0x4fc] sm:$0xf]
    %v521 = vld [vmem:[%s1 + $0x500] sm:$0xf]
    %v522 = vld [vmem:[%s1 + $0x504] sm:$0xf]
    %v523 = vld [vmem:[%s1 + $0x508] sm:$0xf]
    %v524 = vld [vmem:[%s1 + $0x50c] sm:$0xf]
    %v525 = vld [vmem:[%s1 + $0x510] sm:$0xf]
    %v526 = vld [vmem:[%s1 + $0x514] sm:$0xf]
    %v527 = vld [vmem:[%s1 + $0x518] sm:$0xf]
    %v528 = vld [vmem:[%s1 + $0x51c] sm:$0xf]
    %v529 = vld [vmem:[%s1 + $0x520] sm:$0xf]
    %v530 = vld [vmem:[%s1 + $0x524] sm:$0xf]
    %v531 = vld [vmem:[%s1 + $0x528] sm:$0xf]
    %v532 = vld [vmem:[%s1 + $0x52c] sm:$0xf]
    %v533 = vld [vmem:[%s1 + $0x530] sm:$0xf]
    %v534 = vld [vmem:[%s1 + $0x534] sm:$0xf]
    %v535 = vld [vmem:[%s1 + $0x538] sm:$0xf]
    %v536 = vld [vmem:[%s1 + $0x53c] sm:$0xf]
    %v537 = vld [vmem:[%s1 + $0x540] sm:$0xf]
    %v538 = vld [vmem:[%s1 + $0x544] sm:$0xf]
    %v539 = vld [vmem:[%s1 + $0x548] sm:$0xf]
    %v540 = vld [vmem:[%s1 + $0x54c] sm:$0xf]
    %v541 = vld [vmem:[%s1 + $0x550] sm:$0xf]
    %v542 = vld [vmem:[%s1 + $0x554] sm:$0xf]
    %v543 = vld [vmem:[%s1 + $0x558] sm:$0xf]
    %v544 = vld [vmem:[%s1 + $0x55c] sm:$0xf]
    %v545 = vld [vmem:[%s1 + $0x560] sm:$0xf]
    %v546 = vld [vmem:[%s1 + $0x564] sm:$0xf]
    %v547 = vld [vmem:[%s1 + $0x568] sm:$0xf]
    %v548 = vld [vmem:[%s1 + $0x56c] sm:$0xf]
    %v549 = vld [vmem:[%s1 + $0x570] sm:$0xf]
    %v550 = vld [vmem:[%s1 + $0x574] sm:$0xf]
    %v551 = vld [vmem:[%s1 + $0x578] sm:$0xf]
    %v552 = vld [vmem:[%s1 + $0x57c] sm:$0xf]
    %v553 = vld [vmem:[%s1 + $0x580] sm:$0xf]
    %v554 = vld [vmem:[%s1 + $0x584] sm:$0xf]
    %v555 = vld [vmem:[%s1 + $0x588] sm:$0xf]
    %v556 = vld [vmem:[%s1 + $0x58c] sm:$0xf]
    %v557 = vld [vmem:[%s1 + $0x590] sm:$0xf]
    %v558 = vld [vmem:[%s1 + $0x594] sm:$0xf]
    %v559 = vld [vmem:[%s1 + $0x598] sm:$0xf]
    %v560 = vld [vmem:[%s1 + $0x59c] sm:$0xf]
    %v561 = vld [vmem:[%s1 + $0x5a0] sm:$0xf]
    %v562 = vld [vmem:[%s1 + $0x5a4] sm:$0xf]
    %v563 = vld [vmem:[%s1 + $0x5a8] sm:$0xf]
    %v564 = vld [vmem:[%s1 + $0x5ac] sm:$0xf]
    %v565 = vld [vmem:[%s1 + $0x5b0] sm:$0xf]
    %v566 = vld [vmem:[%s1 + $0x5b4] sm:$0xf]
    %v567 = vld [vmem:[%s1 + $0x5b8] sm:$0xf]
    %v568 = vld [vmem:[%s1 + $0x5bc] sm:$0xf]
    %v569 = vld [vmem:[%s1 + $0x5c0] sm:$0xf]
    %v570 = vld [vmem:[%s1 + $0x5c4] sm:$0xf]
    %v571 = vld [vmem:[%s1 + $0x5c8] sm:$0xf]
    %v572 = vld [vmem:[%s1 + $0x5cc] sm:$0xf]
    %v573 = vld [vmem:[%s1 + $0x5d0] sm:$0xf]
    %v574 = vld [vmem:[%s1 + $0x5d4] sm:$0xf]
    %v575 = vld [vmem:[%s1 + $0x5d8] sm:$0xf]
    %v576 = vld [vmem:[%s1 + $0x5dc] sm:$0xf]
    %v577 = vld [vmem:[%s1 + $0x5e0] sm:$0xf]
    %v578 = vld [vmem:[%s1 + $0x5e4] sm:$0xf]
    %v579 = vld [vmem:[%s1 + $0x5e8] sm:$0xf]
    %v580 = vld [vmem:[%s1 + $0x5ec] sm:$0xf]
    %v581 = vld [vmem:[%s1 + $0x5f0] sm:$0xf]
    %v582 = vld [vmem:[%s1 + $0x5f4] sm:$0xf]
    %v583 = vld [vmem:[%s1 + $0x5f8] sm:$0xf]
    %v584 = vld [vmem:[%s1 + $0x5fc] sm:$0xf]
    %v585 = vld [vmem:[%s1 + $0x600] sm:$0xf]
    %v586 = vld [vmem:[%s1 + $0x604] sm:$0xf]
    %v587 = vld [vmem:[%s1 + $0x608] sm:$0xf]
    %v588 = vld [vmem:[%s1 + $0x60c] sm:$0xf]
    %v589 = vld [vmem:[%s1 + $0x610] sm:$0xf]
    %v590 = vld [vmem:[%s1 + $0x614] sm:$0xf]
    %v591 = vld [vmem:[%s1 + $0x618] sm:$0xf]
    %v592 = vld [vmem:[%s1 + $0x61c] sm:$0xf]
    %v593 = vld [vmem:[%s1 + $0x620] sm:$0xf]
    %v594 = vld [vmem:[%s1 + $0x624] sm:$0xf]
    %v595 = vld [vmem:[%s1 + $0x628] sm:$0xf]
    %v596 = vld [vmem:[%s1 + $0x62c] sm:$0xf]
    %v597 = vld [vmem:[%s1 + $0x630] sm:$0xf]
    %v598 = vld [vmem:[%s1 + $0x634] sm:$0xf]
    %v599 = vld [vmem:[%s1 + $0x638] sm:$0xf]
    %v600 = vld [vmem:[%s1 + $0x63c] sm:$0xf]
    %v601 = vld [vmem:[%s2] sm:$0x1]
    %v603 = vlaneseq
    %v604 = vshrl.u32 %v603, 7
    %v605 = vsub.s32 0, %v604
    %v606 = vrot.slane %v601, %v605
    %v1008 = vunpack.c.l.b16 %v201
    %v1009 = vunpack.c.l.b16 %v202
    %v1010 = vunpack.c.l.b16 %v203
    %v1011 = vunpack.c.l.b16 %v204
    %v1012 = vunpack.c.l.b16 %v205
    %v1013 = vunpack.c.l.b16 %v206
    %v1014 = vunpack.c.l.b16 %v207
    %v1015 = vunpack.c.l.b16 %v208
    %v1016 = vunpack.c.l.b16 %v209
    %v1017 = vunpack.c.l.b16 %v210
    %v1018 = vunpack.c.l.b16 %v211
    %v1019 = vunpack.c.l.b16 %v212
    %v1020 = vunpack.c.l.b16 %v213
    %v1021 = vunpack.c.l.b16 %v214
    %v1022 = vunpack.c.l.b16 %v215
    %v1023 = vunpack.c.l.b16 %v216
    %v1024 = vunpack.c.l.b16 %v217
    %v1025 = vunpack.c.l.b16 %v218
    %v1026 = vunpack.c.l.b16 %v219
    %v1027 = vunpack.c.l.b16 %v220
    %v1028 = vunpack.c.l.b16 %v221
    %v1029 = vunpack.c.l.b16 %v222
    %v1030 = vunpack.c.l.b16 %v223
    %v1031 = vunpack.c.l.b16 %v224
    %v1032 = vunpack.c.l.b16 %v225
    %v1033 = vunpack.c.l.b16 %v226
    %v1034 = vunpack.c.l.b16 %v227
    %v1035 = vunpack.c.l.b16 %v228
    %v1036 = vunpack.c.l.b16 %v229
    %v1037 = vunpack.c.l.b16 %v230
    %v1038 = vunpack.c.l.b16 %v231
    %v1039 = vunpack.c.l.b16 %v232
    %v1040 = vunpack.c.l.b16 %v233
    %v1041 = vunpack.c.l.b16 %v234
    %v1042 = vunpack.c.l.b16 %v235
    %v1043 = vunpack.c.l.b16 %v236
    %v1044 = vunpack.c.l.b16 %v237
    %v1045 = vunpack.c.l.b16 %v238
    %v1046 = vunpack.c.l.b16 %v239
    %v1047 = vunpack.c.l.b16 %v240
    %v1048 = vunpack.c.l.b16 %v241
    %v1049 = vunpack.c.l.b16 %v242
    %v1050 = vunpack.c.l.b16 %v243
    %v1051 = vunpack.c.l.b16 %v244
    %v1052 = vunpack.c.l.b16 %v245
    %v1053 = vunpack.c.l.b16 %v246
    %v1054 = vunpack.c.l.b16 %v247
    %v1055 = vunpack.c.l.b16 %v248
    %v1056 = vunpack.c.l.b16 %v249
    %v1057 = vunpack.c.l.b16 %v250
    %v1058 = vunpack.c.l.b16 %v251
    %v1059 = vunpack.c.l.b16 %v252
    %v1060 = vunpack.c.l.b16 %v253
    %v1061 = vunpack.c.l.b16 %v254
    %v1062 = vunpack.c.l.b16 %v255
    %v1063 = vunpack.c.l.b16 %v256
    %v1064 = vunpack.c.l.b16 %v257
    %v1065 = vunpack.c.l.b16 %v258
    %v1066 = vunpack.c.l.b16 %v259
    %v1067 = vunpack.c.l.b16 %v260
    %v1068 = vunpack.c.l.b16 %v261
    %v1069 = vunpack.c.l.b16 %v262
    %v1070 = vunpack.c.l.b16 %v263
    %v1071 = vunpack.c.l.b16 %v264
    %v1072 = vunpack.c.l.b16 %v265
    %v1073 = vunpack.c.l.b16 %v266
    %v1074 = vunpack.c.l.b16 %v267
    %v1075 = vunpack.c.l.b16 %v268
    %v1076 = vunpack.c.l.b16 %v269
    %v1077 = vunpack.c.l.b16 %v270
    %v1078 = vunpack.c.l.b16 %v271
    %v1079 = vunpack.c.l.b16 %v272
    %v1080 = vunpack.c.l.b16 %v273
    %v1081 = vunpack.c.l.b16 %v274
    %v1082 = vunpack.c.l.b16 %v275
    %v1083 = vunpack.c.l.b16 %v276
    %v1084 = vunpack.c.l.b16 %v277
    %v1085 = vunpack.c.l.b16 %v278
    %v1086 = vunpack.c.l.b16 %v279
    %v1087 = vunpack.c.l.b16 %v280
    %v1088 = vunpack.c.l.b16 %v281
    %v1089 = vunpack.c.l.b16 %v282
    %v1090 = vunpack.c.l.b16 %v283
    %v1091 = vunpack.c.l.b16 %v284
    %v1092 = vunpack.c.l.b16 %v285
    %v1093 = vunpack.c.l.b16 %v286
    %v1094 = vunpack.c.l.b16 %v287
    %v1095 = vunpack.c.l.b16 %v288
    %v1096 = vunpack.c.l.b16 %v289
    %v1097 = vunpack.c.l.b16 %v290
    %v1098 = vunpack.c.l.b16 %v291
    %v1099 = vunpack.c.l.b16 %v292
    %v1100 = vunpack.c.l.b16 %v293
    %v1101 = vunpack.c.l.b16 %v294
    %v1102 = vunpack.c.l.b16 %v295
    %v1103 = vunpack.c.l.b16 %v296
    %v1104 = vunpack.c.l.b16 %v297
    %v1105 = vunpack.c.l.b16 %v298
    %v1106 = vunpack.c.l.b16 %v299
    %v1107 = vunpack.c.l.b16 %v300
    %v1108 = vunpack.c.l.b16 %v301
    %v1109 = vunpack.c.l.b16 %v302
    %v1110 = vunpack.c.l.b16 %v303
    %v1111 = vunpack.c.l.b16 %v304
    %v1112 = vunpack.c.l.b16 %v305
    %v1113 = vunpack.c.l.b16 %v306
    %v1114 = vunpack.c.l.b16 %v307
    %v1115 = vunpack.c.l.b16 %v308
    %v1116 = vunpack.c.l.b16 %v309
    %v1117 = vunpack.c.l.b16 %v310
    %v1118 = vunpack.c.l.b16 %v311
    %v1119 = vunpack.c.l.b16 %v312
    %v1120 = vunpack.c.l.b16 %v313
    %v1121 = vunpack.c.l.b16 %v314
    %v1122 = vunpack.c.l.b16 %v315
    %v1123 = vunpack.c.l.b16 %v316
    %v1124 = vunpack.c.l.b16 %v317
    %v1125 = vunpack.c.l.b16 %v318
    %v1126 = vunpack.c.l.b16 %v319
    %v1127 = vunpack.c.l.b16 %v320
    %v1128 = vunpack.c.l.b16 %v321
    %v1129 = vunpack.c.l.b16 %v322
    %v1130 = vunpack.c.l.b16 %v323
    %v1131 = vunpack.c.l.b16 %v324
    %v1132 = vunpack.c.l.b16 %v325
    %v1133 = vunpack.c.l.b16 %v326
    %v1134 = vunpack.c.l.b16 %v327
    %v1135 = vunpack.c.l.b16 %v328
    %v1136 = vunpack.c.l.b16 %v329
    %v1137 = vunpack.c.l.b16 %v330
    %v1138 = vunpack.c.l.b16 %v331
    %v1139 = vunpack.c.l.b16 %v332
    %v1140 = vunpack.c.l.b16 %v333
    %v1141 = vunpack.c.l.b16 %v334
    %v1142 = vunpack.c.l.b16 %v335
    %v1143 = vunpack.c.l.b16 %v336
    %v1144 = vunpack.c.l.b16 %v337
    %v1145 = vunpack.c.l.b16 %v338
    %v1146 = vunpack.c.l.b16 %v339
    %v1147 = vunpack.c.l.b16 %v340
    %v1148 = vunpack.c.l.b16 %v341
    %v1149 = vunpack.c.l.b16 %v342
    %v1150 = vunpack.c.l.b16 %v343
    %v1151 = vunpack.c.l.b16 %v344
    %v1152 = vunpack.c.l.b16 %v345
    %v1153 = vunpack.c.l.b16 %v346
    %v1154 = vunpack.c.l.b16 %v347
    %v1155 = vunpack.c.l.b16 %v348
    %v1156 = vunpack.c.l.b16 %v349
    %v1157 = vunpack.c.l.b16 %v350
    %v1158 = vunpack.c.l.b16 %v351
    %v1159 = vunpack.c.l.b16 %v352
    %v1160 = vunpack.c.l.b16 %v353
    %v1161 = vunpack.c.l.b16 %v354
    %v1162 = vunpack.c.l.b16 %v355
    %v1163 = vunpack.c.l.b16 %v356
    %v1164 = vunpack.c.l.b16 %v357
    %v1165 = vunpack.c.l.b16 %v358
    %v1166 = vunpack.c.l.b16 %v359
    %v1167 = vunpack.c.l.b16 %v360
    %v1168 = vunpack.c.l.b16 %v361
    %v1169 = vunpack.c.l.b16 %v362
    %v1170 = vunpack.c.l.b16 %v363
    %v1171 = vunpack.c.l.b16 %v364
    %v1172 = vunpack.c.l.b16 %v365
    %v1173 = vunpack.c.l.b16 %v366
    %v1174 = vunpack.c.l.b16 %v367
    %v1175 = vunpack.c.l.b16 %v368
    %v1176 = vunpack.c.l.b16 %v369
    %v1177 = vunpack.c.l.b16 %v370
    %v1178 = vunpack.c.l.b16 %v371
    %v1179 = vunpack.c.l.b16 %v372
    %v1180 = vunpack.c.l.b16 %v373
    %v1181 = vunpack.c.l.b16 %v374
    %v1182 = vunpack.c.l.b16 %v375
    %v1183 = vunpack.c.l.b16 %v376
    %v1184 = vunpack.c.l.b16 %v377
    %v1185 = vunpack.c.l.b16 %v378
    %v1186 = vunpack.c.l.b16 %v379
    %v1187 = vunpack.c.l.b16 %v380
    %v1188 = vunpack.c.l.b16 %v381
    %v1189 = vunpack.c.l.b16 %v382
    %v1190 = vunpack.c.l.b16 %v383
    %v1191 = vunpack.c.l.b16 %v384
    %v1192 = vunpack.c.l.b16 %v385
    %v1193 = vunpack.c.l.b16 %v386
    %v1194 = vunpack.c.l.b16 %v387
    %v1195 = vunpack.c.l.b16 %v388
    %v1196 = vunpack.c.l.b16 %v389
    %v1197 = vunpack.c.l.b16 %v390
    %v1198 = vunpack.c.l.b16 %v391
    %v1199 = vunpack.c.l.b16 %v392
    %v1200 = vunpack.c.l.b16 %v393
    %v1201 = vunpack.c.l.b16 %v394
    %v1202 = vunpack.c.l.b16 %v395
    %v1203 = vunpack.c.l.b16 %v396
    %v1204 = vunpack.c.l.b16 %v397
    %v1205 = vunpack.c.l.b16 %v398
    %v1206 = vunpack.c.l.b16 %v399
    %v1207 = vunpack.c.l.b16 %v400
    %v1208 = vunpack.c.l.b16 %v401
    %v1209 = vunpack.c.l.b16 %v402
    %v1210 = vunpack.c.l.b16 %v403
    %v1211 = vunpack.c.l.b16 %v404
    %v1212 = vunpack.c.l.b16 %v405
    %v1213 = vunpack.c.l.b16 %v406
    %v1214 = vunpack.c.l.b16 %v407
    %v1215 = vunpack.c.l.b16 %v408
    %v1216 = vunpack.c.l.b16 %v409
    %v1217 = vunpack.c.l.b16 %v410
    %v1218 = vunpack.c.l.b16 %v411
    %v1219 = vunpack.c.l.b16 %v412
    %v1220 = vunpack.c.l.b16 %v413
    %v1221 = vunpack.c.l.b16 %v414
    %v1222 = vunpack.c.l.b16 %v415
    %v1223 = vunpack.c.l.b16 %v416
    %v1224 = vunpack.c.l.b16 %v417
    %v1225 = vunpack.c.l.b16 %v418
    %v1226 = vunpack.c.l.b16 %v419
    %v1227 = vunpack.c.l.b16 %v420
    %v1228 = vunpack.c.l.b16 %v421
    %v1229 = vunpack.c.l.b16 %v422
    %v1230 = vunpack.c.l.b16 %v423
    %v1231 = vunpack.c.l.b16 %v424
    %v1232 = vunpack.c.l.b16 %v425
    %v1233 = vunpack.c.l.b16 %v426
    %v1234 = vunpack.c.l.b16 %v427
    %v1235 = vunpack.c.l.b16 %v428
    %v1236 = vunpack.c.l.b16 %v429
    %v1237 = vunpack.c.l.b16 %v430
    %v1238 = vunpack.c.l.b16 %v431
    %v1239 = vunpack.c.l.b16 %v432
    %v1240 = vunpack.c.l.b16 %v433
    %v1241 = vunpack.c.l.b16 %v434
    %v1242 = vunpack.c.l.b16 %v435
    %v1243 = vunpack.c.l.b16 %v436
    %v1244 = vunpack.c.l.b16 %v437
    %v1245 = vunpack.c.l.b16 %v438
    %v1246 = vunpack.c.l.b16 %v439
    %v1247 = vunpack.c.l.b16 %v440
    %v1248 = vunpack.c.l.b16 %v441
    %v1249 = vunpack.c.l.b16 %v442
    %v1250 = vunpack.c.l.b16 %v443
    %v1251 = vunpack.c.l.b16 %v444
    %v1252 = vunpack.c.l.b16 %v445
    %v1253 = vunpack.c.l.b16 %v446
    %v1254 = vunpack.c.l.b16 %v447
    %v1255 = vunpack.c.l.b16 %v448
    %v1256 = vunpack.c.l.b16 %v449
    %v1257 = vunpack.c.l.b16 %v450
    %v1258 = vunpack.c.l.b16 %v451
    %v1259 = vunpack.c.l.b16 %v452
    %v1260 = vunpack.c.l.b16 %v453
    %v1261 = vunpack.c.l.b16 %v454
    %v1262 = vunpack.c.l.b16 %v455
    %v1263 = vunpack.c.l.b16 %v456
    %v1264 = vunpack.c.l.b16 %v457
    %v1265 = vunpack.c.l.b16 %v458
    %v1266 = vunpack.c.l.b16 %v459
    %v1267 = vunpack.c.l.b16 %v460
    %v1268 = vunpack.c.l.b16 %v461
    %v1269 = vunpack.c.l.b16 %v462
    %v1270 = vunpack.c.l.b16 %v463
    %v1271 = vunpack.c.l.b16 %v464
    %v1272 = vunpack.c.l.b16 %v465
    %v1273 = vunpack.c.l.b16 %v466
    %v1274 = vunpack.c.l.b16 %v467
    %v1275 = vunpack.c.l.b16 %v468
    %v1276 = vunpack.c.l.b16 %v469
    %v1277 = vunpack.c.l.b16 %v470
    %v1278 = vunpack.c.l.b16 %v471
    %v1279 = vunpack.c.l.b16 %v472
    %v1280 = vunpack.c.l.b16 %v473
    %v1281 = vunpack.c.l.b16 %v474
    %v1282 = vunpack.c.l.b16 %v475
    %v1283 = vunpack.c.l.b16 %v476
    %v1284 = vunpack.c.l.b16 %v477
    %v1285 = vunpack.c.l.b16 %v478
    %v1286 = vunpack.c.l.b16 %v479
    %v1287 = vunpack.c.l.b16 %v480
    %v1288 = vunpack.c.l.b16 %v481
    %v1289 = vunpack.c.l.b16 %v482
    %v1290 = vunpack.c.l.b16 %v483
    %v1291 = vunpack.c.l.b16 %v484
    %v1292 = vunpack.c.l.b16 %v485
    %v1293 = vunpack.c.l.b16 %v486
    %v1294 = vunpack.c.l.b16 %v487
    %v1295 = vunpack.c.l.b16 %v488
    %v1296 = vunpack.c.l.b16 %v489
    %v1297 = vunpack.c.l.b16 %v490
    %v1298 = vunpack.c.l.b16 %v491
    %v1299 = vunpack.c.l.b16 %v492
    %v1300 = vunpack.c.l.b16 %v493
    %v1301 = vunpack.c.l.b16 %v494
    %v1302 = vunpack.c.l.b16 %v495
    %v1303 = vunpack.c.l.b16 %v496
    %v1304 = vunpack.c.l.b16 %v497
    %v1305 = vunpack.c.l.b16 %v498
    %v1306 = vunpack.c.l.b16 %v499
    %v1307 = vunpack.c.l.b16 %v500
    %v1308 = vunpack.c.l.b16 %v501
    %v1309 = vunpack.c.l.b16 %v502
    %v1310 = vunpack.c.l.b16 %v503
    %v1311 = vunpack.c.l.b16 %v504
    %v1312 = vunpack.c.l.b16 %v505
    %v1313 = vunpack.c.l.b16 %v506
    %v1314 = vunpack.c.l.b16 %v507
    %v1315 = vunpack.c.l.b16 %v508
    %v1316 = vunpack.c.l.b16 %v509
    %v1317 = vunpack.c.l.b16 %v510
    %v1318 = vunpack.c.l.b16 %v511
    %v1319 = vunpack.c.l.b16 %v512
    %v1320 = vunpack.c.l.b16 %v513
    %v1321 = vunpack.c.l.b16 %v514
    %v1322 = vunpack.c.l.b16 %v515
    %v1323 = vunpack.c.l.b16 %v516
    %v1324 = vunpack.c.l.b16 %v517
    %v1325 = vunpack.c.l.b16 %v518
    %v1326 = vunpack.c.l.b16 %v519
    %v1327 = vunpack.c.l.b16 %v520
    %v1328 = vunpack.c.l.b16 %v521
    %v1329 = vunpack.c.l.b16 %v522
    %v1330 = vunpack.c.l.b16 %v523
    %v1331 = vunpack.c.l.b16 %v524
    %v1332 = vunpack.c.l.b16 %v525
    %v1333 = vunpack.c.l.b16 %v526
    %v1334 = vunpack.c.l.b16 %v527
    %v1335 = vunpack.c.l.b16 %v528
    %v1336 = vunpack.c.l.b16 %v529
    %v1337 = vunpack.c.l.b16 %v530
    %v1338 = vunpack.c.l.b16 %v531
    %v1339 = vunpack.c.l.b16 %v532
    %v1340 = vunpack.c.l.b16 %v533
    %v1341 = vunpack.c.l.b16 %v534
    %v1342 = vunpack.c.l.b16 %v535
    %v1343 = vunpack.c.l.b16 %v536
    %v1344 = vunpack.c.l.b16 %v537
    %v1345 = vunpack.c.l.b16 %v538
    %v1346 = vunpack.c.l.b16 %v539
    %v1347 = vunpack.c.l.b16 %v540
    %v1348 = vunpack.c.l.b16 %v541
    %v1349 = vunpack.c.l.b16 %v542
    %v1350 = vunpack.c.l.b16 %v543
    %v1351 = vunpack.c.l.b16 %v544
    %v1352 = vunpack.c.l.b16 %v545
    %v1353 = vunpack.c.l.b16 %v546
    %v1354 = vunpack.c.l.b16 %v547
    %v1355 = vunpack.c.l.b16 %v548
    %v1356 = vunpack.c.l.b16 %v549
    %v1357 = vunpack.c.l.b16 %v550
    %v1358 = vunpack.c.l.b16 %v551
    %v1359 = vunpack.c.l.b16 %v552
    %v1360 = vunpack.c.l.b16 %v553
    %v1361 = vunpack.c.l.b16 %v554
    %v1362 = vunpack.c.l.b16 %v555
    %v1363 = vunpack.c.l.b16 %v556
    %v1364 = vunpack.c.l.b16 %v557
    %v1365 = vunpack.c.l.b16 %v558
    %v1366 = vunpack.c.l.b16 %v559
    %v1367 = vunpack.c.l.b16 %v560
    %v1368 = vunpack.c.l.b16 %v561
    %v1369 = vunpack.c.l.b16 %v562
    %v1370 = vunpack.c.l.b16 %v563
    %v1371 = vunpack.c.l.b16 %v564
    %v1372 = vunpack.c.l.b16 %v565
    %v1373 = vunpack.c.l.b16 %v566
    %v1374 = vunpack.c.l.b16 %v567
    %v1375 = vunpack.c.l.b16 %v568
    %v1376 = vunpack.c.l.b16 %v569
    %v1377 = vunpack.c.l.b16 %v570
    %v1378 = vunpack.c.l.b16 %v571
    %v1379 = vunpack.c.l.b16 %v572
    %v1380 = vunpack.c.l.b16 %v573
    %v1381 = vunpack.c.l.b16 %v574
    %v1382 = vunpack.c.l.b16 %v575
    %v1383 = vunpack.c.l.b16 %v576
    %v1384 = vunpack.c.l.b16 %v577
    %v1385 = vunpack.c.l.b16 %v578
    %v1386 = vunpack.c.l.b16 %v579
    %v1387 = vunpack.c.l.b16 %v580
    %v1388 = vunpack.c.l.b16 %v581
    %v1389 = vunpack.c.l.b16 %v582
    %v1390 = vunpack.c.l.b16 %v583
    %v1391 = vunpack.c.l.b16 %v584
    %v1392 = vunpack.c.l.b16 %v585
    %v1393 = vunpack.c.l.b16 %v586
    %v1394 = vunpack.c.l.b16 %v587
    %v1395 = vunpack.c.l.b16 %v588
    %v1396 = vunpack.c.l.b16 %v589
    %v1397 = vunpack.c.l.b16 %v590
    %v1398 = vunpack.c.l.b16 %v591
    %v1399 = vunpack.c.l.b16 %v592
    %v1400 = vunpack.c.l.b16 %v593
    %v1401 = vunpack.c.l.b16 %v594
    %v1402 = vunpack.c.l.b16 %v595
    %v1403 = vunpack.c.l.b16 %v596
    %v1404 = vunpack.c.l.b16 %v597
    %v1405 = vunpack.c.l.b16 %v598
    %v1406 = vunpack.c.l.b16 %v599
    %v1407 = vunpack.c.l.b16 %v600
    %v1408 = vpack.c.b16 %v1009, %v1008
    %v1409 = vpack.c.b16 %v1011, %v1010
    %v1410 = vpack.c.b16 %v1013, %v1012
    %v1411 = vpack.c.b16 %v1015, %v1014
    %v1412 = vpack.c.b16 %v1017, %v1016
    %v1413 = vpack.c.b16 %v1019, %v1018
    %v1414 = vpack.c.b16 %v1021, %v1020
    %v1415 = vpack.c.b16 %v1023, %v1022
    %v1416 = vpack.c.b16 %v1025, %v1024
    %v1417 = vpack.c.b16 %v1027, %v1026
    %v1418 = vpack.c.b16 %v1029, %v1028
    %v1419 = vpack.c.b16 %v1031, %v1030
    %v1420 = vpack.c.b16 %v1033, %v1032
    %v1421 = vpack.c.b16 %v1035, %v1034
    %v1422 = vpack.c.b16 %v1037, %v1036
    %v1423 = vpack.c.b16 %v1039, %v1038
    %v1424 = vpack.c.b16 %v1041, %v1040
    %v1425 = vpack.c.b16 %v1043, %v1042
    %v1426 = vpack.c.b16 %v1045, %v1044
    %v1427 = vpack.c.b16 %v1047, %v1046
    %v1428 = vpack.c.b16 %v1049, %v1048
    %v1429 = vpack.c.b16 %v1051, %v1050
    %v1430 = vpack.c.b16 %v1053, %v1052
    %v1431 = vpack.c.b16 %v1055, %v1054
    %v1432 = vpack.c.b16 %v1057, %v1056
    %v1433 = vpack.c.b16 %v1059, %v1058
    %v1434 = vpack.c.b16 %v1061, %v1060
    %v1435 = vpack.c.b16 %v1063, %v1062
    %v1436 = vpack.c.b16 %v1065, %v1064
    %v1437 = vpack.c.b16 %v1067, %v1066
    %v1438 = vpack.c.b16 %v1069, %v1068
    %v1439 = vpack.c.b16 %v1071, %v1070
    %v1440 = vpack.c.b16 %v1073, %v1072
    %v1441 = vpack.c.b16 %v1075, %v1074
    %v1442 = vpack.c.b16 %v1077, %v1076
    %v1443 = vpack.c.b16 %v1079, %v1078
    %v1444 = vpack.c.b16 %v1081, %v1080
    %v1445 = vpack.c.b16 %v1083, %v1082
    %v1446 = vpack.c.b16 %v1085, %v1084
    %v1447 = vpack.c.b16 %v1087, %v1086
    %v1448 = vpack.c.b16 %v1089, %v1088
    %v1449 = vpack.c.b16 %v1091, %v1090
    %v1450 = vpack.c.b16 %v1093, %v1092
    %v1451 = vpack.c.b16 %v1095, %v1094
    %v1452 = vpack.c.b16 %v1097, %v1096
    %v1453 = vpack.c.b16 %v1099, %v1098
    %v1454 = vpack.c.b16 %v1101, %v1100
    %v1455 = vpack.c.b16 %v1103, %v1102
    %v1456 = vpack.c.b16 %v1105, %v1104
    %v1457 = vpack.c.b16 %v1107, %v1106
    %v1458 = vpack.c.b16 %v1109, %v1108
    %v1459 = vpack.c.b16 %v1111, %v1110
    %v1460 = vpack.c.b16 %v1113, %v1112
    %v1461 = vpack.c.b16 %v1115, %v1114
    %v1462 = vpack.c.b16 %v1117, %v1116
    %v1463 = vpack.c.b16 %v1119, %v1118
    %v1464 = vpack.c.b16 %v1121, %v1120
    %v1465 = vpack.c.b16 %v1123, %v1122
    %v1466 = vpack.c.b16 %v1125, %v1124
    %v1467 = vpack.c.b16 %v1127, %v1126
    %v1468 = vpack.c.b16 %v1129, %v1128
    %v1469 = vpack.c.b16 %v1131, %v1130
    %v1470 = vpack.c.b16 %v1133, %v1132
    %v1471 = vpack.c.b16 %v1135, %v1134
    %v1472 = vpack.c.b16 %v1137, %v1136
    %v1473 = vpack.c.b16 %v1139, %v1138
    %v1474 = vpack.c.b16 %v1141, %v1140
    %v1475 = vpack.c.b16 %v1143, %v1142
    %v1476 = vpack.c.b16 %v1145, %v1144
    %v1477 = vpack.c.b16 %v1147, %v1146
    %v1478 = vpack.c.b16 %v1149, %v1148
    %v1479 = vpack.c.b16 %v1151, %v1150
    %v1480 = vpack.c.b16 %v1153, %v1152
    %v1481 = vpack.c.b16 %v1155, %v1154
    %v1482 = vpack.c.b16 %v1157, %v1156
    %v1483 = vpack.c.b16 %v1159, %v1158
    %v1484 = vpack.c.b16 %v1161, %v1160
    %v1485 = vpack.c.b16 %v1163, %v1162
    %v1486 = vpack.c.b16 %v1165, %v1164
    %v1487 = vpack.c.b16 %v1167, %v1166
    %v1488 = vpack.c.b16 %v1169, %v1168
    %v1489 = vpack.c.b16 %v1171, %v1170
    %v1490 = vpack.c.b16 %v1173, %v1172
    %v1491 = vpack.c.b16 %v1175, %v1174
    %v1492 = vpack.c.b16 %v1177, %v1176
    %v1493 = vpack.c.b16 %v1179, %v1178
    %v1494 = vpack.c.b16 %v1181, %v1180
    %v1495 = vpack.c.b16 %v1183, %v1182
    %v1496 = vpack.c.b16 %v1185, %v1184
    %v1497 = vpack.c.b16 %v1187, %v1186
    %v1498 = vpack.c.b16 %v1189, %v1188
    %v1499 = vpack.c.b16 %v1191, %v1190
    %v1500 = vpack.c.b16 %v1193, %v1192
    %v1501 = vpack.c.b16 %v1195, %v1194
    %v1502 = vpack.c.b16 %v1197, %v1196
    %v1503 = vpack.c.b16 %v1199, %v1198
    %v1504 = vpack.c.b16 %v1201, %v1200
    %v1505 = vpack.c.b16 %v1203, %v1202
    %v1506 = vpack.c.b16 %v1205, %v1204
    %v1507 = vpack.c.b16 %v1207, %v1206
    %v1508 = vpack.c.b16 %v1209, %v1208
    %v1509 = vpack.c.b16 %v1211, %v1210
    %v1510 = vpack.c.b16 %v1213, %v1212
    %v1511 = vpack.c.b16 %v1215, %v1214
    %v1512 = vpack.c.b16 %v1217, %v1216
    %v1513 = vpack.c.b16 %v1219, %v1218
    %v1514 = vpack.c.b16 %v1221, %v1220
    %v1515 = vpack.c.b16 %v1223, %v1222
    %v1516 = vpack.c.b16 %v1225, %v1224
    %v1517 = vpack.c.b16 %v1227, %v1226
    %v1518 = vpack.c.b16 %v1229, %v1228
    %v1519 = vpack.c.b16 %v1231, %v1230
    %v1520 = vpack.c.b16 %v1233, %v1232
    %v1521 = vpack.c.b16 %v1235, %v1234
    %v1522 = vpack.c.b16 %v1237, %v1236
    %v1523 = vpack.c.b16 %v1239, %v1238
    %v1524 = vpack.c.b16 %v1241, %v1240
    %v1525 = vpack.c.b16 %v1243, %v1242
    %v1526 = vpack.c.b16 %v1245, %v1244
    %v1527 = vpack.c.b16 %v1247, %v1246
    %v1528 = vpack.c.b16 %v1249, %v1248
    %v1529 = vpack.c.b16 %v1251, %v1250
    %v1530 = vpack.c.b16 %v1253, %v1252
    %v1531 = vpack.c.b16 %v1255, %v1254
    %v1532 = vpack.c.b16 %v1257, %v1256
    %v1533 = vpack.c.b16 %v1259, %v1258
    %v1534 = vpack.c.b16 %v1261, %v1260
    %v1535 = vpack.c.b16 %v1263, %v1262
    %v1536 = vpack.c.b16 %v1265, %v1264
    %v1537 = vpack.c.b16 %v1267, %v1266
    %v1538 = vpack.c.b16 %v1269, %v1268
    %v1539 = vpack.c.b16 %v1271, %v1270
    %v1540 = vpack.c.b16 %v1273, %v1272
    %v1541 = vpack.c.b16 %v1275, %v1274
    %v1542 = vpack.c.b16 %v1277, %v1276
    %v1543 = vpack.c.b16 %v1279, %v1278
    %v1544 = vpack.c.b16 %v1281, %v1280
    %v1545 = vpack.c.b16 %v1283, %v1282
    %v1546 = vpack.c.b16 %v1285, %v1284
    %v1547 = vpack.c.b16 %v1287, %v1286
    %v1548 = vpack.c.b16 %v1289, %v1288
    %v1549 = vpack.c.b16 %v1291, %v1290
    %v1550 = vpack.c.b16 %v1293, %v1292
    %v1551 = vpack.c.b16 %v1295, %v1294
    %v1552 = vpack.c.b16 %v1297, %v1296
    %v1553 = vpack.c.b16 %v1299, %v1298
    %v1554 = vpack.c.b16 %v1301, %v1300
    %v1555 = vpack.c.b16 %v1303, %v1302
    %v1556 = vpack.c.b16 %v1305, %v1304
    %v1557 = vpack.c.b16 %v1307, %v1306
    %v1558 = vpack.c.b16 %v1309, %v1308
    %v1559 = vpack.c.b16 %v1311, %v1310
    %v1560 = vpack.c.b16 %v1313, %v1312
    %v1561 = vpack.c.b16 %v1315, %v1314
    %v1562 = vpack.c.b16 %v1317, %v1316
    %v1563 = vpack.c.b16 %v1319, %v1318
    %v1564 = vpack.c.b16 %v1321, %v1320
    %v1565 = vpack.c.b16 %v1323, %v1322
    %v1566 = vpack.c.b16 %v1325, %v1324
    %v1567 = vpack.c.b16 %v1327, %v1326
    %v1568 = vpack.c.b16 %v1329, %v1328
    %v1569 = vpack.c.b16 %v1331, %v1330
    %v1570 = vpack.c.b16 %v1333, %v1332
    %v1571 = vpack.c.b16 %v1335, %v1334
    %v1572 = vpack.c.b16 %v1337, %v1336
    %v1573 = vpack.c.b16 %v1339, %v1338
    %v1574 = vpack.c.b16 %v1341, %v1340
    %v1575 = vpack.c.b16 %v1343, %v1342
    %v1576 = vpack.c.b16 %v1345, %v1344
    %v1577 = vpack.c.b16 %v1347, %v1346
    %v1578 = vpack.c.b16 %v1349, %v1348
    %v1579 = vpack.c.b16 %v1351, %v1350
    %v1580 = vpack.c.b16 %v1353, %v1352
    %v1581 = vpack.c.b16 %v1355, %v1354
    %v1582 = vpack.c.b16 %v1357, %v1356
    %v1583 = vpack.c.b16 %v1359, %v1358
    %v1584 = vpack.c.b16 %v1361, %v1360
    %v1585 = vpack.c.b16 %v1363, %v1362
    %v1586 = vpack.c.b16 %v1365, %v1364
    %v1587 = vpack.c.b16 %v1367, %v1366
    %v1588 = vpack.c.b16 %v1369, %v1368
    %v1589 = vpack.c.b16 %v1371, %v1370
    %v1590 = vpack.c.b16 %v1373, %v1372
    %v1591 = vpack.c.b16 %v1375, %v1374
    %v1592 = vpack.c.b16 %v1377, %v1376
    %v1593 = vpack.c.b16 %v1379, %v1378
    %v1594 = vpack.c.b16 %v1381, %v1380
    %v1595 = vpack.c.b16 %v1383, %v1382
    %v1596 = vpack.c.b16 %v1385, %v1384
    %v1597 = vpack.c.b16 %v1387, %v1386
    %v1598 = vpack.c.b16 %v1389, %v1388
    %v1599 = vpack.c.b16 %v1391, %v1390
    %v1600 = vpack.c.b16 %v1393, %v1392
    %v1601 = vpack.c.b16 %v1395, %v1394
    %v1602 = vpack.c.b16 %v1397, %v1396
    %v1603 = vpack.c.b16 %v1399, %v1398
    %v1604 = vpack.c.b16 %v1401, %v1400
    %v1605 = vpack.c.b16 %v1403, %v1402
    %v1606 = vpack.c.b16 %v1405, %v1404
    %v1607 = vpack.c.b16 %v1407, %v1406
    %1808 = vmatprep.subr.bf16.mxu0 0
    %1809 = vmatpush1.bf16.msra.mxu0 %v1408
    %1810 = vmatprep.subr.bf16.mxu0 0
    %1811 = vmatpush1.bf16.msra.mxu0 %v1409
    %1812 = vmatprep.subr.bf16.mxu0 0
    %1813 = vmatpush1.bf16.msra.mxu0 %v1410
    %1814 = vmatprep.subr.bf16.mxu0 0
    %1815 = vmatpush1.bf16.msra.mxu0 %v1411
    %1816 = vmatprep.subr.bf16.mxu0 0
    %1817 = vmatpush1.bf16.msra.mxu0 %v1412
    %1818 = vmatprep.subr.bf16.mxu0 0
    %1819 = vmatpush1.bf16.msra.mxu0 %v1413
    %1820 = vmatprep.subr.bf16.mxu0 0
    %1821 = vmatpush1.bf16.msra.mxu0 %v1414
    %1822 = vmatprep.subr.bf16.mxu0 0
    %1823 = vmatpush1.bf16.msra.mxu0 %v1415
    %1824 = vmatprep.subr.bf16.mxu0 0
    %1825 = vmatpush1.bf16.msra.mxu0 %v1416
    %1826 = vmatprep.subr.bf16.mxu0 0
    %1827 = vmatpush1.bf16.msra.mxu0 %v1417
    %1828 = vmatprep.subr.bf16.mxu0 0
    %1829 = vmatpush1.bf16.msra.mxu0 %v1418
    %1830 = vmatprep.subr.bf16.mxu0 0
    %1831 = vmatpush1.bf16.msra.mxu0 %v1419
    %1832 = vmatprep.subr.bf16.mxu0 0
    %1833 = vmatpush1.bf16.msra.mxu0 %v1420
    %1834 = vmatprep.subr.bf16.mxu0 0
    %1835 = vmatpush1.bf16.msra.mxu0 %v1421
    %1836 = vmatprep.subr.bf16.mxu0 0
    %1837 = vmatpush1.bf16.msra.mxu0 %v1422
    %1838 = vmatprep.subr.bf16.mxu0 0
    %1839 = vmatpush1.bf16.msra.mxu0 %v1423
    %1840 = vmatprep.mubr.bf16.mxu0 %v177
    %1841 = vmatmul.mubr.bf16.gmra.mrb[0].mxu0 %v176
    %v1842 = vpop.f32.mrb[0].mxu0
    %v1843 = vadd.f32 %v606, %v1842
    %v1844 = vpop.f32.mrb[0].mxu0
    %v1845 = vpop.f32.mrb[0].mxu0
    %v1846 = vpop.f32.mrb[0].mxu0
    %1847 = vdwg.mxu0
    %1848 = vmatprep.subr.bf16.mxu0 0
    %1849 = vmatpush1.bf16.msra.mxu0 %v1424
    %1850 = vmatprep.subr.bf16.mxu0 0
    %1851 = vmatpush1.bf16.msra.mxu0 %v1425
    %1852 = vmatprep.subr.bf16.mxu0 0
    %1853 = vmatpush1.bf16.msra.mxu0 %v1426
    %1854 = vmatprep.subr.bf16.mxu0 0
    %1855 = vmatpush1.bf16.msra.mxu0 %v1427
    %1856 = vmatprep.subr.bf16.mxu0 0
    %1857 = vmatpush1.bf16.msra.mxu0 %v1428
    %1858 = vmatprep.subr.bf16.mxu0 0
    %1859 = vmatpush1.bf16.msra.mxu0 %v1429
    %1860 = vmatprep.subr.bf16.mxu0 0
    %1861 = vmatpush1.bf16.msra.mxu0 %v1430
    %1862 = vmatprep.subr.bf16.mxu0 0
    %1863 = vmatpush1.bf16.msra.mxu0 %v1431
    %1864 = vmatprep.subr.bf16.mxu0 0
    %1865 = vmatpush1.bf16.msra.mxu0 %v1432
    %1866 = vmatprep.subr.bf16.mxu0 0
    %1867 = vmatpush1.bf16.msra.mxu0 %v1433
    %1868 = vmatprep.subr.bf16.mxu0 0
    %1869 = vmatpush1.bf16.msra.mxu0 %v1434
    %1870 = vmatprep.subr.bf16.mxu0 0
    %1871 = vmatpush1.bf16.msra.mxu0 %v1435
    %1872 = vmatprep.subr.bf16.mxu0 0
    %1873 = vmatpush1.bf16.msra.mxu0 %v1436
    %1874 = vmatprep.subr.bf16.mxu0 0
    %1875 = vmatpush1.bf16.msra.mxu0 %v1437
    %1876 = vmatprep.subr.bf16.mxu0 0
    %1877 = vmatpush1.bf16.msra.mxu0 %v1438
    %1878 = vmatprep.subr.bf16.mxu0 0
    %1879 = vmatpush1.bf16.msra.mxu0 %v1439
    %1880 = vmatprep.mubr.bf16.mxu0 %v179
    %1881 = vmatmul.mubr.bf16.gmra.mrb[0].mxu0 %v178
    %v1882 = vpop.f32.mrb[0].mxu0
    %v1883 = vadd.f32 %v1843, %v1882
    %v1884 = vpop.f32.mrb[0].mxu0
    %v1885 = vpop.f32.mrb[0].mxu0
    %v1886 = vpop.f32.mrb[0].mxu0
    %1887 = vdwg.mxu0
    %1888 = vmatprep.subr.bf16.mxu0 0
    %1889 = vmatpush1.bf16.msra.mxu0 %v1440
    %1890 = vmatprep.subr.bf16.mxu0 0
    %1891 = vmatpush1.bf16.msra.mxu0 %v1441
    %1892 = vmatprep.subr.bf16.mxu0 0
    %1893 = vmatpush1.bf16.msra.mxu0 %v1442
    %1894 = vmatprep.subr.bf16.mxu0 0
    %1895 = vmatpush1.bf16.msra.mxu0 %v1443
    %1896 = vmatprep.subr.bf16.mxu0 0
    %1897 = vmatpush1.bf16.msra.mxu0 %v1444
    %1898 = vmatprep.subr.bf16.mxu0 0
    %1899 = vmatpush1.bf16.msra.mxu0 %v1445
    %1900 = vmatprep.subr.bf16.mxu0 0
    %1901 = vmatpush1.bf16.msra.mxu0 %v1446
    %1902 = vmatprep.subr.bf16.mxu0 0
    %1903 = vmatpush1.bf16.msra.mxu0 %v1447
    %1904 = vmatprep.subr.bf16.mxu0 0
    %1905 = vmatpush1.bf16.msra.mxu0 %v1448
    %1906 = vmatprep.subr.bf16.mxu0 0
    %1907 = vmatpush1.bf16.msra.mxu0 %v1449
    %1908 = vmatprep.subr.bf16.mxu0 0
    %1909 = vmatpush1.bf16.msra.mxu0 %v1450
    %1910 = vmatprep.subr.bf16.mxu0 0
    %1911 = vmatpush1.bf16.msra.mxu0 %v1451
    %1912 = vmatprep.subr.bf16.mxu0 0
    %1913 = vmatpush1.bf16.msra.mxu0 %v1452
    %1914 = vmatprep.subr.bf16.mxu0 0
    %1915 = vmatpush1.bf16.msra.mxu0 %v1453
    %1916 = vmatprep.subr.bf16.mxu0 0
    %1917 = vmatpush1.bf16.msra.mxu0 %v1454
    %1918 = vmatprep.subr.bf16.mxu0 0
    %1919 = vmatpush1.bf16.msra.mxu0 %v1455
    %1920 = vmatprep.mubr.bf16.mxu0 %v181
    %1921 = vmatmul.mubr.bf16.gmra.mrb[0].mxu0 %v180
    %v1922 = vpop.f32.mrb[0].mxu0
    %v1923 = vadd.f32 %v1883, %v1922
    %v1924 = vpop.f32.mrb[0].mxu0
    %v1925 = vpop.f32.mrb[0].mxu0
    %v1926 = vpop.f32.mrb[0].mxu0
    %1927 = vdwg.mxu0
    %1928 = vmatprep.subr.bf16.mxu0 0
    %1929 = vmatpush1.bf16.msra.mxu0 %v1456
    %1930 = vmatprep.subr.bf16.mxu0 0
    %1931 = vmatpush1.bf16.msra.mxu0 %v1457
    %1932 = vmatprep.subr.bf16.mxu0 0
    %1933 = vmatpush1.bf16.msra.mxu0 %v1458
    %1934 = vmatprep.subr.bf16.mxu0 0
    %1935 = vmatpush1.bf16.msra.mxu0 %v1459
    %1936 = vmatprep.subr.bf16.mxu0 0
    %1937 = vmatpush1.bf16.msra.mxu0 %v1460
    %1938 = vmatprep.subr.bf16.mxu0 0
    %1939 = vmatpush1.bf16.msra.mxu0 %v1461
    %1940 = vmatprep.subr.bf16.mxu0 0
    %1941 = vmatpush1.bf16.msra.mxu0 %v1462
    %1942 = vmatprep.subr.bf16.mxu0 0
    %1943 = vmatpush1.bf16.msra.mxu0 %v1463
    %1944 = vmatprep.subr.bf16.mxu0 0
    %1945 = vmatpush1.bf16.msra.mxu0 %v1464
    %1946 = vmatprep.subr.bf16.mxu0 0
    %1947 = vmatpush1.bf16.msra.mxu0 %v1465
    %1948 = vmatprep.subr.bf16.mxu0 0
    %1949 = vmatpush1.bf16.msra.mxu0 %v1466
    %1950 = vmatprep.subr.bf16.mxu0 0
    %1951 = vmatpush1.bf16.msra.mxu0 %v1467
    %1952 = vmatprep.subr.bf16.mxu0 0
    %1953 = vmatpush1.bf16.msra.mxu0 %v1468
    %1954 = vmatprep.subr.bf16.mxu0 0
    %1955 = vmatpush1.bf16.msra.mxu0 %v1469
    %1956 = vmatprep.subr.bf16.mxu0 0
    %1957 = vmatpush1.bf16.msra.mxu0 %v1470
    %1958 = vmatprep.subr.bf16.mxu0 0
    %1959 = vmatpush1.bf16.msra.mxu0 %v1471
    %1960 = vmatprep.mubr.bf16.mxu0 %v183
    %1961 = vmatmul.mubr.bf16.gmra.mrb[0].mxu0 %v182
    %v1962 = vpop.f32.mrb[0].mxu0
    %v1963 = vadd.f32 %v1923, %v1962
    %v1964 = vpop.f32.mrb[0].mxu0
    %v1965 = vpop.f32.mrb[0].mxu0
    %v1966 = vpop.f32.mrb[0].mxu0
    %1967 = vdwg.mxu0
    %1968 = vmatprep.subr.bf16.mxu0 0
    %1969 = vmatpush1.bf16.msra.mxu0 %v1472
    %1970 = vmatprep.subr.bf16.mxu0 0
    %1971 = vmatpush1.bf16.msra.mxu0 %v1473
    %1972 = vmatprep.subr.bf16.mxu0 0
    %1973 = vmatpush1.bf16.msra.mxu0 %v1474
    %1974 = vmatprep.subr.bf16.mxu0 0
    %1975 = vmatpush1.bf16.msra.mxu0 %v1475
    %1976 = vmatprep.subr.bf16.mxu0 0
    %1977 = vmatpush1.bf16.msra.mxu0 %v1476
    %1978 = vmatprep.subr.bf16.mxu0 0
    %1979 = vmatpush1.bf16.msra.mxu0 %v1477
    %1980 = vmatprep.subr.bf16.mxu0 0
    %1981 = vmatpush1.bf16.msra.mxu0 %v1478
    %1982 = vmatprep.subr.bf16.mxu0 0
    %1983 = vmatpush1.bf16.msra.mxu0 %v1479
    %1984 = vmatprep.subr.bf16.mxu0 0
    %1985 = vmatpush1.bf16.msra.mxu0 %v1480
    %1986 = vmatprep.subr.bf16.mxu0 0
    %1987 = vmatpush1.bf16.msra.mxu0 %v1481
    %1988 = vmatprep.subr.bf16.mxu0 0
    %1989 = vmatpush1.bf16.msra.mxu0 %v1482
    %1990 = vmatprep.subr.bf16.mxu0 0
    %1991 = vmatpush1.bf16.msra.mxu0 %v1483
    %1992 = vmatprep.subr.bf16.mxu0 0
    %1993 = vmatpush1.bf16.msra.mxu0 %v1484
    %1994 = vmatprep.subr.bf16.mxu0 0
    %1995 = vmatpush1.bf16.msra.mxu0 %v1485
    %1996 = vmatprep.subr.bf16.mxu0 0
    %1997 = vmatpush1.bf16.msra.mxu0 %v1486
    %1998 = vmatprep.subr.bf16.mxu0 0
    %1999 = vmatpush1.bf16.msra.mxu0 %v1487
    %2000 = vmatprep.mubr.bf16.mxu0 %v185
    %2001 = vmatmul.mubr.bf16.gmra.mrb[0].mxu0 %v184
    %v2002 = vpop.f32.mrb[0].mxu0
    %v2003 = vadd.f32 %v1963, %v2002
    %v2004 = vpop.f32.mrb[0].mxu0
    %v2005 = vpop.f32.mrb[0].mxu0
    %v2006 = vpop.f32.mrb[0].mxu0
    %2007 = vdwg.mxu0
    %2008 = vmatprep.subr.bf16.mxu0 0
    %2009 = vmatpush1.bf16.msra.mxu0 %v1488
    %2010 = vmatprep.subr.bf16.mxu0 0
    %2011 = vmatpush1.bf16.msra.mxu0 %v1489
    %2012 = vmatprep.subr.bf16.mxu0 0
    %2013 = vmatpush1.bf16.msra.mxu0 %v1490
    %2014 = vmatprep.subr.bf16.mxu0 0
    %2015 = vmatpush1.bf16.msra.mxu0 %v1491
    %2016 = vmatprep.subr.bf16.mxu0 0
    %2017 = vmatpush1.bf16.msra.mxu0 %v1492
    %2018 = vmatprep.subr.bf16.mxu0 0
    %2019 = vmatpush1.bf16.msra.mxu0 %v1493
    %2020 = vmatprep.subr.bf16.mxu0 0
    %2021 = vmatpush1.bf16.msra.mxu0 %v1494
    %2022 = vmatprep.subr.bf16.mxu0 0
    %2023 = vmatpush1.bf16.msra.mxu0 %v1495
    %2024 = vmatprep.subr.bf16.mxu0 0
    %2025 = vmatpush1.bf16.msra.mxu0 %v1496
    %2026 = vmatprep.subr.bf16.mxu0 0
    %2027 = vmatpush1.bf16.msra.mxu0 %v1497
    %2028 = vmatprep.subr.bf16.mxu0 0
    %2029 = vmatpush1.bf16.msra.mxu0 %v1498
    %2030 = vmatprep.subr.bf16.mxu0 0
    %2031 = vmatpush1.bf16.msra.mxu0 %v1499
    %2032 = vmatprep.subr.bf16.mxu0 0
    %2033 = vmatpush1.bf16.msra.mxu0 %v1500
    %2034 = vmatprep.subr.bf16.mxu0 0
    %2035 = vmatpush1.bf16.msra.mxu0 %v1501
    %2036 = vmatprep.subr.bf16.mxu0 0
    %2037 = vmatpush1.bf16.msra.mxu0 %v1502
    %2038 = vmatprep.subr.bf16.mxu0 0
    %2039 = vmatpush1.bf16.msra.mxu0 %v1503
    %2040 = vmatprep.mubr.bf16.mxu0 %v187
    %2041 = vmatmul.mubr.bf16.gmra.mrb[0].mxu0 %v186
    %v2042 = vpop.f32.mrb[0].mxu0
    %v2043 = vadd.f32 %v2003, %v2042
    %v2044 = vpop.f32.mrb[0].mxu0
    %v2045 = vpop.f32.mrb[0].mxu0
    %v2046 = vpop.f32.mrb[0].mxu0
    %2047 = vdwg.mxu0
    %2048 = vmatprep.subr.bf16.mxu0 0
    %2049 = vmatpush1.bf16.msra.mxu0 %v1504
    %2050 = vmatprep.subr.bf16.mxu0 0
    %2051 = vmatpush1.bf16.msra.mxu0 %v1505
    %2052 = vmatprep.subr.bf16.mxu0 0
    %2053 = vmatpush1.bf16.msra.mxu0 %v1506
    %2054 = vmatprep.subr.bf16.mxu0 0
    %2055 = vmatpush1.bf16.msra.mxu0 %v1507
    %2056 = vmatprep.subr.bf16.mxu0 0
    %2057 = vmatpush1.bf16.msra.mxu0 %v1508
    %2058 = vmatprep.subr.bf16.mxu0 0
    %2059 = vmatpush1.bf16.msra.mxu0 %v1509
    %2060 = vmatprep.subr.bf16.mxu0 0
    %2061 = vmatpush1.bf16.msra.mxu0 %v1510
    %2062 = vmatprep.subr.bf16.mxu0 0
    %2063 = vmatpush1.bf16.msra.mxu0 %v1511
    %2064 = vmatprep.subr.bf16.mxu0 0
    %2065 = vmatpush1.bf16.msra.mxu0 %v1512
    %2066 = vmatprep.subr.bf16.mxu0 0
    %2067 = vmatpush1.bf16.msra.mxu0 %v1513
    %2068 = vmatprep.subr.bf16.mxu0 0
    %2069 = vmatpush1.bf16.msra.mxu0 %v1514
    %2070 = vmatprep.subr.bf16.mxu0 0
    %2071 = vmatpush1.bf16.msra.mxu0 %v1515
    %2072 = vmatprep.subr.bf16.mxu0 0
    %2073 = vmatpush1.bf16.msra.mxu0 %v1516
    %2074 = vmatprep.subr.bf16.mxu0 0
    %2075 = vmatpush1.bf16.msra.mxu0 %v1517
    %2076 = vmatprep.subr.bf16.mxu0 0
    %2077 = vmatpush1.bf16.msra.mxu0 %v1518
    %2078 = vmatprep.subr.bf16.mxu0 0
    %2079 = vmatpush1.bf16.msra.mxu0 %v1519
    %2080 = vmatprep.mubr.bf16.mxu0 %v189
    %2081 = vmatmul.mubr.bf16.gmra.mrb[0].mxu0 %v188
    %v2082 = vpop.f32.mrb[0].mxu0
    %v2083 = vadd.f32 %v2043, %v2082
    %v2084 = vpop.f32.mrb[0].mxu0
    %v2085 = vpop.f32.mrb[0].mxu0
    %v2086 = vpop.f32.mrb[0].mxu0
    %2087 = vdwg.mxu0
    %2088 = vmatprep.subr.bf16.mxu0 0
    %2089 = vmatpush1.bf16.msra.mxu0 %v1520
    %2090 = vmatprep.subr.bf16.mxu0 0
    %2091 = vmatpush1.bf16.msra.mxu0 %v1521
    %2092 = vmatprep.subr.bf16.mxu0 0
    %2093 = vmatpush1.bf16.msra.mxu0 %v1522
    %2094 = vmatprep.subr.bf16.mxu0 0
    %2095 = vmatpush1.bf16.msra.mxu0 %v1523
    %2096 = vmatprep.subr.bf16.mxu0 0
    %2097 = vmatpush1.bf16.msra.mxu0 %v1524
    %2098 = vmatprep.subr.bf16.mxu0 0
    %2099 = vmatpush1.bf16.msra.mxu0 %v1525
    %2100 = vmatprep.subr.bf16.mxu0 0
    %2101 = vmatpush1.bf16.msra.mxu0 %v1526
    %2102 = vmatprep.subr.bf16.mxu0 0
    %2103 = vmatpush1.bf16.msra.mxu0 %v1527
    %2104 = vmatprep.subr.bf16.mxu0 0
    %2105 = vmatpush1.bf16.msra.mxu0 %v1528
    %2106 = vmatprep.subr.bf16.mxu0 0
    %2107 = vmatpush1.bf16.msra.mxu0 %v1529
    %2108 = vmatprep.subr.bf16.mxu0 0
    %2109 = vmatpush1.bf16.msra.mxu0 %v1530
    %2110 = vmatprep.subr.bf16.mxu0 0
    %2111 = vmatpush1.bf16.msra.mxu0 %v1531
    %2112 = vmatprep.subr.bf16.mxu0 0
    %2113 = vmatpush1.bf16.msra.mxu0 %v1532
    %2114 = vmatprep.subr.bf16.mxu0 0
    %2115 = vmatpush1.bf16.msra.mxu0 %v1533
    %2116 = vmatprep.subr.bf16.mxu0 0
    %2117 = vmatpush1.bf16.msra.mxu0 %v1534
    %2118 = vmatprep.subr.bf16.mxu0 0
    %2119 = vmatpush1.bf16.msra.mxu0 %v1535
    %2120 = vmatprep.mubr.bf16.mxu0 %v191
    %2121 = vmatmul.mubr.bf16.gmra.mrb[0].mxu0 %v190
    %v2122 = vpop.f32.mrb[0].mxu0
    %v2123 = vadd.f32 %v2083, %v2122
    %v2124 = vpop.f32.mrb[0].mxu0
    %v2125 = vpop.f32.mrb[0].mxu0
    %v2126 = vpop.f32.mrb[0].mxu0
    %2127 = vdwg.mxu0
    %2128 = vmatprep.subr.bf16.mxu0 0
    %2129 = vmatpush1.bf16.msra.mxu0 %v1536
    %2130 = vmatprep.subr.bf16.mxu0 0
    %2131 = vmatpush1.bf16.msra.mxu0 %v1537
    %2132 = vmatprep.subr.bf16.mxu0 0
    %2133 = vmatpush1.bf16.msra.mxu0 %v1538
    %2134 = vmatprep.subr.bf16.mxu0 0
    %2135 = vmatpush1.bf16.msra.mxu0 %v1539
    %2136 = vmatprep.subr.bf16.mxu0 0
    %2137 = vmatpush1.bf16.msra.mxu0 %v1540
    %2138 = vmatprep.subr.bf16.mxu0 0
    %2139 = vmatpush1.bf16.msra.mxu0 %v1541
    %2140 = vmatprep.subr.bf16.mxu0 0
    %2141 = vmatpush1.bf16.msra.mxu0 %v1542
    %2142 = vmatprep.subr.bf16.mxu0 0
    %2143 = vmatpush1.bf16.msra.mxu0 %v1543
    %2144 = vmatprep.subr.bf16.mxu0 0
    %2145 = vmatpush1.bf16.msra.mxu0 %v1544
    %2146 = vmatprep.subr.bf16.mxu0 0
    %2147 = vmatpush1.bf16.msra.mxu0 %v1545
    %2148 = vmatprep.subr.bf16.mxu0 0
    %2149 = vmatpush1.bf16.msra.mxu0 %v1546
    %2150 = vmatprep.subr.bf16.mxu0 0
    %2151 = vmatpush1.bf16.msra.mxu0 %v1547
    %2152 = vmatprep.subr.bf16.mxu0 0
    %2153 = vmatpush1.bf16.msra.mxu0 %v1548
    %2154 = vmatprep.subr.bf16.mxu0 0
    %2155 = vmatpush1.bf16.msra.mxu0 %v1549
    %2156 = vmatprep.subr.bf16.mxu0 0
    %2157 = vmatpush1.bf16.msra.mxu0 %v1550
    %2158 = vmatprep.subr.bf16.mxu0 0
    %2159 = vmatpush1.bf16.msra.mxu0 %v1551
    %2160 = vmatprep.mubr.bf16.mxu0 %v193
    %2161 = vmatmul.mubr.bf16.gmra.mrb[0].mxu0 %v192
    %v2162 = vpop.f32.mrb[0].mxu0
    %v2163 = vadd.f32 %v2123, %v2162
    %v2164 = vpop.f32.mrb[0].mxu0
    %v2165 = vpop.f32.mrb[0].mxu0
    %v2166 = vpop.f32.mrb[0].mxu0
    %2167 = vdwg.mxu0
    %2168 = vmatprep.subr.bf16.mxu0 0
    %2169 = vmatpush1.bf16.msra.mxu0 %v1552
    %2170 = vmatprep.subr.bf16.mxu0 0
    %2171 = vmatpush1.bf16.msra.mxu0 %v1553
    %2172 = vmatprep.subr.bf16.mxu0 0
    %2173 = vmatpush1.bf16.msra.mxu0 %v1554
    %2174 = vmatprep.subr.bf16.mxu0 0
    %2175 = vmatpush1.bf16.msra.mxu0 %v1555
    %2176 = vmatprep.subr.bf16.mxu0 0
    %2177 = vmatpush1.bf16.msra.mxu0 %v1556
    %2178 = vmatprep.subr.bf16.mxu0 0
    %2179 = vmatpush1.bf16.msra.mxu0 %v1557
    %2180 = vmatprep.subr.bf16.mxu0 0
    %2181 = vmatpush1.bf16.msra.mxu0 %v1558
    %2182 = vmatprep.subr.bf16.mxu0 0
    %2183 = vmatpush1.bf16.msra.mxu0 %v1559
    %2184 = vmatprep.subr.bf16.mxu0 0
    %2185 = vmatpush1.bf16.msra.mxu0 %v1560
    %2186 = vmatprep.subr.bf16.mxu0 0
    %2187 = vmatpush1.bf16.msra.mxu0 %v1561
    %2188 = vmatprep.subr.bf16.mxu0 0
    %2189 = vmatpush1.bf16.msra.mxu0 %v1562
    %2190 = vmatprep.subr.bf16.mxu0 0
    %2191 = vmatpush1.bf16.msra.mxu0 %v1563
    %2192 = vmatprep.subr.bf16.mxu0 0
    %2193 = vmatpush1.bf16.msra.mxu0 %v1564
    %2194 = vmatprep.subr.bf16.mxu0 0
    %2195 = vmatpush1.bf16.msra.mxu0 %v1565
    %2196 = vmatprep.subr.bf16.mxu0 0
    %2197 = vmatpush1.bf16.msra.mxu0 %v1566
    %2198 = vmatprep.subr.bf16.mxu0 0
    %2199 = vmatpush1.bf16.msra.mxu0 %v1567
    %2200 = vmatprep.mubr.bf16.mxu0 %v195
    %2201 = vmatmul.mubr.bf16.gmra.mrb[0].mxu0 %v194
    %v2202 = vpop.f32.mrb[0].mxu0
    %v2203 = vadd.f32 %v2163, %v2202
    %v2204 = vpop.f32.mrb[0].mxu0
    %v2205 = vpop.f32.mrb[0].mxu0
    %v2206 = vpop.f32.mrb[0].mxu0
    %2207 = vdwg.mxu0
    %2208 = vmatprep.subr.bf16.mxu0 0
    %2209 = vmatpush1.bf16.msra.mxu0 %v1568
    %2210 = vmatprep.subr.bf16.mxu0 0
    %2211 = vmatpush1.bf16.msra.mxu0 %v1569
    %2212 = vmatprep.subr.bf16.mxu0 0
    %2213 = vmatpush1.bf16.msra.mxu0 %v1570
    %2214 = vmatprep.subr.bf16.mxu0 0
    %2215 = vmatpush1.bf16.msra.mxu0 %v1571
    %2216 = vmatprep.subr.bf16.mxu0 0
    %2217 = vmatpush1.bf16.msra.mxu0 %v1572
    %2218 = vmatprep.subr.bf16.mxu0 0
    %2219 = vmatpush1.bf16.msra.mxu0 %v1573
    %2220 = vmatprep.subr.bf16.mxu0 0
    %2221 = vmatpush1.bf16.msra.mxu0 %v1574
    %2222 = vmatprep.subr.bf16.mxu0 0
    %2223 = vmatpush1.bf16.msra.mxu0 %v1575
    %2224 = vmatprep.subr.bf16.mxu0 0
    %2225 = vmatpush1.bf16.msra.mxu0 %v1576
    %2226 = vmatprep.subr.bf16.mxu0 0
    %2227 = vmatpush1.bf16.msra.mxu0 %v1577
    %2228 = vmatprep.subr.bf16.mxu0 0
    %2229 = vmatpush1.bf16.msra.mxu0 %v1578
    %2230 = vmatprep.subr.bf16.mxu0 0
    %2231 = vmatpush1.bf16.msra.mxu0 %v1579
    %2232 = vmatprep.subr.bf16.mxu0 0
    %2233 = vmatpush1.bf16.msra.mxu0 %v1580
    %2234 = vmatprep.subr.bf16.mxu0 0
    %2235 = vmatpush1.bf16.msra.mxu0 %v1581
    %2236 = vmatprep.subr.bf16.mxu0 0
    %2237 = vmatpush1.bf16.msra.mxu0 %v1582
    %2238 = vmatprep.subr.bf16.mxu0 0
    %2239 = vmatpush1.bf16.msra.mxu0 %v1583
    %2240 = vmatprep.mubr.bf16.mxu0 %v197
    %2241 = vmatmul.mubr.bf16.gmra.mrb[0].mxu0 %v196
    %v2242 = vpop.f32.mrb[0].mxu0
    %v2243 = vadd.f32 %v2203, %v2242
    %v2244 = vpop.f32.mrb[0].mxu0
    %v2245 = vpop.f32.mrb[0].mxu0
    %v2246 = vpop.f32.mrb[0].mxu0
    %2247 = vdwg.mxu0
    %2248 = vmatprep.subr.bf16.mxu0 0
    %2249 = vmatpush1.bf16.msra.mxu0 %v1584
    %2250 = vmatprep.subr.bf16.mxu0 0
    %2251 = vmatpush1.bf16.msra.mxu0 %v1585
    %2252 = vmatprep.subr.bf16.mxu0 0
    %2253 = vmatpush1.bf16.msra.mxu0 %v1586
    %2254 = vmatprep.subr.bf16.mxu0 0
    %2255 = vmatpush1.bf16.msra.mxu0 %v1587
    %2256 = vmatprep.subr.bf16.mxu0 0
    %2257 = vmatpush1.bf16.msra.mxu0 %v1588
    %2258 = vmatprep.subr.bf16.mxu0 0
    %2259 = vmatpush1.bf16.msra.mxu0 %v1589
    %2260 = vmatprep.subr.bf16.mxu0 0
    %2261 = vmatpush1.bf16.msra.mxu0 %v1590
    %2262 = vmatprep.subr.bf16.mxu0 0
    %2263 = vmatpush1.bf16.msra.mxu0 %v1591
    %2264 = vmatprep.subr.bf16.mxu0 0
    %2265 = vmatpush1.bf16.msra.mxu0 %v1592
    %2266 = vmatprep.subr.bf16.mxu0 0
    %2267 = vmatpush1.bf16.msra.mxu0 %v1593
    %2268 = vmatprep.subr.bf16.mxu0 0
    %2269 = vmatpush1.bf16.msra.mxu0 %v1594
    %2270 = vmatprep.subr.bf16.mxu0 0
    %2271 = vmatpush1.bf16.msra.mxu0 %v1595
    %2272 = vmatprep.subr.bf16.mxu0 0
    %2273 = vmatpush1.bf16.msra.mxu0 %v1596
    %2274 = vmatprep.subr.bf16.mxu0 0
    %2275 = vmatpush1.bf16.msra.mxu0 %v1597
    %2276 = vmatprep.subr.bf16.mxu0 0
    %2277 = vmatpush1.bf16.msra.mxu0 %v1598
    %2278 = vmatprep.subr.bf16.mxu0 0
    %2279 = vmatpush1.bf16.msra.mxu0 %v1599
    %2280 = vmatprep.mubr.bf16.mxu0 %v199
    %2281 = vmatmul.mubr.bf16.gmra.mrb[0].mxu0 %v198
    %v2282 = vpop.f32.mrb[0].mxu0
    %v2283 = vadd.f32 %v2243, %v2282
    %v2284 = vpop.f32.mrb[0].mxu0
    %v2285 = vpop.f32.mrb[0].mxu0
    %v2286 = vpop.f32.mrb[0].mxu0
    %2287 = vdwg.mxu0
    %2288 = vmatprep.subr.bf16.mxu0 0
    %2289 = vmatpush1.bf16.msra.mxu0 %v1600
    %2290 = vmatprep.subr.bf16.mxu0 0
    %2291 = vmatpush1.bf16.msra.mxu0 %v1601
    %2292 = vmatprep.subr.bf16.mxu0 0
    %2293 = vmatpush1.bf16.msra.mxu0 %v1602
    %2294 = vmatprep.subr.bf16.mxu0 0
    %2295 = vmatpush1.bf16.msra.mxu0 %v1603
    %2296 = vmatprep.subr.bf16.mxu0 0
    %2297 = vmatpush1.bf16.msra.mxu0 %v1604
    %2298 = vmatprep.subr.bf16.mxu0 0
    %2299 = vmatpush1.bf16.msra.mxu0 %v1605
    %2300 = vmatprep.subr.bf16.mxu0 0
    %2301 = vmatpush1.bf16.msra.mxu0 %v1606
    %2302 = vmatprep.subr.bf16.mxu0 0
    %2303 = vmatpush1.bf16.msra.mxu0 %v1607
    %2304 = vmatprep.subr.bf16.mxu0 0
    %2305 = vmatpush1.bf16.msra.mxu0 0
    %2306 = vmatprep.subr.bf16.mxu0 0
    %2307 = vmatpush1.bf16.msra.mxu0 0
    %2308 = vmatprep.subr.bf16.mxu0 0
    %2309 = vmatpush1.bf16.msra.mxu0 0
    %2310 = vmatprep.subr.bf16.mxu0 0
    %2311 = vmatpush1.bf16.msra.mxu0 0
    %2312 = vmatprep.subr.bf16.mxu0 0
    %2313 = vmatpush1.bf16.msra.mxu0 0
    %2314 = vmatprep.subr.bf16.mxu0 0
    %2315 = vmatpush1.bf16.msra.mxu0 0
    %2316 = vmatprep.subr.bf16.mxu0 0
    %2317 = vmatpush1.bf16.msra.mxu0 0
    %2318 = vmatprep.subr.bf16.mxu0 0
    %2319 = vmatpush1.bf16.msra.mxu0 0
    %2320 = vmatprep.mubr.bf16.mxu0 0
    %2321 = vmatmul.mubr.bf16.gmra.mrb[0].mxu0 %v200
    %v2322 = vpop.f32.mrb[0].mxu0
    %v2323 = vadd.f32 %v2283, %v2322
    %v2324 = vpop.f32.mrb[0].mxu0
    %v2325 = vpop.f32.mrb[0].mxu0
    %v2326 = vpop.f32.mrb[0].mxu0
    %2327 = vdwg.mxu0
    %v2328 = vmax.f32 %v2323, 0.0
    %v2329 = vpack.c.bf16 %v2328, %v2328
    %v2330 = vld [vmem:[%s3] sm:$0xf]
    %v2331 = vld [vmem:[%s3 + $0x4] sm:$0xf]
    %v2332 = vld [vmem:[%s3 + $0x8] sm:$0xf]
    %v2333 = vld [vmem:[%s3 + $0xc] sm:$0xf]
    %v2334 = vld [vmem:[%s3 + $0x10] sm:$0xf]
    %v2335 = vld [vmem:[%s3 + $0x14] sm:$0xf]
    %v2336 = vld [vmem:[%s3 + $0x18] sm:$0xf]
    %v2337 = vld [vmem:[%s3 + $0x1c] sm:$0xf]
    %v2338 = vld [vmem:[%s3 + $0x20] sm:$0xf]
    %v2339 = vld [vmem:[%s3 + $0x24] sm:$0xf]
    %v2340 = vld [vmem:[%s3 + $0x28] sm:$0xf]
    %v2341 = vld [vmem:[%s3 + $0x2c] sm:$0xf]
    %v2342 = vld [vmem:[%s3 + $0x30] sm:$0xf]
    %v2343 = vld [vmem:[%s3 + $0x34] sm:$0xf]
    %v2344 = vld [vmem:[%s3 + $0x38] sm:$0xf]
    %v2345 = vld [vmem:[%s3 + $0x3c] sm:$0xf]
    %v2346 = vld [vmem:[%s4] sm:$0x1]
    %v2348 = vlaneseq
    %v2349 = vshrl.u32 %v2348, 7
    %v2350 = vsub.s32 0, %v2349
    %v2351 = vrot.slane %v2346, %v2350
    %v2369 = vunpack.c.l.b16 %v2330
    %v2370 = vunpack.c.l.b16 %v2331
    %v2371 = vunpack.c.l.b16 %v2332
    %v2372 = vunpack.c.l.b16 %v2333
    %v2373 = vunpack.c.l.b16 %v2334
    %v2374 = vunpack.c.l.b16 %v2335
    %v2375 = vunpack.c.l.b16 %v2336
    %v2376 = vunpack.c.l.b16 %v2337
    %v2377 = vunpack.c.l.b16 %v2338
    %v2378 = vunpack.c.l.b16 %v2339
    %v2379 = vunpack.c.l.b16 %v2340
    %v2380 = vunpack.c.l.b16 %v2341
    %v2381 = vunpack.c.l.b16 %v2342
    %v2382 = vunpack.c.l.b16 %v2343
    %v2383 = vunpack.c.l.b16 %v2344
    %v2384 = vunpack.c.l.b16 %v2345
    %v2385 = vpack.c.b16 %v2370, %v2369
    %v2386 = vpack.c.b16 %v2372, %v2371
    %v2387 = vpack.c.b16 %v2374, %v2373
    %v2388 = vpack.c.b16 %v2376, %v2375
    %v2389 = vpack.c.b16 %v2378, %v2377
    %v2390 = vpack.c.b16 %v2380, %v2379
    %v2391 = vpack.c.b16 %v2382, %v2381
    %v2392 = vpack.c.b16 %v2384, %v2383
    %2401 = vmatprep.subr.bf16.mxu0 0
    %2402 = vmatpush1.bf16.msra.mxu0 %v2385
    %2403 = vmatprep.subr.bf16.mxu0 0
    %2404 = vmatpush1.bf16.msra.mxu0 %v2386
    %2405 = vmatprep.subr.bf16.mxu0 0
    %2406 = vmatpush1.bf16.msra.mxu0 %v2387
    %2407 = vmatprep.subr.bf16.mxu0 0
    %2408 = vmatpush1.bf16.msra.mxu0 %v2388
    %2409 = vmatprep.subr.bf16.mxu0 0
    %2410 = vmatpush1.bf16.msra.mxu0 %v2389
    %2411 = vmatprep.subr.bf16.mxu0 0
    %2412 = vmatpush1.bf16.msra.mxu0 %v2390
    %2413 = vmatprep.subr.bf16.mxu0 0
    %2414 = vmatpush1.bf16.msra.mxu0 %v2391
    %2415 = vmatprep.subr.bf16.mxu0 0
    %2416 = vmatpush1.bf16.msra.mxu0 %v2392
    %2417 = vmatprep.subr.bf16.mxu0 0
    %2418 = vmatpush1.bf16.msra.mxu0 0
    %2419 = vmatprep.subr.bf16.mxu0 0
    %2420 = vmatpush1.bf16.msra.mxu0 0
    %2421 = vmatprep.subr.bf16.mxu0 0
    %2422 = vmatpush1.bf16.msra.mxu0 0
    %2423 = vmatprep.subr.bf16.mxu0 0
    %2424 = vmatpush1.bf16.msra.mxu0 0
    %2425 = vmatprep.subr.bf16.mxu0 0
    %2426 = vmatpush1.bf16.msra.mxu0 0
    %2427 = vmatprep.subr.bf16.mxu0 0
    %2428 = vmatpush1.bf16.msra.mxu0 0
    %2429 = vmatprep.subr.bf16.mxu0 0
    %2430 = vmatpush1.bf16.msra.mxu0 0
    %2431 = vmatprep.subr.bf16.mxu0 0
    %2432 = vmatpush1.bf16.msra.mxu0 0
    %2433 = vmatprep.mubr.bf16.mxu0 0
    %2434 = vmatmul.mubr.bf16.gmra.mrb[0].mxu0 %v2329
    %v2435 = vpop.f32.mrb[0].mxu0
    %v2436 = vadd.f32 %v2351, %v2435
    %v2437 = vpop.f32.mrb[0].mxu0
    %v2438 = vpop.f32.mrb[0].mxu0
    %v2439 = vpop.f32.mrb[0].mxu0
    %2440 = vdwg.mxu0
    %v2441 = vmax.f32 %v2436, 0.0
    %v2442 = vpack.c.bf16 %v2441, %v2441
    %v2443 = vld [vmem:[%s5] sm:$0xf]
    %v2444 = vld [vmem:[%s5 + $0x4] sm:$0xf]
    %v2445 = vld [vmem:[%s5 + $0x8] sm:$0xf]
    %v2446 = vld [vmem:[%s5 + $0xc] sm:$0xf]
    %v2447 = vld [vmem:[%s5 + $0x10] sm:$0xf]
    %v2448 = vld [vmem:[%s5 + $0x14] sm:$0xf]
    %v2449 = vld [vmem:[%s5 + $0x18] sm:$0xf]
    %v2450 = vld [vmem:[%s5 + $0x1c] sm:$0xf]
    %v2451 = vld [vmem:[%s5 + $0x20] sm:$0xf]
    %v2452 = vld [vmem:[%s5 + $0x24] sm:$0xf]
    %v2453 = vld [vmem:[%s5 + $0x28] sm:$0xf]
    %v2454 = vld [vmem:[%s5 + $0x2c] sm:$0xf]
    %v2455 = vld [vmem:[%s5 + $0x30] sm:$0xf]
    %v2456 = vld [vmem:[%s5 + $0x34] sm:$0xf]
    %v2457 = vld [vmem:[%s5 + $0x38] sm:$0xf]
    %v2458 = vld [vmem:[%s5 + $0x3c] sm:$0xf]
    %v2459 = vld [vmem:[%s6] sm:$0x1]
    %v2461 = vlaneseq
    %v2462 = vshrl.u32 %v2461, 7
    %v2463 = vsub.s32 0, %v2462
    %v2464 = vrot.slane %v2459, %v2463
    %v2482 = vunpack.c.l.b16 %v2443
    %v2483 = vunpack.c.l.b16 %v2444
    %v2484 = vunpack.c.l.b16 %v2445
    %v2485 = vunpack.c.l.b16 %v2446
    %v2486 = vunpack.c.l.b16 %v2447
    %v2487 = vunpack.c.l.b16 %v2448
    %v2488 = vunpack.c.l.b16 %v2449
    %v2489 = vunpack.c.l.b16 %v2450
    %v2490 = vunpack.c.l.b16 %v2451
    %v2491 = vunpack.c.l.b16 %v2452
    %v2492 = vunpack.c.l.b16 %v2453
    %v2493 = vunpack.c.l.b16 %v2454
    %v2494 = vunpack.c.l.b16 %v2455
    %v2495 = vunpack.c.l.b16 %v2456
    %v2496 = vunpack.c.l.b16 %v2457
    %v2497 = vunpack.c.l.b16 %v2458
    %v2498 = vpack.c.b16 %v2483, %v2482
    %v2499 = vpack.c.b16 %v2485, %v2484
    %v2500 = vpack.c.b16 %v2487, %v2486
    %v2501 = vpack.c.b16 %v2489, %v2488
    %v2502 = vpack.c.b16 %v2491, %v2490
    %v2503 = vpack.c.b16 %v2493, %v2492
    %v2504 = vpack.c.b16 %v2495, %v2494
    %v2505 = vpack.c.b16 %v2497, %v2496
    %2514 = vmatprep.subr.bf16.mxu0 0
    %2515 = vmatpush1.bf16.msra.mxu0 %v2498
    %2516 = vmatprep.subr.bf16.mxu0 0
    %2517 = vmatpush1.bf16.msra.mxu0 %v2499
    %2518 = vmatprep.subr.bf16.mxu0 0
    %2519 = vmatpush1.bf16.msra.mxu0 %v2500
    %2520 = vmatprep.subr.bf16.mxu0 0
    %2521 = vmatpush1.bf16.msra.mxu0 %v2501
    %2522 = vmatprep.subr.bf16.mxu0 0
    %2523 = vmatpush1.bf16.msra.mxu0 %v2502
    %2524 = vmatprep.subr.bf16.mxu0 0
    %2525 = vmatpush1.bf16.msra.mxu0 %v2503
    %2526 = vmatprep.subr.bf16.mxu0 0
    %2527 = vmatpush1.bf16.msra.mxu0 %v2504
    %2528 = vmatprep.subr.bf16.mxu0 0
    %2529 = vmatpush1.bf16.msra.mxu0 %v2505
    %2530 = vmatprep.subr.bf16.mxu0 0
    %2531 = vmatpush1.bf16.msra.mxu0 0
    %2532 = vmatprep.subr.bf16.mxu0 0
    %2533 = vmatpush1.bf16.msra.mxu0 0
    %2534 = vmatprep.subr.bf16.mxu0 0
    %2535 = vmatpush1.bf16.msra.mxu0 0
    %2536 = vmatprep.subr.bf16.mxu0 0
    %2537 = vmatpush1.bf16.msra.mxu0 0
    %2538 = vmatprep.subr.bf16.mxu0 0
    %2539 = vmatpush1.bf16.msra.mxu0 0
    %2540 = vmatprep.subr.bf16.mxu0 0
    %2541 = vmatpush1.bf16.msra.mxu0 0
    %2542 = vmatprep.subr.bf16.mxu0 0
    %2543 = vmatpush1.bf16.msra.mxu0 0
    %2544 = vmatprep.subr.bf16.mxu0 0
    %2545 = vmatpush1.bf16.msra.mxu0 0
    %2546 = vmatprep.mubr.bf16.mxu0 0
    %2547 = vmatmul.mubr.bf16.gmra.mrb[0].mxu0 %v2442
    %v2548 = vpop.f32.mrb[0].mxu0
    %v2549 = vadd.f32 %v2464, %v2548
    %v2550 = vpop.f32.mrb[0].mxu0
    %v2551 = vpop.f32.mrb[0].mxu0
    %v2552 = vpop.f32.mrb[0].mxu0
    %2553 = vdwg.mxu0
    %2554 = vst [vmem:[#allocation2] sm:$0x3] %v2549
    // Predicated region
    $region30: #{lenet5_forward.5} parent=1 // pred_check
      _
    $region31: #{lenet5_forward.5} parent=1 // pred_check_branch
      %2556 = sbr.rel (0) target = $region33
    $region32: #{lenet5_forward.5} parent=1 // pred_region
      %s2558 = ssub.s32 32, 32
      %2559 = vsyncadd [#allocation3], %s2558
      %s2561 = sshll.u32 [#allocation2], 4
      %s2562 = int_to_ptr.vmem [resolvable:$true] %s2561
      %2564 = dma.vmem_to_hbm [thread:$0]  %s2562, 32, %s7, [#allocation3]
    $region33: #{lenet5_forward.5} parent=1 // pred_fallthru
      _
    // Predicated region
    $region34: #{lenet5_forward.5} parent=1 // pred_check
      _
    $region35: #{lenet5_forward.5} parent=1 // pred_check_branch
      %2566 = sbr.rel (0) target = $region37
    $region36: #{lenet5_forward.5} parent=1 // pred_region
      %2567 = dma.done [#allocation3], 32
    $region37: #{lenet5_forward.5} parent=1 // pred_fallthru
      _
    %2568 = vsyncpa [#allocation3], 1

</llo_original>
